<compile_context>
chip_gen: v7x
topology: tpu7x:2x2x1
jax: 0.10.0
libtpu: 0.0.40
codegen_flags: <defaults>
</compile_context>

<pallas_src>
import jax
import jax.numpy as jnp
from jax.experimental import pallas as pl
from jax.experimental.pallas import tpu as pltpu


_K = 8          # conv kernel size along frequency
_STRIDE = 4     # conv stride along frequency
_PAD = 2        # conv zero-padding along frequency
_KC = 1024      # codebook size
_CB_CHUNK = 128  # codebook rows per argmin chunk (keeps the per-chunk distance
                 # tile small so it stays mostly in vregs instead of spilling)


def _gelu(x):
    # tanh-approx GELU (EUP tanh). nn.GELU default is the erf form; the
    # difference is ~1e-3 and the tanh path is guaranteed to lower on Mosaic.
    c = 0.7978845608028654  # sqrt(2/pi)
    return 0.5 * x * (1.0 + jnp.tanh(c * (x + 0.044715 * x * x * x)))


# ----------------------------- Pallas kernels -----------------------------

def _conv_gelu_t_kernel(p_ref, w_ref, b_ref, o_ref):
    # p_ref: (Cin*K, tm) bf16   w_ref: (Cout, Cin*K) bf16   b_ref: (Cout, 1) f32
    # o_ref: (Cout, tm) bf16 -- im2col rows live on the lane axis (lane-dense).
    acc = jnp.dot(w_ref[...], p_ref[...], preferred_element_type=jnp.float32)
    o_ref[...] = _gelu(acc + b_ref[...]).astype(o_ref.dtype)


def _conv_gelu_vq_kernel(p_ref, w_ref, b_ref, cb_ref, cbsqh_ref, y_ref, idx_ref):
    # Fused HEncLayer#2 + ResidualVQ nearest-neighbour search.
    #   p_ref:     (Cin*K, tm) bf16
    #   w_ref:     (96, Cin*K) bf16
    #   b_ref:     (96, 1) f32
    #   cb_ref:    (Kc, 96) bf16
    #   cbsqh_ref: (Kc, 1) f32  -- 0.5 * |c_j|^2
    #   y_ref:     (96, tm) bf16 (pre-VQ activation)
    #   idx_ref:   (1, tm) int32
    acc = jnp.dot(w_ref[...], p_ref[...], preferred_element_type=jnp.float32)
    y = _gelu(acc + b_ref[...])
    y_bf = y.astype(jnp.bfloat16)
    y_ref[...] = y_bf

    kc = cb_ref.shape[0]
    tm = p_ref.shape[1]
    chunk = _CB_CHUNK

    # argmin_j |c_j - y|^2 == argmax_j (<c_j, y> - 0.5*|c_j|^2).
    # Chunked running argmax: never materialize the full (Kc, tm) matrix.
    iota = jax.lax.broadcasted_iota(jnp.int32, (chunk, tm), 0)  # hoisted
    best_s = jnp.full((1, tm), -jnp.inf, dtype=jnp.float32)
    best_i = jnp.zeros((1, tm), dtype=jnp.int32)
    for off in range(0, kc, chunk):
        dots = jnp.dot(cb_ref[off:off + chunk, :], y_bf,
                       preferred_element_type=jnp.float32)      # (chunk, tm)
        score = dots - cbsqh_ref[off:off + chunk, :]            # (chunk, tm)
        c_max = jnp.max(score, axis=0, keepdims=True)           # (1, tm)
        c_idx = jnp.min(jnp.where(score >= c_max, iota, chunk),
                        axis=0, keepdims=True) + off            # (1, tm)
        take = c_max > best_s                                   # earlier chunk wins ties
        best_i = jnp.where(take, c_idx, best_i)
        best_s = jnp.where(take, c_max, best_s)
    idx_ref[...] = best_i                                       # lane-dense int32


# ----------------------------- wrappers -----------------------------------

def _round_up(x, m):
    return (x + m - 1) // m * m


def _chip_hints():
    # v7x: 2 TensorCores / 64 MiB VMEM per core -> keep >=2 parallel grid steps
    # and a tighter scoped-VMEM budget.  v5e/v6e: 1 TC / 128 MiB VMEM -> a
    # single big tile per call amortizes the ~0.35us/step grid overhead.
    try:
        kind = jax.devices()[0].device_kind.lower()
    except Exception:
        kind = ""
    is_v7 = "v7" in kind
    vmem_limit = (40 if is_v7 else 64) * 1024 * 1024
    return is_v7, vmem_limit


def _compiler_params():
    _, vmem_limit = _chip_hints()
    return pltpu.CompilerParams(
        dimension_semantics=("parallel",),
        vmem_limit_bytes=vmem_limit,
    )


def _choose_tile(m, max_tile):
    # Lane-dense row tiles (multiples of 128).
    prefer_split, _ = _chip_hints()
    m128 = max(128, _round_up(m, 128))
    if prefer_split and m128 > 128:
        target = _round_up((m128 + 1) // 2, 128)   # >=2 steps for 2 TCs (v7x)
    else:
        target = m128                              # single big tile (v5e/v6e)
    return max(128, min(max_tile, target))


def _conv_gelu_t(patches_t, w_t, bias, *, max_tile=8192):
    # patches_t: (Cin*K, M) bf16 ; w_t: (Cout, Cin*K) bf16 ; bias: (Cout, 1) f32
    ck, m = patches_t.shape
    cout = w_t.shape[0]
    tm = _choose_tile(m, max_tile)
    m_pad = _round_up(m, tm)
    if m_pad != m:
        patches_t = jnp.pad(patches_t, ((0, 0), (0, m_pad - m)))
    out = pl.pallas_call(
        _conv_gelu_t_kernel,
        out_shape=jax.ShapeDtypeStruct((cout, m_pad), jnp.bfloat16),
        grid=(m_pad // tm,),
        in_specs=[
            pl.BlockSpec((ck, tm), lambda i: (0, i)),
            pl.BlockSpec((cout, ck), lambda i: (0, 0)),
            pl.BlockSpec((cout, 1), lambda i: (0, 0)),
        ],
        out_specs=pl.BlockSpec((cout, tm), lambda i: (0, i)),
        compiler_params=_compiler_params(),
    )(patches_t, w_t, bias)
    return out[:, :m]


def _conv_gelu_vq(patches_t, w_t, bias, cb_bf16, cbsq_half, *, max_tile=512):
    # Fused conv2 + GELU + chunked VQ argmin.
    # Returns (y_t (Cout, M) bf16, idx (M,) int32).
    ck, m = patches_t.shape
    cout = w_t.shape[0]
    kc, cdim = cb_bf16.shape
    tm = _choose_tile(m, max_tile)
    m_pad = _round_up(m, tm)
    if m_pad != m:
        patches_t = jnp.pad(patches_t, ((0, 0), (0, m_pad - m)))
    y_t, idx = pl.pallas_call(
        _conv_gelu_vq_kernel,
        out_shape=(jax.ShapeDtypeStruct((cout, m_pad), jnp.bfloat16),
                   jax.ShapeDtypeStruct((1, m_pad), jnp.int32)),
        grid=(m_pad // tm,),
        in_specs=[
            pl.BlockSpec((ck, tm), lambda i: (0, i)),
            pl.BlockSpec((cout, ck), lambda i: (0, 0)),
            pl.BlockSpec((cout, 1), lambda i: (0, 0)),
            pl.BlockSpec((kc, cdim), lambda i: (0, 0)),
            pl.BlockSpec((kc, 1), lambda i: (0, 0)),
        ],
        out_specs=(pl.BlockSpec((cout, tm), lambda i: (0, i)),
                   pl.BlockSpec((1, tm), lambda i: (0, i))),
        compiler_params=_compiler_params(),
    )(patches_t, w_t, bias, cb_bf16, cbsq_half)
    return y_t[:, :m], idx[0, :m]


def _freq_taps_t(x_cl, K=_K, stride=_STRIDE, pad=_PAD):
    # x_cl: (C, B, F, T) channel-leading. Returns the TRANSPOSED im2col matrix
    # (C*K, B*Fout*T) with (c, k) row order -- built from strided slices plus
    # one stack on a leading axis (no lane-level transposes / layout shuffles).
    C, B, F, T = x_cl.shape
    xp = jnp.pad(x_cl, ((0, 0), (0, 0), (pad, pad), (0, 0)))
    fout = (F + 2 * pad - K) // stride + 1
    hi = stride * (fout - 1) + 1
    taps = [xp[:, :, k:k + hi:stride, :] for k in range(K)]   # K x (C, B, Fout, T)
    pt = jnp.stack(taps, axis=1)                              # (C, K, B, Fout, T)
    return pt.reshape(C * K, B * fout * T), fout


def content_encoder_forward(x, params):
    # x: (B, 2, Fr, T) NCHW float32 (normalized STFT magnitude)
    B, cin, fr, T = x.shape
    w1, b1 = params["w1"], params["b1"]
    w2, b2 = params["w2"], params["b2"]
    codebook = params["codebook"]
    c1, c2 = w1.shape[0], w2.shape[0]

    # ---- HEncLayer 1: Conv2d((8,1), stride (4,1), pad (2,0)) + GELU --------
    x_cl = jnp.transpose(x, (1, 0, 2, 3)).astype(jnp.bfloat16)   # tiny (Cin=2)
    p1, f1 = _freq_taps_t(x_cl)                                  # (Cin*K, B*F1*T)
    w1_t = w1.reshape(c1, cin * _K).astype(jnp.bfloat16)         # (48, 16)
    y1_t = _conv_gelu_t(p1, w1_t, b1[:, None])                   # (48, B*F1*T) bf16

    # ---- HEncLayer 2 + ResidualVQ(nq=1) nearest neighbour (fused kernel) ---
    p2, f2 = _freq_taps_t(y1_t.reshape(c1, B, f1, T))            # (48*K, B*F2*T)
    w2_t = w2.reshape(c2, c1 * _K).astype(jnp.bfloat16)          # (96, 384)

    cb_bf16 = codebook.astype(jnp.bfloat16)                      # (1024, 96)
    cbsq_half = 0.5 * jnp.sum(cb_bf16.astype(jnp.float32) ** 2,
                              axis=-1, keepdims=True)            # (1024, 1) f32
    kc = cb_bf16.shape[0]
    kc_pad = _round_up(kc, _CB_CHUNK)
    if kc_pad != kc:   # pad rows can never win the argmax (score ~ -1e30)
        cb_bf16 = jnp.pad(cb_bf16, ((0, kc_pad - kc), (0, 0)))
        cbsq_half = jnp.pad(cbsq_half, ((0, kc_pad - kc), (0, 0)),
                            constant_values=1e30)

    y2_t, idx = _conv_gelu_vq(p2, w2_t, b2[:, None], cb_bf16, cbsq_half)
    # y2_t: (96, B*F2*T) bf16 (pre-VQ), idx: (B*F2*T,) int32

    beforvq = jnp.transpose(y2_t.reshape(c2, B, f2, T),
                            (1, 0, 2, 3)).astype(jnp.float32)
    # Codebook gather done as an XLA gather (cheaper than a 1024-deep one-hot
    # matmul in-kernel).
    q = jnp.take(codebook, idx, axis=0)                          # (B*F2*T, 96)
    latent = jnp.transpose(q.reshape(B, f2, T, c2), (0, 3, 1, 2))
    indices = idx.reshape(B, f2 * T, 1)                          # num_quantizers = 1
    return latent, indices, beforvq


def init_params(key):
    k1, k2, k3, k4, k5 = jax.random.split(key, 5)
    w1 = jax.random.normal(k1, (48, 2, 8, 1), jnp.float32) * (1.0 / (2 * 8) ** 0.5)
    b1 = jax.random.normal(k2, (48,), jnp.float32) * 0.01
    w2 = jax.random.normal(k3, (96, 48, 8, 1), jnp.float32) * (1.0 / (48 * 8) ** 0.5)
    b2 = jax.random.normal(k4, (96,), jnp.float32) * 0.01
    codebook = jax.random.normal(k5, (_KC, 96), jnp.float32)     # ResidualVQ codebook
    return dict(w1=w1, b1=b1, w2=w2, b2=b2, codebook=codebook)


if __name__ == "__main__":
    key = jax.random.PRNGKey(0)
    pk, xk = jax.random.split(key)
    params = init_params(pk)
    # x: (B=2, Cin=2 [stft real/imag], Fr=64, T=8)
    x = jax.random.normal(xk, (2, 2, 64, 8), jnp.float32)

    latent, indices, beforvq = jax.jit(content_encoder_forward)(x, params)
    jax.block_until_ready((latent, indices, beforvq))

    assert latent.shape == (2, 96, 4, 8), latent.shape
    assert beforvq.shape == (2, 96, 4, 8), beforvq.shape
    assert indices.shape == (2, 32, 1), indices.shape
    assert jnp.all((indices >= 0) & (indices < 1024))
    print("KERNEL_OK")
</pallas_src>

<mosaic_0001>
module attributes {stable_mosaic.version = 11 : i64} {
  func.func @_conv_gelu_t_kernel(%arg0: i32, %arg1: memref<16x256xbf16, #tpu.memory_space<vmem>>, %arg2: memref<48x16xbf16, #tpu.memory_space<vmem>>, %arg3: memref<48x1xf32, #tpu.memory_space<vmem>>, %arg4: memref<48x256xbf16, #tpu.memory_space<vmem>>) attributes {dimension_semantics = [#tpu.dimension_semantics<parallel>], iteration_bounds = array<i64: 1>, scalar_prefetch = 0 : i64, scratch_operands = 0 : i64, tpu.core_type = #tpu.core_type<tc>, window_params = [{transform_indices = @transform_0, window_bounds = array<i64: 16, 256>}, {pipeline_mode = #tpu.pipeline_mode<synchronous>, transform_indices = @transform_1, window_bounds = array<i64: 48, 16>}, {pipeline_mode = #tpu.pipeline_mode<synchronous>, transform_indices = @transform_2, window_bounds = array<i64: 48, 1>}, {transform_indices = @transform_3, window_bounds = array<i64: 48, 256>}]} {
    %c0 = arith.constant 0 : index
    %c0_0 = arith.constant 0 : index
    %0 = vector.load %arg2[%c0, %c0_0] : memref<48x16xbf16, #tpu.memory_space<vmem>>, vector<48x16xbf16>
    %c0_1 = arith.constant 0 : index
    %c0_2 = arith.constant 0 : index
    %1 = vector.load %arg1[%c0_1, %c0_2] : memref<16x256xbf16, #tpu.memory_space<vmem>>, vector<16x256xbf16>
    %cst = arith.constant dense<0.000000e+00> : vector<48x256xf32>
    %2 = tpu.matmul %0, %1, %cst {dimension_numbers = #tpu.dot_dimension_numbers<[1], [0], [0], [1], [0, 0, 1, 1], [], []>} : vector<48x16xbf16>, vector<16x256xbf16>, vector<48x256xf32> -> vector<48x256xf32>
    %c0_3 = arith.constant 0 : index
    %c0_4 = arith.constant 0 : index
    %3 = vector.load %arg3[%c0_3, %c0_4] : memref<48x1xf32, #tpu.memory_space<vmem>>, vector<48x1xf32>
    %4 = vector.broadcast %3 : vector<48x1xf32> to vector<48x256xf32>
    %5 = arith.addf %2, %4 : vector<48x256xf32>
    %cst_5 = arith.constant 5.000000e-01 : f32
    %6 = vector.broadcast %cst_5 : f32 to vector<48x256xf32>
    %7 = arith.mulf %6, %5 : vector<48x256xf32>
    %cst_6 = arith.constant 4.471500e-02 : f32
    %8 = vector.broadcast %cst_6 : f32 to vector<48x256xf32>
    %9 = arith.mulf %8, %5 : vector<48x256xf32>
    %10 = arith.mulf %9, %5 : vector<48x256xf32>
    %11 = arith.mulf %10, %5 : vector<48x256xf32>
    %12 = arith.addf %5, %11 : vector<48x256xf32>
    %cst_7 = arith.constant 0.797884583 : f32
    %13 = vector.broadcast %cst_7 : f32 to vector<48x256xf32>
    %14 = arith.mulf %13, %12 : vector<48x256xf32>
    %15 = math.tanh %14 : vector<48x256xf32>
    %cst_8 = arith.constant 1.000000e+00 : f32
    %16 = vector.broadcast %cst_8 : f32 to vector<48x256xf32>
    %17 = arith.addf %16, %15 : vector<48x256xf32>
    %18 = arith.mulf %7, %17 : vector<48x256xf32>
    %19 = arith.truncf %18 : vector<48x256xf32> to vector<48x256xbf16>
    %c0_9 = arith.constant 0 : index
    %c0_10 = arith.constant 0 : index
    %20 = vector.load %arg4[%c0_9, %c0_10] : memref<48x256xbf16, #tpu.memory_space<vmem>>, vector<48x256xbf16>
    tpu.vector_store %arg4[%c0_9, %c0_10], %19 {strides = array<i32>} : memref<48x256xbf16, #tpu.memory_space<vmem>>, vector<48x256xbf16>,
    return
  }
  func.func @transform_0(%arg0: i32) -> (i32, i32) {
    %c0_i32 = arith.constant 0 : i32
    %c0_i32_0 = arith.constant 0 : i32
    return %c0_i32, %arg0 : i32, i32
  }
  func.func @transform_1(%arg0: i32) -> (i32, i32) {
    %c0_i32 = arith.constant 0 : i32
    %c0_i32_0 = arith.constant 0 : i32
    %c0_i32_1 = arith.constant 0 : i32
    return %c0_i32, %c0_i32_0 : i32, i32
  }
  func.func @transform_2(%arg0: i32) -> (i32, i32) {
    %c0_i32 = arith.constant 0 : i32
    %c0_i32_0 = arith.constant 0 : i32
    %c0_i32_1 = arith.constant 0 : i32
    return %c0_i32, %c0_i32_0 : i32, i32
  }
  func.func @transform_3(%arg0: i32) -> (i32, i32) {
    %c0_i32 = arith.constant 0 : i32
    %c0_i32_0 = arith.constant 0 : i32
    return %c0_i32, %arg0 : i32, i32
  }
}

module attributes {stable_mosaic.version = 11 : i64} {
  func.func @_conv_gelu_vq_kernel(%arg0: i32, %arg1: memref<384x128xbf16, #tpu.memory_space<vmem>>, %arg2: memref<96x384xbf16, #tpu.memory_space<vmem>>, %arg3: memref<96x1xf32, #tpu.memory_space<vmem>>, %arg4: memref<1024x96xbf16, #tpu.memory_space<vmem>>, %arg5: memref<1024x1xf32, #tpu.memory_space<vmem>>, %arg6: memref<96x128xbf16, #tpu.memory_space<vmem>>, %arg7: memref<1x128xi32, #tpu.memory_space<vmem>>) attributes {dimension_semantics = [#tpu.dimension_semantics<parallel>], iteration_bounds = array<i64: 1>, scalar_prefetch = 0 : i64, scratch_operands = 0 : i64, tpu.core_type = #tpu.core_type<tc>, window_params = [{transform_indices = @transform_0, window_bounds = array<i64: 384, 128>}, {pipeline_mode = #tpu.pipeline_mode<synchronous>, transform_indices = @transform_1, window_bounds = array<i64: 96, 384>}, {pipeline_mode = #tpu.pipeline_mode<synchronous>, transform_indices = @transform_2, window_bounds = array<i64: 96, 1>}, {pipeline_mode = #tpu.pipeline_mode<synchronous>, transform_indices = @transform_3, window_bounds = array<i64: 1024, 96>}, {pipeline_mode = #tpu.pipeline_mode<synchronous>, transform_indices = @transform_4, window_bounds = array<i64: 1024, 1>}, {transform_indices = @transform_5, window_bounds = array<i64: 96, 128>}, {transform_indices = @transform_6, window_bounds = array<i64: 1, 128>}]} {
    %c0 = arith.constant 0 : index
    %c0_0 = arith.constant 0 : index
    %0 = vector.load %arg2[%c0, %c0_0] : memref<96x384xbf16, #tpu.memory_space<vmem>>, vector<96x384xbf16>
    %c0_1 = arith.constant 0 : index
    %c0_2 = arith.constant 0 : index
    %1 = vector.load %arg1[%c0_1, %c0_2] : memref<384x128xbf16, #tpu.memory_space<vmem>>, vector<384x128xbf16>
    %cst = arith.constant dense<0.000000e+00> : vector<96x128xf32>
    %2 = tpu.matmul %0, %1, %cst {dimension_numbers = #tpu.dot_dimension_numbers<[1], [0], [0], [1], [0, 0, 1, 1], [], []>} : vector<96x384xbf16>, vector<384x128xbf16>, vector<96x128xf32> -> vector<96x128xf32>
    %c0_3 = arith.constant 0 : index
    %c0_4 = arith.constant 0 : index
    %3 = vector.load %arg3[%c0_3, %c0_4] : memref<96x1xf32, #tpu.memory_space<vmem>>, vector<96x1xf32>
    %4 = vector.broadcast %3 : vector<96x1xf32> to vector<96x128xf32>
    %5 = arith.addf %2, %4 : vector<96x128xf32>
    %cst_5 = arith.constant 5.000000e-01 : f32
    %6 = vector.broadcast %cst_5 : f32 to vector<96x128xf32>
    %7 = arith.mulf %6, %5 : vector<96x128xf32>
    %cst_6 = arith.constant 4.471500e-02 : f32
    %8 = vector.broadcast %cst_6 : f32 to vector<96x128xf32>
    %9 = arith.mulf %8, %5 : vector<96x128xf32>
    %10 = arith.mulf %9, %5 : vector<96x128xf32>
    %11 = arith.mulf %10, %5 : vector<96x128xf32>
    %12 = arith.addf %5, %11 : vector<96x128xf32>
    %cst_7 = arith.constant 0.797884583 : f32
    %13 = vector.broadcast %cst_7 : f32 to vector<96x128xf32>
    %14 = arith.mulf %13, %12 : vector<96x128xf32>
    %15 = math.tanh %14 : vector<96x128xf32>
    %cst_8 = arith.constant 1.000000e+00 : f32
    %16 = vector.broadcast %cst_8 : f32 to vector<96x128xf32>
    %17 = arith.addf %16, %15 : vector<96x128xf32>
    %18 = arith.mulf %7, %17 : vector<96x128xf32>
    %19 = arith.truncf %18 : vector<96x128xf32> to vector<96x128xbf16>
    %c0_9 = arith.constant 0 : index
    %c0_10 = arith.constant 0 : index
    %20 = vector.load %arg6[%c0_9, %c0_10] : memref<96x128xbf16, #tpu.memory_space<vmem>>, vector<96x128xbf16>
    tpu.vector_store %arg6[%c0_9, %c0_10], %19 {strides = array<i32>} : memref<96x128xbf16, #tpu.memory_space<vmem>>, vector<96x128xbf16>,
    %21 = tpu.iota {dimensions = array<i32: 0>} : vector<128x128xi32>
    %cst_11 = arith.constant 0xFF800000 : f32
    %22 = vector.broadcast %cst_11 : f32 to vector<1x128xf32>
    %c0_i32 = arith.constant 0 : i32
    %23 = vector.broadcast %c0_i32 : i32 to vector<1x128xi32>
    %c0_12 = arith.constant 0 : index
    %c0_13 = arith.constant 0 : index
    %24 = vector.load %arg4[%c0_12, %c0_13] : memref<1024x96xbf16, #tpu.memory_space<vmem>>, vector<128x96xbf16>
    %cst_14 = arith.constant dense<0.000000e+00> : vector<128x128xf32>
    %25 = tpu.matmul %24, %19, %cst_14 {dimension_numbers = #tpu.dot_dimension_numbers<[1], [0], [0], [1], [0, 0, 1, 1], [], []>} : vector<128x96xbf16>, vector<96x128xbf16>, vector<128x128xf32> -> vector<128x128xf32>
    %c0_15 = arith.constant 0 : index
    %c0_16 = arith.constant 0 : index
    %26 = vector.load %arg5[%c0_15, %c0_16] : memref<1024x1xf32, #tpu.memory_space<vmem>>, vector<128x1xf32>
    %27 = vector.broadcast %26 : vector<128x1xf32> to vector<128x128xf32>
    %28 = arith.subf %25, %27 : vector<128x128xf32>
    %cst_17 = arith.constant dense<0xFF800000> : vector<128xf32>
    %29 = vector.multi_reduction <maximumf>, %28, %cst_17 [0] : vector<128x128xf32> to vector<128xf32>
    %30 = vector.shape_cast %29 : vector<128xf32> to vector<1x128xf32>
    %31 = vector.broadcast %30 : vector<1x128xf32> to vector<128x128xf32>
    %32 = arith.cmpf oge, %28, %31 : vector<128x128xf32>
    %c128_i32 = arith.constant 128 : i32
    %33 = vector.broadcast %c128_i32 : i32 to vector<128x128xi32>
    %34 = arith.select %32, %21, %33 : vector<128x128xi1>, vector<128x128xi32>
    %cst_18 = arith.constant dense<2147483647> : vector<128xi32>
    %35 = vector.multi_reduction <minsi>, %34, %cst_18 [0] : vector<128x128xi32> to vector<128xi32>
    %36 = vector.shape_cast %35 : vector<128xi32> to vector<1x128xi32>
    %c0_i32_19 = arith.constant 0 : i32
    %37 = vector.broadcast %c0_i32_19 : i32 to vector<1x128xi32>
    %38 = arith.addi %36, %37 : vector<1x128xi32>
    %39 = arith.cmpf ogt, %30, %22 : vector<1x128xf32>
    %40 = arith.select %39, %38, %23 : vector<1x128xi1>, vector<1x128xi32>
    %41 = arith.select %39, %30, %22 : vector<1x128xi1>, vector<1x128xf32>
    %c128 = arith.constant 128 : index
    %c0_20 = arith.constant 0 : index
    %42 = vector.load %arg4[%c128, %c0_20] : memref<1024x96xbf16, #tpu.memory_space<vmem>>, vector<128x96xbf16>
    %cst_21 = arith.constant dense<0.000000e+00> : vector<128x128xf32>
    %43 = tpu.matmul %42, %19, %cst_21 {dimension_numbers = #tpu.dot_dimension_numbers<[1], [0], [0], [1], [0, 0, 1, 1], [], []>} : vector<128x96xbf16>, vector<96x128xbf16>, vector<128x128xf32> -> vector<128x128xf32>
    %c128_22 = arith.constant 128 : index
    %c0_23 = arith.constant 0 : index
    %44 = vector.load %arg5[%c128_22, %c0_23] : memref<1024x1xf32, #tpu.memory_space<vmem>>, vector<128x1xf32>
    %45 = vector.broadcast %44 : vector<128x1xf32> to vector<128x128xf32>
    %46 = arith.subf %43, %45 : vector<128x128xf32>
    %cst_24 = arith.constant dense<0xFF800000> : vector<128xf32>
    %47 = vector.multi_reduction <maximumf>, %46, %cst_24 [0] : vector<128x128xf32> to vector<128xf32>
    %48 = vector.shape_cast %47 : vector<128xf32> to vector<1x128xf32>
    %49 = vector.broadcast %48 : vector<1x128xf32> to vector<128x128xf32>
    %50 = arith.cmpf oge, %46, %49 : vector<128x128xf32>
    %c128_i32_25 = arith.constant 128 : i32
    %51 = vector.broadcast %c128_i32_25 : i32 to vector<128x128xi32>
    %52 = arith.select %50, %21, %51 : vector<128x128xi1>, vector<128x128xi32>
    %cst_26 = arith.constant dense<2147483647> : vector<128xi32>
    %53 = vector.multi_reduction <minsi>, %52, %cst_26 [0] : vector<128x128xi32> to vector<128xi32>
    %54 = vector.shape_cast %53 : vector<128xi32> to vector<1x128xi32>
    %c128_i32_27 = arith.constant 128 : i32
    %55 = vector.broadcast %c128_i32_27 : i32 to vector<1x128xi32>
    %56 = arith.addi %54, %55 : vector<1x128xi32>
    %57 = arith.cmpf ogt, %48, %41 : vector<1x128xf32>
    %58 = arith.select %57, %56, %40 : vector<1x128xi1>, vector<1x128xi32>
    %59 = arith.select %57, %48, %41 : vector<1x128xi1>, vector<1x128xf32>
    %c256 = arith.constant 256 : index
    %c0_28 = arith.constant 0 : index
    %60 = vector.load %arg4[%c256, %c0_28] : memref<1024x96xbf16, #tpu.memory_space<vmem>>, vector<128x96xbf16>
    %cst_29 = arith.constant dense<0.000000e+00> : vector<128x128xf32>
    %61 = tpu.matmul %60, %19, %cst_29 {dimension_numbers = #tpu.dot_dimension_numbers<[1], [0], [0], [1], [0, 0, 1, 1], [], []>} : vector<128x96xbf16>, vector<96x128xbf16>, vector<128x128xf32> -> vector<128x128xf32>
    %c256_30 = arith.constant 256 : index
    %c0_31 = arith.constant 0 : index
    %62 = vector.load %arg5[%c256_30, %c0_31] : memref<1024x1xf32, #tpu.memory_space<vmem>>, vector<128x1xf32>
    %63 = vector.broadcast %62 : vector<128x1xf32> to vector<128x128xf32>
    %64 = arith.subf %61, %63 : vector<128x128xf32>
    %cst_32 = arith.constant dense<0xFF800000> : vector<128xf32>
    %65 = vector.multi_reduction <maximumf>, %64, %cst_32 [0] : vector<128x128xf32> to vector<128xf32>
    %66 = vector.shape_cast %65 : vector<128xf32> to vector<1x128xf32>
    %67 = vector.broadcast %66 : vector<1x128xf32> to vector<128x128xf32>
    %68 = arith.cmpf oge, %64, %67 : vector<128x128xf32>
    %c128_i32_33 = arith.constant 128 : i32
    %69 = vector.broadcast %c128_i32_33 : i32 to vector<128x128xi32>
    %70 = arith.select %68, %21, %69 : vector<128x128xi1>, vector<128x128xi32>
    %cst_34 = arith.constant dense<2147483647> : vector<128xi32>
    %71 = vector.multi_reduction <minsi>, %70, %cst_34 [0] : vector<128x128xi32> to vector<128xi32>
    %72 = vector.shape_cast %71 : vector<128xi32> to vector<1x128xi32>
    %c256_i32 = arith.constant 256 : i32
    %73 = vector.broadcast %c256_i32 : i32 to vector<1x128xi32>
    %74 = arith.addi %72, %73 : vector<1x128xi32>
    %75 = arith.cmpf ogt, %66, %59 : vector<1x128xf32>
    %76 = arith.select %75, %74, %58 : vector<1x128xi1>, vector<1x128xi32>
    %77 = arith.select %75, %66, %59 : vector<1x128xi1>, vector<1x128xf32>
    %c384 = arith.constant 384 : index
    %c0_35 = arith.constant 0 : index
    %78 = vector.load %arg4[%c384, %c0_35] : memref<1024x96xbf16, #tpu.memory_space<vmem>>, vector<128x96xbf16>
    %cst_36 = arith.constant dense<0.000000e+00> : vector<128x128xf32>
    %79 = tpu.matmul %78, %19, %cst_36 {dimension_numbers = #tpu.dot_dimension_numbers<[1], [0], [0], [1], [0, 0, 1, 1], [], []>} : vector<128x96xbf16>, vector<96x128xbf16>, vector<128x128xf32> -> vector<128x128xf32>
    %c384_37 = arith.constant 384 : index
    %c0_38 = arith.constant 0 : index
    %80 = vector.load %arg5[%c384_37, %c0_38] : memref<1024x1xf32, #tpu.memory_space<vmem>>, vector<128x1xf32>
    %81 = vector.broadcast %80 : vector<128x1xf32> to vector<128x128xf32>
    %82 = arith.subf %79, %81 : vector<128x128xf32>
    %cst_39 = arith.constant dense<0xFF800000> : vector<128xf32>
    %83 = vector.multi_reduction <maximumf>, %82, %cst_39 [0] : vector<128x128xf32> to vector<128xf32>
    %84 = vector.shape_cast %83 : vector<128xf32> to vector<1x128xf32>
    %85 = vector.broadcast %84 : vector<1x128xf32> to vector<128x128xf32>
    %86 = arith.cmpf oge, %82, %85 : vector<128x128xf32>
    %c128_i32_40 = arith.constant 128 : i32
    %87 = vector.broadcast %c128_i32_40 : i32 to vector<128x128xi32>
    %88 = arith.select %86, %21, %87 : vector<128x128xi1>, vector<128x128xi32>
    %cst_41 = arith.constant dense<2147483647> : vector<128xi32>
    %89 = vector.multi_reduction <minsi>, %88, %cst_41 [0] : vector<128x128xi32> to vector<128xi32>
    %90 = vector.shape_cast %89 : vector<128xi32> to vector<1x128xi32>
    %c384_i32 = arith.constant 384 : i32
    %91 = vector.broadcast %c384_i32 : i32 to vector<1x128xi32>
    %92 = arith.addi %90, %91 : vector<1x128xi32>
    %93 = arith.cmpf ogt, %84, %77 : vector<1x128xf32>
    %94 = arith.select %93, %92, %76 : vector<1x128xi1>, vector<1x128xi32>
    %95 = arith.select %93, %84, %77 : vector<1x128xi1>, vector<1x128xf32>
    %c512 = arith.constant 512 : index
    %c0_42 = arith.constant 0 : index
    %96 = vector.load %arg4[%c512, %c0_42] : memref<1024x96xbf16, #tpu.memory_space<vmem>>, vector<128x96xbf16>
    %cst_43 = arith.constant dense<0.000000e+00> : vector<128x128xf32>
    %97 = tpu.matmul %96, %19, %cst_43 {dimension_numbers = #tpu.dot_dimension_numbers<[1], [0], [0], [1], [0, 0, 1, 1], [], []>} : vector<128x96xbf16>, vector<96x128xbf16>, vector<128x128xf32> -> vector<128x128xf32>
    %c512_44 = arith.constant 512 : index
    %c0_45 = arith.constant 0 : index
    %98 = vector.load %arg5[%c512_44, %c0_45] : memref<1024x1xf32, #tpu.memory_space<vmem>>, vector<128x1xf32>
    %99 = vector.broadcast %98 : vector<128x1xf32> to vector<128x128xf32>
    %100 = arith.subf %97, %99 : vector<128x128xf32>
    %cst_46 = arith.constant dense<0xFF800000> : vector<128xf32>
    %101 = vector.multi_reduction <maximumf>, %100, %cst_46 [0] : vector<128x128xf32> to vector<128xf32>
    %102 = vector.shape_cast %101 : vector<128xf32> to vector<1x128xf32>
    %103 = vector.broadcast %102 : vector<1x128xf32> to vector<128x128xf32>
    %104 = arith.cmpf oge, %100, %103 : vector<128x128xf32>
    %c128_i32_47 = arith.constant 128 : i32
    %105 = vector.broadcast %c128_i32_47 : i32 to vector<128x128xi32>
    %106 = arith.select %104, %21, %105 : vector<128x128xi1>, vector<128x128xi32>
    %cst_48 = arith.constant dense<2147483647> : vector<128xi32>
    %107 = vector.multi_reduction <minsi>, %106, %cst_48 [0] : vector<128x128xi32> to vector<128xi32>
    %108 = vector.shape_cast %107 : vector<128xi32> to vector<1x128xi32>
    %c512_i32 = arith.constant 512 : i32
    %109 = vector.broadcast %c512_i32 : i32 to vector<1x128xi32>
    %110 = arith.addi %108, %109 : vector<1x128xi32>
    %111 = arith.cmpf ogt, %102, %95 : vector<1x128xf32>
    %112 = arith.select %111, %110, %94 : vector<1x128xi1>, vector<1x128xi32>
    %113 = arith.select %111, %102, %95 : vector<1x128xi1>, vector<1x128xf32>
    %c640 = arith.constant 640 : index
    %c0_49 = arith.constant 0 : index
    %114 = vector.load %arg4[%c640, %c0_49] : memref<1024x96xbf16, #tpu.memory_space<vmem>>, vector<128x96xbf16>
    %cst_50 = arith.constant dense<0.000000e+00> : vector<128x128xf32>
    %115 = tpu.matmul %114, %19, %cst_50 {dimension_numbers = #tpu.dot_dimension_numbers<[1], [0], [0], [1], [0, 0, 1, 1], [], []>} : vector<128x96xbf16>, vector<96x128xbf16>, vector<128x128xf32> -> vector<128x128xf32>
    %c640_51 = arith.constant 640 : index
    %c0_52 = arith.constant 0 : index
    %116 = vector.load %arg5[%c640_51, %c0_52] : memref<1024x1xf32, #tpu.memory_space<vmem>>, vector<128x1xf32>
    %117 = vector.broadcast %116 : vector<128x1xf32> to vector<128x128xf32>
    %118 = arith.subf %115, %117 : vector<128x128xf32>
    %cst_53 = arith.constant dense<0xFF800000> : vector<128xf32>
    %119 = vector.multi_reduction <maximumf>, %118, %cst_53 [0] : vector<128x128xf32> to vector<128xf32>
    %120 = vector.shape_cast %119 : vector<128xf32> to vector<1x128xf32>
    %121 = vector.broadcast %120 : vector<1x128xf32> to vector<128x128xf32>
    %122 = arith.cmpf oge, %118, %121 : vector<128x128xf32>
    %c128_i32_54 = arith.constant 128 : i32
    %123 = vector.broadcast %c128_i32_54 : i32 to vector<128x128xi32>
    %124 = arith.select %122, %21, %123 : vector<128x128xi1>, vector<128x128xi32>
    %cst_55 = arith.constant dense<2147483647> : vector<128xi32>
    %125 = vector.multi_reduction <minsi>, %124, %cst_55 [0] : vector<128x128xi32> to vector<128xi32>
    %126 = vector.shape_cast %125 : vector<128xi32> to vector<1x128xi32>
    %c640_i32 = arith.constant 640 : i32
    %127 = vector.broadcast %c640_i32 : i32 to vector<1x128xi32>
    %128 = arith.addi %126, %127 : vector<1x128xi32>
    %129 = arith.cmpf ogt, %120, %113 : vector<1x128xf32>
    %130 = arith.select %129, %128, %112 : vector<1x128xi1>, vector<1x128xi32>
    %131 = arith.select %129, %120, %113 : vector<1x128xi1>, vector<1x128xf32>
    %c768 = arith.constant 768 : index
    %c0_56 = arith.constant 0 : index
    %132 = vector.load %arg4[%c768, %c0_56] : memref<1024x96xbf16, #tpu.memory_space<vmem>>, vector<128x96xbf16>
    %cst_57 = arith.constant dense<0.000000e+00> : vector<128x128xf32>
    %133 = tpu.matmul %132, %19, %cst_57 {dimension_numbers = #tpu.dot_dimension_numbers<[1], [0], [0], [1], [0, 0, 1, 1], [], []>} : vector<128x96xbf16>, vector<96x128xbf16>, vector<128x128xf32> -> vector<128x128xf32>
    %c768_58 = arith.constant 768 : index
    %c0_59 = arith.constant 0 : index
    %134 = vector.load %arg5[%c768_58, %c0_59] : memref<1024x1xf32, #tpu.memory_space<vmem>>, vector<128x1xf32>
    %135 = vector.broadcast %134 : vector<128x1xf32> to vector<128x128xf32>
    %136 = arith.subf %133, %135 : vector<128x128xf32>
    %cst_60 = arith.constant dense<0xFF800000> : vector<128xf32>
    %137 = vector.multi_reduction <maximumf>, %136, %cst_60 [0] : vector<128x128xf32> to vector<128xf32>
    %138 = vector.shape_cast %137 : vector<128xf32> to vector<1x128xf32>
    %139 = vector.broadcast %138 : vector<1x128xf32> to vector<128x128xf32>
    %140 = arith.cmpf oge, %136, %139 : vector<128x128xf32>
    %c128_i32_61 = arith.constant 128 : i32
    %141 = vector.broadcast %c128_i32_61 : i32 to vector<128x128xi32>
    %142 = arith.select %140, %21, %141 : vector<128x128xi1>, vector<128x128xi32>
    %cst_62 = arith.constant dense<2147483647> : vector<128xi32>
    %143 = vector.multi_reduction <minsi>, %142, %cst_62 [0] : vector<128x128xi32> to vector<128xi32>
    %144 = vector.shape_cast %143 : vector<128xi32> to vector<1x128xi32>
    %c768_i32 = arith.constant 768 : i32
    %145 = vector.broadcast %c768_i32 : i32 to vector<1x128xi32>
    %146 = arith.addi %144, %145 : vector<1x128xi32>
    %147 = arith.cmpf ogt, %138, %131 : vector<1x128xf32>
    %148 = arith.select %147, %146, %130 : vector<1x128xi1>, vector<1x128xi32>
    %149 = arith.select %147, %138, %131 : vector<1x128xi1>, vector<1x128xf32>
    %c896 = arith.constant 896 : index
    %c0_63 = arith.constant 0 : index
    %150 = vector.load %arg4[%c896, %c0_63] : memref<1024x96xbf16, #tpu.memory_space<vmem>>, vector<128x96xbf16>
    %cst_64 = arith.constant dense<0.000000e+00> : vector<128x128xf32>
    %151 = tpu.matmul %150, %19, %cst_64 {dimension_numbers = #tpu.dot_dimension_numbers<[1], [0], [0], [1], [0, 0, 1, 1], [], []>} : vector<128x96xbf16>, vector<96x128xbf16>, vector<128x128xf32> -> vector<128x128xf32>
    %c896_65 = arith.constant 896 : index
    %c0_66 = arith.constant 0 : index
    %152 = vector.load %arg5[%c896_65, %c0_66] : memref<1024x1xf32, #tpu.memory_space<vmem>>, vector<128x1xf32>
    %153 = vector.broadcast %152 : vector<128x1xf32> to vector<128x128xf32>
    %154 = arith.subf %151, %153 : vector<128x128xf32>
    %cst_67 = arith.constant dense<0xFF800000> : vector<128xf32>
    %155 = vector.multi_reduction <maximumf>, %154, %cst_67 [0] : vector<128x128xf32> to vector<128xf32>
    %156 = vector.shape_cast %155 : vector<128xf32> to vector<1x128xf32>
    %157 = vector.broadcast %156 : vector<1x128xf32> to vector<128x128xf32>
    %158 = arith.cmpf oge, %154, %157 : vector<128x128xf32>
    %c128_i32_68 = arith.constant 128 : i32
    %159 = vector.broadcast %c128_i32_68 : i32 to vector<128x128xi32>
    %160 = arith.select %158, %21, %159 : vector<128x128xi1>, vector<128x128xi32>
    %cst_69 = arith.constant dense<2147483647> : vector<128xi32>
    %161 = vector.multi_reduction <minsi>, %160, %cst_69 [0] : vector<128x128xi32> to vector<128xi32>
    %162 = vector.shape_cast %161 : vector<128xi32> to vector<1x128xi32>
    %c896_i32 = arith.constant 896 : i32
    %163 = vector.broadcast %c896_i32 : i32 to vector<1x128xi32>
    %164 = arith.addi %162, %163 : vector<1x128xi32>
    %165 = arith.cmpf ogt, %156, %149 : vector<1x128xf32>
    %166 = arith.select %165, %164, %148 : vector<1x128xi1>, vector<1x128xi32>
    %c0_70 = arith.constant 0 : index
    %c0_71 = arith.constant 0 : index
    %167 = vector.load %arg7[%c0_70, %c0_71] : memref<1x128xi32, #tpu.memory_space<vmem>>, vector<1x128xi32>
    tpu.vector_store %arg7[%c0_70, %c0_71], %166 {strides = array<i32>} : memref<1x128xi32, #tpu.memory_space<vmem>>, vector<1x128xi32>,
    return
  }
  func.func @transform_0(%arg0: i32) -> (i32, i32) {
    %c0_i32 = arith.constant 0 : i32
    %c0_i32_0 = arith.constant 0 : i32
    return %c0_i32, %arg0 : i32, i32
  }
  func.func @transform_1(%arg0: i32) -> (i32, i32) {
    %c0_i32 = arith.constant 0 : i32
    %c0_i32_0 = arith.constant 0 : i32
    %c0_i32_1 = arith.constant 0 : i32
    return %c0_i32, %c0_i32_0 : i32, i32
  }
  func.func @transform_2(%arg0: i32) -> (i32, i32) {
    %c0_i32 = arith.constant 0 : i32
    %c0_i32_0 = arith.constant 0 : i32
    %c0_i32_1 = arith.constant 0 : i32
    return %c0_i32, %c0_i32_0 : i32, i32
  }
  func.func @transform_3(%arg0: i32) -> (i32, i32) {
    %c0_i32 = arith.constant 0 : i32
    %c0_i32_0 = arith.constant 0 : i32
    %c0_i32_1 = arith.constant 0 : i32
    return %c0_i32, %c0_i32_0 : i32, i32
  }
  func.func @transform_4(%arg0: i32) -> (i32, i32) {
    %c0_i32 = arith.constant 0 : i32
    %c0_i32_0 = arith.constant 0 : i32
    %c0_i32_1 = arith.constant 0 : i32
    return %c0_i32, %c0_i32_0 : i32, i32
  }
  func.func @transform_5(%arg0: i32) -> (i32, i32) {
    %c0_i32 = arith.constant 0 : i32
    %c0_i32_0 = arith.constant 0 : i32
    return %c0_i32, %arg0 : i32, i32
  }
  func.func @transform_6(%arg0: i32) -> (i32, i32) {
    %c0_i32 = arith.constant 0 : i32
    %c0_i32_0 = arith.constant 0 : i32
    return %c0_i32, %arg0 : i32, i32
  }
}

</mosaic_0001>

<llo_original>
// kernel: content_encoder_forward.2
$region0: #{content_encoder_forward.2}
  #allocation0 [shape = 'u32[]', space=smem, size = 0x4, offset = 0x4, fixed_abs, tag = 'smem constant byte address 0x4 - core index']
  #allocation1 [shape = 'u32[144,128]{1,0:T(1,128)}', space=vmem, size = 0x12000, scoped, tag = 'internal scratch']
  %s0 = inlined_call_operand.hbm [shape: bf16[16,256], index: 0, kind: input, shape index: {}]
  %s1 = inlined_call_operand.hbm [shape: bf16[48,16], index: 1, kind: input, shape index: {}]
  %s2 = inlined_call_operand.hbm [shape: f32[48,1], index: 2, kind: input, shape index: {}]
  %s3 = inlined_call_operand.hbm [shape: bf16[48,256], index: 3, kind: output, shape index: {}]
  %s4 = sld [smem:[#allocation0]]
  $region34: #{content_encoder_forward.2} parent=0
    _
  %s6 = ssub.s32 1, %s4
  %s7 = scalar_select 0, %s6, %s4
  $region1: #{content_encoder_forward.2} parent=0
    #allocation2 [shape = 'u8[8192]{0}', space=vmem, size = 0x2000, scoped, tag = 'input window, operand 0, single buffered']
    #allocation3 [shape = 's32[1]{0}', space=sflag, size = 0x4, scoped, tag = 'scoped memory for content_encoder_forward.2']
    #allocation4 [shape = 's32[1]{0}', space=sflag, size = 0x4, scoped, tag = 'scoped memory for content_encoder_forward.2']
    #allocation5 [shape = 'u8[12288]{0}', space=vmem, size = 0x3000, scoped, tag = 'input window, operand 1, single buffered']
    #allocation6 [shape = 's32[1]{0}', space=sflag, size = 0x4, scoped, tag = 'scoped memory for content_encoder_forward.2']
    #allocation7 [shape = 'u8[24576]{0}', space=vmem, size = 0x6000, scoped, tag = 'input window, operand 2, single buffered']
    #allocation8 [shape = 'u8[24576]{0}', space=vmem, size = 0x6000, scoped, tag = 'output window, operand 0, single buffered']
    %8 = vsyncpa [#allocation3], 0
    %9 = vsyncpa [#allocation6], 0
    %10 = vsyncpa [#allocation4], 0
    // Predicated region
    $region2: #{content_encoder_forward.2} parent=1 // pred_check
      _
    $region3: #{content_encoder_forward.2} parent=1 // pred_check_branch
      %12 = sbr.rel (0) target = $region5
    $region4: #{content_encoder_forward.2} parent=1 // pred_region
      %s14 = ssub.s32 256, 256
      %15 = vsyncadd [#allocation3], %s14
      %s16 = sshll.u32 [#allocation2], 4
      %s17 = int_to_ptr.vmem [resolvable:$true] %s16
      %22 = dma.hbm_to_vmem [thread:$0]  %s0, 256, %s17, [#allocation3], 128, 128, 8
    $region5: #{content_encoder_forward.2} parent=1 // pred_fallthru
      _
    // Predicated region
    $region6: #{content_encoder_forward.2} parent=1 // pred_check
      _
    $region7: #{content_encoder_forward.2} parent=1 // pred_check_branch
      %24 = sbr.rel (0) target = $region9
    $region8: #{content_encoder_forward.2} parent=1 // pred_region
      %s26 = ssub.s32 384, 384
      %27 = vsyncadd [#allocation6], %s26
      %s28 = sshll.u32 [#allocation5], 4
      %s29 = int_to_ptr.vmem [resolvable:$true] %s28
      %34 = dma.hbm_to_vmem [thread:$0]  %s1, 384, %s29, [#allocation6], 64, 64, 4
    $region9: #{content_encoder_forward.2} parent=1 // pred_fallthru
      _
    // Predicated region
    $region10: #{content_encoder_forward.2} parent=1 // pred_check
      _
    $region11: #{content_encoder_forward.2} parent=1 // pred_check_branch
      %36 = sbr.rel (0) target = $region13
    $region12: #{content_encoder_forward.2} parent=1 // pred_region
      %s38 = ssub.s32 768, 768
      %39 = vsyncadd [#allocation6], %s38
      %s40 = sshll.u32 [#allocation7], 4
      %s41 = int_to_ptr.vmem [resolvable:$true] %s40
      %46 = dma.hbm_to_vmem [thread:$0]  %s2, 768, %s41, [#allocation6], 128, 128, 8
    $region13: #{content_encoder_forward.2} parent=1 // pred_fallthru
      _
    // Predicated region
    $region14: #{content_encoder_forward.2} parent=1 // pred_check
      _
    $region15: #{content_encoder_forward.2} parent=1 // pred_check_branch
      %48 = sbr.rel (0) target = $region17
    $region16: #{content_encoder_forward.2} parent=1 // pred_region
      %49 = dma.done [#allocation3], 256
    $region17: #{content_encoder_forward.2} parent=1 // pred_fallthru
      _
    // Predicated region
    $region18: #{content_encoder_forward.2} parent=1 // pred_check
      _
    $region19: #{content_encoder_forward.2} parent=1 // pred_check_branch
      %51 = sbr.rel (0) target = $region21
    $region20: #{content_encoder_forward.2} parent=1 // pred_region
      %52 = dma.done [#allocation6], 384
    $region21: #{content_encoder_forward.2} parent=1 // pred_fallthru
      _
    // Predicated region
    $region22: #{content_encoder_forward.2} parent=1 // pred_check
      _
    $region23: #{content_encoder_forward.2} parent=1 // pred_check_branch
      %54 = sbr.rel (0) target = $region25
    $region24: #{content_encoder_forward.2} parent=1 // pred_region
      %55 = dma.done [#allocation6], 768
    $region25: #{content_encoder_forward.2} parent=1 // pred_fallthru
      _
    %v57 = vld [vmem:[#allocation5] sm:$0xf]
    %v58 = vld [vmem:[#allocation5 + $0x4] sm:$0xf]
    %v59 = vld [vmem:[#allocation5 + $0x8] sm:$0xf]
    %v60 = vld [vmem:[#allocation5 + $0xc] sm:$0xf]
    %v61 = vld [vmem:[#allocation5 + $0x10] sm:$0xf]
    %v62 = vld [vmem:[#allocation5 + $0x14] sm:$0xf]
    %v63 = vld [vmem:[#allocation2] sm:$0xff]
    %v64 = vld [vmem:[#allocation2 + $0x8] sm:$0xff]
    %v65 = vld [vmem:[#allocation7] sm:$0xff]
    %v66 = vld [vmem:[#allocation7 + $0x8] sm:$0xff]
    %v67 = vld [vmem:[#allocation7 + $0x10] sm:$0xff]
    %v68 = vld [vmem:[#allocation7 + $0x18] sm:$0xff]
    %v69 = vld [vmem:[#allocation7 + $0x20] sm:$0xff]
    %v70 = vld [vmem:[#allocation7 + $0x28] sm:$0xff]
    %72 = vset.pattern.permute.xlu0 0
    %73 = vperm.xlu0 %72, %v65
    %v74 = vpop.permute.xlu0 %73
    %77 = vset.pattern.permute.xlu0 0
    %78 = vperm.xlu0 %77, %v66
    %v79 = vpop.permute.xlu0 %78
    %82 = vset.pattern.permute.xlu0 0
    %83 = vperm.xlu0 %82, %v67
    %v84 = vpop.permute.xlu0 %83
    %87 = vset.pattern.permute.xlu0 0
    %88 = vperm.xlu0 %87, %v68
    %v89 = vpop.permute.xlu0 %88
    %92 = vset.pattern.permute.xlu0 0
    %93 = vperm.xlu0 %92, %v69
    %v94 = vpop.permute.xlu0 %93
    %97 = vset.pattern.permute.xlu0 0
    %98 = vperm.xlu0 %97, %v70
    %v99 = vpop.permute.xlu0 %98
    %v107 = vunpack.c.l.b16 %v57
    %v108 = vunpack.c.l.b16 %v58
    %v109 = vunpack.c.l.b16 %v59
    %v110 = vunpack.c.l.b16 %v60
    %v111 = vunpack.c.l.b16 %v61
    %v112 = vunpack.c.l.b16 %v62
    %v113 = vpack.c.b16 %v108, %v107
    %v114 = vpack.c.b16 %v110, %v109
    %v115 = vpack.c.b16 %v112, %v111
    %v118 = vunpack.c.l.b16 %v63
    %v119 = vunpack.c.h.b16 %v63
    %v120 = vunpack.c.l.b16 %v64
    %v121 = vunpack.c.h.b16 %v64
    %v122 = vpack.c.b16 %v120, %v118
    %v123 = vpack.c.b16 %v121, %v119
    %vm126 = vcmask 130048
    %v128 = vsel %vm126, %v113, 0
    %v131 = vsel %vm126, %v114, 0
    %v134 = vsel %vm126, %v115, 0
    %136 = vmatprep.subr.bf16.mxu0 %v123
    %137 = vmatpush1.bf16.msra.mxu0 %v122
    %138 = vmatprep.subr.bf16.mxu0 0
    %139 = vmatpush1.bf16.msra.mxu0 0
    %140 = vmatprep.subr.bf16.mxu0 0
    %141 = vmatpush1.bf16.msra.mxu0 0
    %142 = vmatprep.subr.bf16.mxu0 0
    %143 = vmatpush1.bf16.msra.mxu0 0
    %144 = vmatprep.subr.bf16.mxu0 0
    %145 = vmatpush1.bf16.msra.mxu0 0
    %146 = vmatprep.subr.bf16.mxu0 0
    %147 = vmatpush1.bf16.msra.mxu0 0
    %148 = vmatprep.subr.bf16.mxu0 0
    %149 = vmatpush1.bf16.msra.mxu0 0
    %150 = vmatprep.subr.bf16.mxu0 0
    %151 = vmatpush1.bf16.msra.mxu0 0
    %152 = vmatprep.subr.bf16.mxu0 0
    %153 = vmatpush1.bf16.msra.mxu0 0
    %154 = vmatprep.subr.bf16.mxu0 0
    %155 = vmatpush1.bf16.msra.mxu0 0
    %156 = vmatprep.subr.bf16.mxu0 0
    %157 = vmatpush1.bf16.msra.mxu0 0
    %158 = vmatprep.subr.bf16.mxu0 0
    %159 = vmatpush1.bf16.msra.mxu0 0
    %160 = vmatprep.subr.bf16.mxu0 0
    %161 = vmatpush1.bf16.msra.mxu0 0
    %162 = vmatprep.subr.bf16.mxu0 0
    %163 = vmatpush1.bf16.msra.mxu0 0
    %164 = vmatprep.subr.bf16.mxu0 0
    %165 = vmatpush1.bf16.msra.mxu0 0
    %166 = vmatprep.subr.bf16.mxu0 0
    %167 = vmatpush1.bf16.msra.mxu0 0
    %168 = vmatprep.mubr.bf16.mxu0 0
    %169 = vmatmul.mubr.bf16.gmra.mrb[0].mxu0 %v128
    %v170 = vpop.f32.mrb[0].mxu0
    %v171 = vadd.f32 %v74, %v170
    %v172 = vpop.f32.mrb[0].mxu0
    %v173 = vadd.f32 %v74, %v172
    %v174 = vpop.f32.mrb[0].mxu0
    %v175 = vadd.f32 %v79, %v174
    %v176 = vpop.f32.mrb[0].mxu0
    %v177 = vadd.f32 %v79, %v176
    %178 = vmatprep.mubr.bf16.mxu0 0
    %179 = vmatmul.mubr.bf16.gmra.mrb[0].mxu0 %v131
    %v180 = vpop.f32.mrb[0].mxu0
    %v181 = vadd.f32 %v84, %v180
    %v182 = vpop.f32.mrb[0].mxu0
    %v183 = vadd.f32 %v84, %v182
    %v184 = vpop.f32.mrb[0].mxu0
    %v185 = vadd.f32 %v89, %v184
    %v186 = vpop.f32.mrb[0].mxu0
    %v187 = vadd.f32 %v89, %v186
    %188 = vmatprep.mubr.bf16.mxu0 0
    %189 = vmatmul.mubr.bf16.gmra.mrb[0].mxu0 %v134
    %v190 = vpop.f32.mrb[0].mxu0
    %v191 = vadd.f32 %v94, %v190
    %v192 = vpop.f32.mrb[0].mxu0
    %v193 = vadd.f32 %v94, %v192
    %v194 = vpop.f32.mrb[0].mxu0
    %v195 = vadd.f32 %v99, %v194
    %v196 = vpop.f32.mrb[0].mxu0
    %v197 = vadd.f32 %v99, %v196
    %198 = vdwg.mxu0
    %v199 = vmul.f32 %v171, 0.5
    %v200 = vmul.f32 %v173, 0.5
    %v201 = vmul.f32 %v175, 0.5
    %v202 = vmul.f32 %v177, 0.5
    %v203 = vmul.f32 %v181, 0.5
    %v204 = vmul.f32 %v183, 0.5
    %v205 = vmul.f32 %v185, 0.5
    %v206 = vmul.f32 %v187, 0.5
    %v207 = vmul.f32 %v191, 0.5
    %v208 = vmul.f32 %v193, 0.5
    %v209 = vmul.f32 %v195, 0.5
    %v210 = vmul.f32 %v197, 0.5
    %v211 = vmul.f32 %v171, 0.044715
    %v212 = vmul.f32 %v173, 0.044715
    %v213 = vmul.f32 %v175, 0.044715
    %v214 = vmul.f32 %v177, 0.044715
    %v215 = vmul.f32 %v181, 0.044715
    %v216 = vmul.f32 %v183, 0.044715
    %v217 = vmul.f32 %v185, 0.044715
    %v218 = vmul.f32 %v187, 0.044715
    %v219 = vmul.f32 %v191, 0.044715
    %v220 = vmul.f32 %v193, 0.044715
    %v221 = vmul.f32 %v195, 0.044715
    %v222 = vmul.f32 %v197, 0.044715
    %v223 = vmul.f32 %v211, %v171
    %v224 = vmul.f32 %v212, %v173
    %v225 = vmul.f32 %v213, %v175
    %v226 = vmul.f32 %v214, %v177
    %v227 = vmul.f32 %v215, %v181
    %v228 = vmul.f32 %v216, %v183
    %v229 = vmul.f32 %v217, %v185
    %v230 = vmul.f32 %v218, %v187
    %v231 = vmul.f32 %v219, %v191
    %v232 = vmul.f32 %v220, %v193
    %v233 = vmul.f32 %v221, %v195
    %v234 = vmul.f32 %v222, %v197
    %v235 = vmul.f32 %v223, %v171
    %v236 = vmul.f32 %v224, %v173
    %v237 = vmul.f32 %v225, %v175
    %v238 = vmul.f32 %v226, %v177
    %v239 = vmul.f32 %v227, %v181
    %v240 = vmul.f32 %v228, %v183
    %v241 = vmul.f32 %v229, %v185
    %v242 = vmul.f32 %v230, %v187
    %v243 = vmul.f32 %v231, %v191
    %v244 = vmul.f32 %v232, %v193
    %v245 = vmul.f32 %v233, %v195
    %v246 = vmul.f32 %v234, %v197
    %v247 = vadd.f32 %v171, %v235
    %v248 = vadd.f32 %v173, %v236
    %v249 = vadd.f32 %v175, %v237
    %v250 = vadd.f32 %v177, %v238
    %v251 = vadd.f32 %v181, %v239
    %v252 = vadd.f32 %v183, %v240
    %v253 = vadd.f32 %v185, %v241
    %v254 = vadd.f32 %v187, %v242
    %v255 = vadd.f32 %v191, %v243
    %v256 = vadd.f32 %v193, %v244
    %v257 = vadd.f32 %v195, %v245
    %v258 = vadd.f32 %v197, %v246
    %v259 = vmul.f32 %v247, 0.7978846
    %v260 = vmul.f32 %v248, 0.7978846
    %v261 = vmul.f32 %v249, 0.7978846
    %v262 = vmul.f32 %v250, 0.7978846
    %v263 = vmul.f32 %v251, 0.7978846
    %v264 = vmul.f32 %v252, 0.7978846
    %v265 = vmul.f32 %v253, 0.7978846
    %v266 = vmul.f32 %v254, 0.7978846
    %v267 = vmul.f32 %v255, 0.7978846
    %v268 = vmul.f32 %v256, 0.7978846
    %v269 = vmul.f32 %v257, 0.7978846
    %v270 = vmul.f32 %v258, 0.7978846
    %v271 = vtanh.pop %v259
    %v272 = vtanh.pop %v260
    %v273 = vtanh.pop %v261
    %v274 = vtanh.pop %v262
    %v275 = vtanh.pop %v263
    %v276 = vtanh.pop %v264
    %v277 = vtanh.pop %v265
    %v278 = vtanh.pop %v266
    %v279 = vtanh.pop %v267
    %v280 = vtanh.pop %v268
    %v281 = vtanh.pop %v269
    %v282 = vtanh.pop %v270
    %v283 = vadd.f32 %v271, 1.0
    %v284 = vadd.f32 %v272, 1.0
    %v285 = vadd.f32 %v273, 1.0
    %v286 = vadd.f32 %v274, 1.0
    %v287 = vadd.f32 %v275, 1.0
    %v288 = vadd.f32 %v276, 1.0
    %v289 = vadd.f32 %v277, 1.0
    %v290 = vadd.f32 %v278, 1.0
    %v291 = vadd.f32 %v279, 1.0
    %v292 = vadd.f32 %v280, 1.0
    %v293 = vadd.f32 %v281, 1.0
    %v294 = vadd.f32 %v282, 1.0
    %v295 = vmul.f32 %v199, %v283
    %v296 = vmul.f32 %v200, %v284
    %v297 = vmul.f32 %v201, %v285
    %v298 = vmul.f32 %v202, %v286
    %v299 = vmul.f32 %v203, %v287
    %v300 = vmul.f32 %v204, %v288
    %v301 = vmul.f32 %v205, %v289
    %v302 = vmul.f32 %v206, %v290
    %v303 = vmul.f32 %v207, %v291
    %v304 = vmul.f32 %v208, %v292
    %v305 = vmul.f32 %v209, %v293
    %v306 = vmul.f32 %v210, %v294
    %v307 = vpack.c.bf16 %v297, %v295
    %v308 = vpack.c.bf16 %v298, %v296
    %v309 = vpack.c.bf16 %v301, %v299
    %v310 = vpack.c.bf16 %v302, %v300
    %v311 = vpack.c.bf16 %v305, %v303
    %v312 = vpack.c.bf16 %v306, %v304
    %v319 = vunpack.c.l.b16 %v307
    %v320 = vunpack.c.l.b16 %v308
    %v321 = vunpack.c.h.b16 %v307
    %v322 = vunpack.c.h.b16 %v308
    %v323 = vunpack.c.l.b16 %v309
    %v324 = vunpack.c.l.b16 %v310
    %v325 = vunpack.c.h.b16 %v309
    %v326 = vunpack.c.h.b16 %v310
    %v327 = vunpack.c.l.b16 %v311
    %v328 = vunpack.c.l.b16 %v312
    %v329 = vunpack.c.h.b16 %v311
    %v330 = vunpack.c.h.b16 %v312
    %v331 = vpack.c.b16 %v320, %v319
    %v332 = vpack.c.b16 %v322, %v321
    %v333 = vpack.c.b16 %v324, %v323
    %v334 = vpack.c.b16 %v326, %v325
    %v335 = vpack.c.b16 %v328, %v327
    %v336 = vpack.c.b16 %v330, %v329
    %343 = vst [vmem:[#allocation8] sm:$0xff] %v331
    %344 = vst [vmem:[#allocation8 + $0x8] sm:$0xff] %v332
    %345 = vst [vmem:[#allocation8 + $0x10] sm:$0xff] %v333
    %346 = vst [vmem:[#allocation8 + $0x18] sm:$0xff] %v334
    %347 = vst [vmem:[#allocation8 + $0x20] sm:$0xff] %v335
    %348 = vst [vmem:[#allocation8 + $0x28] sm:$0xff] %v336
    // Predicated region
    $region26: #{content_encoder_forward.2} parent=1 // pred_check
      _
    $region27: #{content_encoder_forward.2} parent=1 // pred_check_branch
      %350 = sbr.rel (0) target = $region29
    $region28: #{content_encoder_forward.2} parent=1 // pred_region
      %s352 = ssub.s32 768, 768
      %353 = vsyncadd [#allocation4], %s352
      %s354 = sshll.u32 [#allocation8], 4
      %s355 = int_to_ptr.vmem [resolvable:$true] %s354
      %360 = dma.vmem_to_hbm [thread:$0]  %s355, 768, %s3, [#allocation4], 128, 128, 8
    $region29: #{content_encoder_forward.2} parent=1 // pred_fallthru
      _
    // Predicated region
    $region30: #{content_encoder_forward.2} parent=1 // pred_check
      _
    $region31: #{content_encoder_forward.2} parent=1 // pred_check_branch
      %362 = sbr.rel (0) target = $region33
    $region32: #{content_encoder_forward.2} parent=1 // pred_region
      %363 = dma.done [#allocation4], 768
    $region33: #{content_encoder_forward.2} parent=1 // pred_fallthru
      _
    %364 = vsyncpa [#allocation3], 1
    %365 = vsyncpa [#allocation6], 1
    %366 = vsyncpa [#allocation4], 1

// kernel: squeeze.3
$region0: #{squeeze.3}
  %s0 = inlined_call_operand.vmem [shape: s32[64], index: 0, kind: input, shape index: {}]
  %s1 = inlined_call_operand.hbm [shape: s32[2,32,1], index: 1, kind: output, shape index: {}]
  $region1: #{squeeze.3} parent=0
    #allocation0 [shape = 'u8[1024]{0}', space=vmem, size = 0x400, scoped, tag = 'operand span for operand 1']
    #allocation1 [shape = 's32[1]{0}', space=sflag, size = 0x4, scoped, tag = 'scoped memory for squeeze.3']
    #allocation2 [shape = 'u8[4096]{0}', space=vmem, size = 0x1000, scoped, tag = 'scoped mem for output reshape']
    #allocation3 [shape = 'u8[4096]{0}', space=vmem, size = 0x1000, scoped, tag = 'scoped mem for input reshape']
    %2 = vsyncpa [#allocation1], 0
    %s4 = sshllo.u32 0, 1
    %v5 = vld [vmem:[%s0] sm:%s4]
    %6 = vst [vmem:[#allocation3] sm:%s4] %v5
    %v7 = vld [vmem:[#allocation3] sm:$0x1]
    %vm8 = vcmask 261120
    %9 = vst.msk [vmem:[#allocation2] sm:$0x1] %vm8, %v7
    %v10 = vld [vmem:[#allocation3] sm:$0x1]
    %11 = vrot.lane.b32.xlu0 %v10, 96
    %v12 = vpop.permute.xlu0 %11
    %vm13 = vcmask 261120
    %s14 = scalar_lea.vmem [#allocation2], 1
    %15 = vst.msk [vmem:[%s14] sm:$0x1] %vm13, %v12
    %s17 = sshllo.u32 0, 2
    %v19 = vld [vmem:[#allocation2] sm:%s17]
    %s20 = sshllo.u32 0, 2
    %21 = vst [vmem:[#allocation0] sm:%s20] %v19
    %s23 = ssub.s32 32, 32
    %24 = vsyncadd [#allocation1], %s23
    %s26 = sshll.u32 [#allocation0], 4
    %s27 = int_to_ptr.vmem [resolvable:$true] %s26
    %29 = dma.vmem_to_hbm [thread:$0]  %s27, 32, %s1, [#allocation1]
    %30 = dma.done [#allocation1], 32
    %31 = vsyncpa [#allocation1], 1

// kernel: content_encoder_forward.3
$region0: #{content_encoder_forward.3}
  #allocation0 [shape = 'u32[]', space=smem, size = 0x4, offset = 0x4, fixed_abs, tag = 'smem constant byte address 0x4 - core index']
  #allocation1 [shape = 'u32[144,128]{1,0:T(1,128)}', space=vmem, size = 0x12000, scoped, tag = 'internal scratch']
  %s0 = inlined_call_operand.hbm [shape: bf16[384,128], index: 0, kind: input, shape index: {}]
  %s1 = inlined_call_operand.hbm [shape: bf16[96,384], index: 1, kind: input, shape index: {}]
  %s2 = inlined_call_operand.hbm [shape: f32[96,1], index: 2, kind: input, shape index: {}]
  %s3 = inlined_call_operand.hbm [shape: bf16[1024,96], index: 3, kind: input, shape index: {}]
  %s4 = inlined_call_operand.hbm [shape: f32[1024,1], index: 4, kind: input, shape index: {}]
  %s5 = inlined_call_operand.hbm [shape: bf16[96,128], index: 5, kind: output, shape index: {0}]
  %s6 = inlined_call_operand.hbm [shape: s32[1,128], index: 6, kind: output, shape index: {1}]
  %7 = xla_tuple %s5, %s6
  %s8 = sld [smem:[#allocation0]]
  $region58: #{content_encoder_forward.3} parent=0
    _
  %s10 = ssub.s32 1, %s8
  %s11 = scalar_select 0, %s10, %s8
  $region1: #{content_encoder_forward.3} parent=0
    #allocation2 [shape = 'u8[98304]{0}', space=vmem, size = 0x18000, scoped, tag = 'input window, operand 0, single buffered']
    #allocation3 [shape = 's32[1]{0}', space=sflag, size = 0x4, scoped, tag = 'scoped memory for content_encoder_forward.3']
    #allocation4 [shape = 's32[1]{0}', space=sflag, size = 0x4, scoped, tag = 'scoped memory for content_encoder_forward.3']
    #allocation5 [shape = 'u8[73728]{0}', space=vmem, size = 0x12000, scoped, tag = 'input window, operand 1, single buffered']
    #allocation6 [shape = 's32[1]{0}', space=sflag, size = 0x4, scoped, tag = 'scoped memory for content_encoder_forward.3']
    #allocation7 [shape = 'u8[49152]{0}', space=vmem, size = 0xc000, scoped, tag = 'input window, operand 2, single buffered']
    #allocation8 [shape = 'u8[262144]{0}', space=vmem, size = 0x40000, scoped, tag = 'input window, operand 3, single buffered']
    #allocation9 [shape = 's32[1]{0}', space=sflag, size = 0x4, scoped, tag = 'scoped memory for content_encoder_forward.3']
    #allocation10 [shape = 'u8[524288]{0}', space=vmem, size = 0x80000, scoped, tag = 'input window, operand 4, single buffered']
    #allocation11 [shape = 'u8[24576]{0}', space=vmem, size = 0x6000, scoped, tag = 'output window, operand 0, single buffered']
    #allocation12 [shape = 'u8[512]{0}', space=vmem, size = 0x400, scoped, tag = 'output window, operand 1, single buffered']
    #allocation13 [shape = 's32[1]{0}', space=sflag, size = 0x4, scoped, tag = 'scoped memory for content_encoder_forward.3']
    %12 = vsyncpa [#allocation3], 0
    %13 = vsyncpa [#allocation6], 0
    %14 = vsyncpa [#allocation9], 0
    %15 = vsyncpa [#allocation4], 0
    %16 = vsyncpa [#allocation13], 0
    // Predicated region
    $region2: #{content_encoder_forward.3} parent=1 // pred_check
      _
    $region3: #{content_encoder_forward.3} parent=1 // pred_check_branch
      %18 = sbr.rel (0) target = $region5
    $region4: #{content_encoder_forward.3} parent=1 // pred_region
      %s20 = ssub.s32 3072, 3072
      %21 = vsyncadd [#allocation3], %s20
      %s22 = sshll.u32 [#allocation2], 4
      %s23 = int_to_ptr.vmem [resolvable:$true] %s22
      %28 = dma.hbm_to_vmem [thread:$0]  %s0, 3072, %s23, [#allocation3], 64, 64, 4
    $region5: #{content_encoder_forward.3} parent=1 // pred_fallthru
      _
    // Predicated region
    $region6: #{content_encoder_forward.3} parent=1 // pred_check
      _
    $region7: #{content_encoder_forward.3} parent=1 // pred_check_branch
      %30 = sbr.rel (0) target = $region9
    $region8: #{content_encoder_forward.3} parent=1 // pred_region
      %s32 = ssub.s32 2304, 2304
      %33 = vsyncadd [#allocation6], %s32
      %s34 = sshll.u32 [#allocation5], 4
      %s35 = int_to_ptr.vmem [resolvable:$true] %s34
      %40 = dma.hbm_to_vmem [thread:$0]  %s1, 2304, %s35, [#allocation6], 192, 192, 12
    $region9: #{content_encoder_forward.3} parent=1 // pred_fallthru
      _
    // Predicated region
    $region10: #{content_encoder_forward.3} parent=1 // pred_check
      _
    $region11: #{content_encoder_forward.3} parent=1 // pred_check_branch
      %42 = sbr.rel (0) target = $region13
    $region12: #{content_encoder_forward.3} parent=1 // pred_region
      %s44 = ssub.s32 1536, 1536
      %45 = vsyncadd [#allocation6], %s44
      %s46 = sshll.u32 [#allocation7], 4
      %s47 = int_to_ptr.vmem [resolvable:$true] %s46
      %52 = dma.hbm_to_vmem [thread:$0]  %s2, 1536, %s47, [#allocation6], 128, 128, 8
    $region13: #{content_encoder_forward.3} parent=1 // pred_fallthru
      _
    // Predicated region
    $region14: #{content_encoder_forward.3} parent=1 // pred_check
      _
    $region15: #{content_encoder_forward.3} parent=1 // pred_check_branch
      %54 = sbr.rel (0) target = $region17
    $region16: #{content_encoder_forward.3} parent=1 // pred_region
      %s56 = ssub.s32 8192, 8192
      %57 = vsyncadd [#allocation9], %s56
      %s58 = sshll.u32 [#allocation8], 4
      %s59 = int_to_ptr.vmem [resolvable:$true] %s58
      %64 = dma.hbm_to_vmem [thread:$0]  %s3, 8192, %s59, [#allocation9], 64, 64, 4
    $region17: #{content_encoder_forward.3} parent=1 // pred_fallthru
      _
    // Predicated region
    $region18: #{content_encoder_forward.3} parent=1 // pred_check
      _
    $region19: #{content_encoder_forward.3} parent=1 // pred_check_branch
      %66 = sbr.rel (0) target = $region21
    $region20: #{content_encoder_forward.3} parent=1 // pred_region
      %s68 = ssub.s32 16384, 16384
      %69 = vsyncadd [#allocation9], %s68
      %s70 = sshll.u32 [#allocation10], 4
      %s71 = int_to_ptr.vmem [resolvable:$true] %s70
      %76 = dma.hbm_to_vmem [thread:$0]  %s4, 16384, %s71, [#allocation9], 128, 128, 8
    $region21: #{content_encoder_forward.3} parent=1 // pred_fallthru
      _
    // Predicated region
    $region22: #{content_encoder_forward.3} parent=1 // pred_check
      _
    $region23: #{content_encoder_forward.3} parent=1 // pred_check_branch
      %78 = sbr.rel (0) target = $region25
    $region24: #{content_encoder_forward.3} parent=1 // pred_region
      %79 = dma.done [#allocation3], 3072
    $region25: #{content_encoder_forward.3} parent=1 // pred_fallthru
      _
    // Predicated region
    $region26: #{content_encoder_forward.3} parent=1 // pred_check
      _
    $region27: #{content_encoder_forward.3} parent=1 // pred_check_branch
      %81 = sbr.rel (0) target = $region29
    $region28: #{content_encoder_forward.3} parent=1 // pred_region
      %82 = dma.done [#allocation6], 2304
    $region29: #{content_encoder_forward.3} parent=1 // pred_fallthru
      _
    // Predicated region
    $region30: #{content_encoder_forward.3} parent=1 // pred_check
      _
    $region31: #{content_encoder_forward.3} parent=1 // pred_check_branch
      %84 = sbr.rel (0) target = $region33
    $region32: #{content_encoder_forward.3} parent=1 // pred_region
      %85 = dma.done [#allocation6], 1536
    $region33: #{content_encoder_forward.3} parent=1 // pred_fallthru
      _
    // Predicated region
    $region34: #{content_encoder_forward.3} parent=1 // pred_check
      _
    $region35: #{content_encoder_forward.3} parent=1 // pred_check_branch
      %87 = sbr.rel (0) target = $region37
    $region36: #{content_encoder_forward.3} parent=1 // pred_region
      %88 = dma.done [#allocation9], 8192
    $region37: #{content_encoder_forward.3} parent=1 // pred_fallthru
      _
    // Predicated region
    $region38: #{content_encoder_forward.3} parent=1 // pred_check
      _
    $region39: #{content_encoder_forward.3} parent=1 // pred_check_branch
      %90 = sbr.rel (0) target = $region41
    $region40: #{content_encoder_forward.3} parent=1 // pred_region
      %91 = dma.done [#allocation9], 16384
    $region41: #{content_encoder_forward.3} parent=1 // pred_fallthru
      _
    %v93 = vld [vmem:[#allocation5] sm:$0xff]
    %v94 = vld [vmem:[#allocation5 + $0x8] sm:$0xf]
    %v95 = vld [vmem:[#allocation5 + $0xc] sm:$0xff]
    %v96 = vld [vmem:[#allocation5 + $0x14] sm:$0xf]
    %v97 = vld [vmem:[#allocation5 + $0x18] sm:$0xff]
    %v98 = vld [vmem:[#allocation5 + $0x20] sm:$0xf]
    %v99 = vld [vmem:[#allocation5 + $0x24] sm:$0xff]
    %v100 = vld [vmem:[#allocation5 + $0x2c] sm:$0xf]
    %v101 = vld [vmem:[#allocation5 + $0x30] sm:$0xff]
    %v102 = vld [vmem:[#allocation5 + $0x38] sm:$0xf]
    %v103 = vld [vmem:[#allocation5 + $0x3c] sm:$0xff]
    %v104 = vld [vmem:[#allocation5 + $0x44] sm:$0xf]
    %v105 = vld [vmem:[#allocation5 + $0x48] sm:$0xff]
    %v106 = vld [vmem:[#allocation5 + $0x50] sm:$0xf]
    %v107 = vld [vmem:[#allocation5 + $0x54] sm:$0xff]
    %v108 = vld [vmem:[#allocation5 + $0x5c] sm:$0xf]
    %v109 = vld [vmem:[#allocation5 + $0x60] sm:$0xff]
    %v110 = vld [vmem:[#allocation5 + $0x68] sm:$0xf]
    %v111 = vld [vmem:[#allocation5 + $0x6c] sm:$0xff]
    %v112 = vld [vmem:[#allocation5 + $0x74] sm:$0xf]
    %v113 = vld [vmem:[#allocation5 + $0x78] sm:$0xff]
    %v114 = vld [vmem:[#allocation5 + $0x80] sm:$0xf]
    %v115 = vld [vmem:[#allocation5 + $0x84] sm:$0xff]
    %v116 = vld [vmem:[#allocation5 + $0x8c] sm:$0xf]
    %v117 = vld [vmem:[#allocation2] sm:$0xf]
    %v118 = vld [vmem:[#allocation2 + $0x4] sm:$0xf]
    %v119 = vld [vmem:[#allocation2 + $0x8] sm:$0xf]
    %v120 = vld [vmem:[#allocation2 + $0xc] sm:$0xf]
    %v121 = vld [vmem:[#allocation2 + $0x10] sm:$0xf]
    %v122 = vld [vmem:[#allocation2 + $0x14] sm:$0xf]
    %v123 = vld [vmem:[#allocation2 + $0x18] sm:$0xf]
    %v124 = vld [vmem:[#allocation2 + $0x1c] sm:$0xf]
    %v125 = vld [vmem:[#allocation2 + $0x20] sm:$0xf]
    %v126 = vld [vmem:[#allocation2 + $0x24] sm:$0xf]
    %v127 = vld [vmem:[#allocation2 + $0x28] sm:$0xf]
    %v128 = vld [vmem:[#allocation2 + $0x2c] sm:$0xf]
    %v129 = vld [vmem:[#allocation2 + $0x30] sm:$0xf]
    %v130 = vld [vmem:[#allocation2 + $0x34] sm:$0xf]
    %v131 = vld [vmem:[#allocation2 + $0x38] sm:$0xf]
    %v132 = vld [vmem:[#allocation2 + $0x3c] sm:$0xf]
    %v133 = vld [vmem:[#allocation2 + $0x40] sm:$0xf]
    %v134 = vld [vmem:[#allocation2 + $0x44] sm:$0xf]
    %v135 = vld [vmem:[#allocation2 + $0x48] sm:$0xf]
    %v136 = vld [vmem:[#allocation2 + $0x4c] sm:$0xf]
    %v137 = vld [vmem:[#allocation2 + $0x50] sm:$0xf]
    %v138 = vld [vmem:[#allocation2 + $0x54] sm:$0xf]
    %v139 = vld [vmem:[#allocation2 + $0x58] sm:$0xf]
    %v140 = vld [vmem:[#allocation2 + $0x5c] sm:$0xf]
    %v141 = vld [vmem:[#allocation2 + $0x60] sm:$0xf]
    %v142 = vld [vmem:[#allocation2 + $0x64] sm:$0xf]
    %v143 = vld [vmem:[#allocation2 + $0x68] sm:$0xf]
    %v144 = vld [vmem:[#allocation2 + $0x6c] sm:$0xf]
    %v145 = vld [vmem:[#allocation2 + $0x70] sm:$0xf]
    %v146 = vld [vmem:[#allocation2 + $0x74] sm:$0xf]
    %v147 = vld [vmem:[#allocation2 + $0x78] sm:$0xf]
    %v148 = vld [vmem:[#allocation2 + $0x7c] sm:$0xf]
    %v149 = vld [vmem:[#allocation2 + $0x80] sm:$0xf]
    %v150 = vld [vmem:[#allocation2 + $0x84] sm:$0xf]
    %v151 = vld [vmem:[#allocation2 + $0x88] sm:$0xf]
    %v152 = vld [vmem:[#allocation2 + $0x8c] sm:$0xf]
    %v153 = vld [vmem:[#allocation2 + $0x90] sm:$0xf]
    %v154 = vld [vmem:[#allocation2 + $0x94] sm:$0xf]
    %v155 = vld [vmem:[#allocation2 + $0x98] sm:$0xf]
    %v156 = vld [vmem:[#allocation2 + $0x9c] sm:$0xf]
    %v157 = vld [vmem:[#allocation2 + $0xa0] sm:$0xf]
    %v158 = vld [vmem:[#allocation2 + $0xa4] sm:$0xf]
    %v159 = vld [vmem:[#allocation2 + $0xa8] sm:$0xf]
    %v160 = vld [vmem:[#allocation2 + $0xac] sm:$0xf]
    %v161 = vld [vmem:[#allocation2 + $0xb0] sm:$0xf]
    %v162 = vld [vmem:[#allocation2 + $0xb4] sm:$0xf]
    %v163 = vld [vmem:[#allocation2 + $0xb8] sm:$0xf]
    %v164 = vld [vmem:[#allocation2 + $0xbc] sm:$0xf]
    %v165 = vld [vmem:[#allocation7] sm:$0xff]
    %v166 = vld [vmem:[#allocation7 + $0x8] sm:$0xff]
    %v167 = vld [vmem:[#allocation7 + $0x10] sm:$0xff]
    %v168 = vld [vmem:[#allocation7 + $0x18] sm:$0xff]
    %v169 = vld [vmem:[#allocation7 + $0x20] sm:$0xff]
    %v170 = vld [vmem:[#allocation7 + $0x28] sm:$0xff]
    %v171 = vld [vmem:[#allocation7 + $0x30] sm:$0xff]
    %v172 = vld [vmem:[#allocation7 + $0x38] sm:$0xff]
    %v173 = vld [vmem:[#allocation7 + $0x40] sm:$0xff]
    %v174 = vld [vmem:[#allocation7 + $0x48] sm:$0xff]
    %v175 = vld [vmem:[#allocation7 + $0x50] sm:$0xff]
    %v176 = vld [vmem:[#allocation7 + $0x58] sm:$0xff]
    %178 = vset.pattern.permute.xlu0 0
    %179 = vperm.xlu0 %178, %v165
    %v180 = vpop.permute.xlu0 %179
    %183 = vset.pattern.permute.xlu0 0
    %184 = vperm.xlu0 %183, %v166
    %v185 = vpop.permute.xlu0 %184
    %188 = vset.pattern.permute.xlu0 0
    %189 = vperm.xlu0 %188, %v167
    %v190 = vpop.permute.xlu0 %189
    %193 = vset.pattern.permute.xlu0 0
    %194 = vperm.xlu0 %193, %v168
    %v195 = vpop.permute.xlu0 %194
    %198 = vset.pattern.permute.xlu0 0
    %199 = vperm.xlu0 %198, %v169
    %v200 = vpop.permute.xlu0 %199
    %203 = vset.pattern.permute.xlu0 0
    %204 = vperm.xlu0 %203, %v170
    %v205 = vpop.permute.xlu0 %204
    %208 = vset.pattern.permute.xlu0 0
    %209 = vperm.xlu0 %208, %v171
    %v210 = vpop.permute.xlu0 %209
    %213 = vset.pattern.permute.xlu0 0
    %214 = vperm.xlu0 %213, %v172
    %v215 = vpop.permute.xlu0 %214
    %218 = vset.pattern.permute.xlu0 0
    %219 = vperm.xlu0 %218, %v173
    %v220 = vpop.permute.xlu0 %219
    %223 = vset.pattern.permute.xlu0 0
    %224 = vperm.xlu0 %223, %v174
    %v225 = vpop.permute.xlu0 %224
    %228 = vset.pattern.permute.xlu0 0
    %229 = vperm.xlu0 %228, %v175
    %v230 = vpop.permute.xlu0 %229
    %233 = vset.pattern.permute.xlu0 0
    %234 = vperm.xlu0 %233, %v176
    %v235 = vpop.permute.xlu0 %234
    %v261 = vunpack.c.l.b16 %v93
    %v262 = vunpack.c.h.b16 %v93
    %v263 = vunpack.c.l.b16 %v94
    %v264 = vunpack.c.l.b16 %v95
    %v265 = vunpack.c.h.b16 %v95
    %v266 = vunpack.c.l.b16 %v96
    %v267 = vunpack.c.l.b16 %v97
    %v268 = vunpack.c.h.b16 %v97
    %v269 = vunpack.c.l.b16 %v98
    %v270 = vunpack.c.l.b16 %v99
    %v271 = vunpack.c.h.b16 %v99
    %v272 = vunpack.c.l.b16 %v100
    %v273 = vunpack.c.l.b16 %v101
    %v274 = vunpack.c.h.b16 %v101
    %v275 = vunpack.c.l.b16 %v102
    %v276 = vunpack.c.l.b16 %v103
    %v277 = vunpack.c.h.b16 %v103
    %v278 = vunpack.c.l.b16 %v104
    %v279 = vunpack.c.l.b16 %v105
    %v280 = vunpack.c.h.b16 %v105
    %v281 = vunpack.c.l.b16 %v106
    %v282 = vunpack.c.l.b16 %v107
    %v283 = vunpack.c.h.b16 %v107
    %v284 = vunpack.c.l.b16 %v108
    %v285 = vunpack.c.l.b16 %v109
    %v286 = vunpack.c.h.b16 %v109
    %v287 = vunpack.c.l.b16 %v110
    %v288 = vunpack.c.l.b16 %v111
    %v289 = vunpack.c.h.b16 %v111
    %v290 = vunpack.c.l.b16 %v112
    %v291 = vunpack.c.l.b16 %v113
    %v292 = vunpack.c.h.b16 %v113
    %v293 = vunpack.c.l.b16 %v114
    %v294 = vunpack.c.l.b16 %v115
    %v295 = vunpack.c.h.b16 %v115
    %v296 = vunpack.c.l.b16 %v116
    %v297 = vpack.c.b16 %v264, %v261
    %v298 = vpack.c.b16 %v265, %v262
    %v299 = vpack.c.b16 %v266, %v263
    %v300 = vpack.c.b16 %v270, %v267
    %v301 = vpack.c.b16 %v271, %v268
    %v302 = vpack.c.b16 %v272, %v269
    %v303 = vpack.c.b16 %v276, %v273
    %v304 = vpack.c.b16 %v277, %v274
    %v305 = vpack.c.b16 %v278, %v275
    %v306 = vpack.c.b16 %v282, %v279
    %v307 = vpack.c.b16 %v283, %v280
    %v308 = vpack.c.b16 %v284, %v281
    %v309 = vpack.c.b16 %v288, %v285
    %v310 = vpack.c.b16 %v289, %v286
    %v311 = vpack.c.b16 %v290, %v287
    %v312 = vpack.c.b16 %v294, %v291
    %v313 = vpack.c.b16 %v295, %v292
    %v314 = vpack.c.b16 %v296, %v293
    %v381 = vunpack.c.l.b16 %v117
    %v382 = vunpack.c.l.b16 %v118
    %v383 = vunpack.c.l.b16 %v119
    %v384 = vunpack.c.l.b16 %v120
    %v385 = vunpack.c.l.b16 %v121
    %v386 = vunpack.c.l.b16 %v122
    %v387 = vunpack.c.l.b16 %v123
    %v388 = vunpack.c.l.b16 %v124
    %v389 = vunpack.c.l.b16 %v125
    %v390 = vunpack.c.l.b16 %v126
    %v391 = vunpack.c.l.b16 %v127
    %v392 = vunpack.c.l.b16 %v128
    %v393 = vunpack.c.l.b16 %v129
    %v394 = vunpack.c.l.b16 %v130
    %v395 = vunpack.c.l.b16 %v131
    %v396 = vunpack.c.l.b16 %v132
    %v397 = vunpack.c.l.b16 %v133
    %v398 = vunpack.c.l.b16 %v134
    %v399 = vunpack.c.l.b16 %v135
    %v400 = vunpack.c.l.b16 %v136
    %v401 = vunpack.c.l.b16 %v137
    %v402 = vunpack.c.l.b16 %v138
    %v403 = vunpack.c.l.b16 %v139
    %v404 = vunpack.c.l.b16 %v140
    %v405 = vunpack.c.l.b16 %v141
    %v406 = vunpack.c.l.b16 %v142
    %v407 = vunpack.c.l.b16 %v143
    %v408 = vunpack.c.l.b16 %v144
    %v409 = vunpack.c.l.b16 %v145
    %v410 = vunpack.c.l.b16 %v146
    %v411 = vunpack.c.l.b16 %v147
    %v412 = vunpack.c.l.b16 %v148
    %v413 = vunpack.c.l.b16 %v149
    %v414 = vunpack.c.l.b16 %v150
    %v415 = vunpack.c.l.b16 %v151
    %v416 = vunpack.c.l.b16 %v152
    %v417 = vunpack.c.l.b16 %v153
    %v418 = vunpack.c.l.b16 %v154
    %v419 = vunpack.c.l.b16 %v155
    %v420 = vunpack.c.l.b16 %v156
    %v421 = vunpack.c.l.b16 %v157
    %v422 = vunpack.c.l.b16 %v158
    %v423 = vunpack.c.l.b16 %v159
    %v424 = vunpack.c.l.b16 %v160
    %v425 = vunpack.c.l.b16 %v161
    %v426 = vunpack.c.l.b16 %v162
    %v427 = vunpack.c.l.b16 %v163
    %v428 = vunpack.c.l.b16 %v164
    %v429 = vpack.c.b16 %v382, %v381
    %v430 = vpack.c.b16 %v384, %v383
    %v431 = vpack.c.b16 %v386, %v385
    %v432 = vpack.c.b16 %v388, %v387
    %v433 = vpack.c.b16 %v390, %v389
    %v434 = vpack.c.b16 %v392, %v391
    %v435 = vpack.c.b16 %v394, %v393
    %v436 = vpack.c.b16 %v396, %v395
    %v437 = vpack.c.b16 %v398, %v397
    %v438 = vpack.c.b16 %v400, %v399
    %v439 = vpack.c.b16 %v402, %v401
    %v440 = vpack.c.b16 %v404, %v403
    %v441 = vpack.c.b16 %v406, %v405
    %v442 = vpack.c.b16 %v408, %v407
    %v443 = vpack.c.b16 %v410, %v409
    %v444 = vpack.c.b16 %v412, %v411
    %v445 = vpack.c.b16 %v414, %v413
    %v446 = vpack.c.b16 %v416, %v415
    %v447 = vpack.c.b16 %v418, %v417
    %v448 = vpack.c.b16 %v420, %v419
    %v449 = vpack.c.b16 %v422, %v421
    %v450 = vpack.c.b16 %v424, %v423
    %v451 = vpack.c.b16 %v426, %v425
    %v452 = vpack.c.b16 %v428, %v427
    %477 = vmatprep.subr.bf16.mxu0 0
    %478 = vmatpush1.bf16.msra.mxu0 %v429
    %479 = vmatprep.subr.bf16.mxu0 0
    %480 = vmatpush1.bf16.msra.mxu0 %v430
    %481 = vmatprep.subr.bf16.mxu0 0
    %482 = vmatpush1.bf16.msra.mxu0 %v431
    %483 = vmatprep.subr.bf16.mxu0 0
    %484 = vmatpush1.bf16.msra.mxu0 %v432
    %485 = vmatprep.subr.bf16.mxu0 0
    %486 = vmatpush1.bf16.msra.mxu0 %v433
    %487 = vmatprep.subr.bf16.mxu0 0
    %488 = vmatpush1.bf16.msra.mxu0 %v434
    %489 = vmatprep.subr.bf16.mxu0 0
    %490 = vmatpush1.bf16.msra.mxu0 %v435
    %491 = vmatprep.subr.bf16.mxu0 0
    %492 = vmatpush1.bf16.msra.mxu0 %v436
    %493 = vmatprep.subr.bf16.mxu0 0
    %494 = vmatpush1.bf16.msra.mxu0 %v437
    %495 = vmatprep.subr.bf16.mxu0 0
    %496 = vmatpush1.bf16.msra.mxu0 %v438
    %497 = vmatprep.subr.bf16.mxu0 0
    %498 = vmatpush1.bf16.msra.mxu0 %v439
    %499 = vmatprep.subr.bf16.mxu0 0
    %500 = vmatpush1.bf16.msra.mxu0 %v440
    %501 = vmatprep.subr.bf16.mxu0 0
    %502 = vmatpush1.bf16.msra.mxu0 %v441
    %503 = vmatprep.subr.bf16.mxu0 0
    %504 = vmatpush1.bf16.msra.mxu0 %v442
    %505 = vmatprep.subr.bf16.mxu0 0
    %506 = vmatpush1.bf16.msra.mxu0 %v443
    %507 = vmatprep.subr.bf16.mxu0 0
    %508 = vmatpush1.bf16.msra.mxu0 %v444
    %509 = vmatprep.mubr.bf16.mxu0 %v298
    %510 = vmatmul.mubr.bf16.gmra.mrb[0].mxu0 %v297
    %v511 = vpop.f32.mrb[0].mxu0
    %v512 = vadd.f32 %v180, %v511
    %v513 = vpop.f32.mrb[0].mxu0
    %v514 = vpop.f32.mrb[0].mxu0
    %v515 = vadd.f32 %v185, %v514
    %v516 = vpop.f32.mrb[0].mxu0
    %517 = vmatprep.mubr.bf16.mxu0 %v301
    %518 = vmatmul.mubr.bf16.gmra.mrb[0].mxu0 %v300
    %v519 = vpop.f32.mrb[0].mxu0
    %v520 = vadd.f32 %v190, %v519
    %v521 = vpop.f32.mrb[0].mxu0
    %v522 = vpop.f32.mrb[0].mxu0
    %v523 = vadd.f32 %v195, %v522
    %v524 = vpop.f32.mrb[0].mxu0
    %525 = vmatprep.mubr.bf16.mxu0 %v304
    %526 = vmatmul.mubr.bf16.gmra.mrb[0].mxu0 %v303
    %v527 = vpop.f32.mrb[0].mxu0
    %v528 = vadd.f32 %v200, %v527
    %v529 = vpop.f32.mrb[0].mxu0
    %v530 = vpop.f32.mrb[0].mxu0
    %v531 = vadd.f32 %v205, %v530
    %v532 = vpop.f32.mrb[0].mxu0
    %533 = vmatprep.mubr.bf16.mxu0 %v307
    %534 = vmatmul.mubr.bf16.gmra.mrb[0].mxu0 %v306
    %v535 = vpop.f32.mrb[0].mxu0
    %v536 = vadd.f32 %v210, %v535
    %v537 = vpop.f32.mrb[0].mxu0
    %v538 = vpop.f32.mrb[0].mxu0
    %v539 = vadd.f32 %v215, %v538
    %v540 = vpop.f32.mrb[0].mxu0
    %541 = vmatprep.mubr.bf16.mxu0 %v310
    %542 = vmatmul.mubr.bf16.gmra.mrb[0].mxu0 %v309
    %v543 = vpop.f32.mrb[0].mxu0
    %v544 = vadd.f32 %v220, %v543
    %v545 = vpop.f32.mrb[0].mxu0
    %v546 = vpop.f32.mrb[0].mxu0
    %v547 = vadd.f32 %v225, %v546
    %v548 = vpop.f32.mrb[0].mxu0
    %549 = vmatprep.mubr.bf16.mxu0 %v313
    %550 = vmatmul.mubr.bf16.gmra.mrb[0].mxu0 %v312
    %v551 = vpop.f32.mrb[0].mxu0
    %v552 = vadd.f32 %v230, %v551
    %v553 = vpop.f32.mrb[0].mxu0
    %v554 = vpop.f32.mrb[0].mxu0
    %v555 = vadd.f32 %v235, %v554
    %v556 = vpop.f32.mrb[0].mxu0
    %557 = vdwg.mxu0
    %558 = vmatprep.subr.bf16.mxu0 0
    %559 = vmatpush1.bf16.msra.mxu0 %v445
    %560 = vmatprep.subr.bf16.mxu0 0
    %561 = vmatpush1.bf16.msra.mxu0 %v446
    %562 = vmatprep.subr.bf16.mxu0 0
    %563 = vmatpush1.bf16.msra.mxu0 %v447
    %564 = vmatprep.subr.bf16.mxu0 0
    %565 = vmatpush1.bf16.msra.mxu0 %v448
    %566 = vmatprep.subr.bf16.mxu0 0
    %567 = vmatpush1.bf16.msra.mxu0 %v449
    %568 = vmatprep.subr.bf16.mxu0 0
    %569 = vmatpush1.bf16.msra.mxu0 %v450
    %570 = vmatprep.subr.bf16.mxu0 0
    %571 = vmatpush1.bf16.msra.mxu0 %v451
    %572 = vmatprep.subr.bf16.mxu0 0
    %573 = vmatpush1.bf16.msra.mxu0 %v452
    %574 = vmatprep.subr.bf16.mxu0 0
    %575 = vmatpush1.bf16.msra.mxu0 0
    %576 = vmatprep.subr.bf16.mxu0 0
    %577 = vmatpush1.bf16.msra.mxu0 0
    %578 = vmatprep.subr.bf16.mxu0 0
    %579 = vmatpush1.bf16.msra.mxu0 0
    %580 = vmatprep.subr.bf16.mxu0 0
    %581 = vmatpush1.bf16.msra.mxu0 0
    %582 = vmatprep.subr.bf16.mxu0 0
    %583 = vmatpush1.bf16.msra.mxu0 0
    %584 = vmatprep.subr.bf16.mxu0 0
    %585 = vmatpush1.bf16.msra.mxu0 0
    %586 = vmatprep.subr.bf16.mxu0 0
    %587 = vmatpush1.bf16.msra.mxu0 0
    %588 = vmatprep.subr.bf16.mxu0 0
    %589 = vmatpush1.bf16.msra.mxu0 0
    %590 = vmatprep.mubr.bf16.mxu0 0
    %591 = vmatmul.mubr.bf16.gmra.mrb[0].mxu0 %v299
    %v592 = vpop.f32.mrb[0].mxu0
    %v593 = vadd.f32 %v512, %v592
    %v594 = vpop.f32.mrb[0].mxu0
    %v595 = vpop.f32.mrb[0].mxu0
    %v596 = vadd.f32 %v515, %v595
    %v597 = vpop.f32.mrb[0].mxu0
    %598 = vmatprep.mubr.bf16.mxu0 0
    %599 = vmatmul.mubr.bf16.gmra.mrb[0].mxu0 %v302
    %v600 = vpop.f32.mrb[0].mxu0
    %v601 = vadd.f32 %v520, %v600
    %v602 = vpop.f32.mrb[0].mxu0
    %v603 = vpop.f32.mrb[0].mxu0
    %v604 = vadd.f32 %v523, %v603
    %v605 = vpop.f32.mrb[0].mxu0
    %606 = vmatprep.mubr.bf16.mxu0 0
    %607 = vmatmul.mubr.bf16.gmra.mrb[0].mxu0 %v305
    %v608 = vpop.f32.mrb[0].mxu0
    %v609 = vadd.f32 %v528, %v608
    %v610 = vpop.f32.mrb[0].mxu0
    %v611 = vpop.f32.mrb[0].mxu0
    %v612 = vadd.f32 %v531, %v611
    %v613 = vpop.f32.mrb[0].mxu0
    %614 = vmatprep.mubr.bf16.mxu0 0
    %615 = vmatmul.mubr.bf16.gmra.mrb[0].mxu0 %v308
    %v616 = vpop.f32.mrb[0].mxu0
    %v617 = vadd.f32 %v536, %v616
    %v618 = vpop.f32.mrb[0].mxu0
    %v619 = vpop.f32.mrb[0].mxu0
    %v620 = vadd.f32 %v539, %v619
    %v621 = vpop.f32.mrb[0].mxu0
    %622 = vmatprep.mubr.bf16.mxu0 0
    %623 = vmatmul.mubr.bf16.gmra.mrb[0].mxu0 %v311
    %v624 = vpop.f32.mrb[0].mxu0
    %v625 = vadd.f32 %v544, %v624
    %v626 = vpop.f32.mrb[0].mxu0
    %v627 = vpop.f32.mrb[0].mxu0
    %v628 = vadd.f32 %v547, %v627
    %v629 = vpop.f32.mrb[0].mxu0
    %630 = vmatprep.mubr.bf16.mxu0 0
    %631 = vmatmul.mubr.bf16.gmra.mrb[0].mxu0 %v314
    %v632 = vpop.f32.mrb[0].mxu0
    %v633 = vadd.f32 %v552, %v632
    %v634 = vpop.f32.mrb[0].mxu0
    %v635 = vpop.f32.mrb[0].mxu0
    %v636 = vadd.f32 %v555, %v635
    %v637 = vpop.f32.mrb[0].mxu0
    %638 = vdwg.mxu0
    %v639 = vmul.f32 %v593, 0.5
    %v640 = vmul.f32 %v596, 0.5
    %v641 = vmul.f32 %v601, 0.5
    %v642 = vmul.f32 %v604, 0.5
    %v643 = vmul.f32 %v609, 0.5
    %v644 = vmul.f32 %v612, 0.5
    %v645 = vmul.f32 %v617, 0.5
    %v646 = vmul.f32 %v620, 0.5
    %v647 = vmul.f32 %v625, 0.5
    %v648 = vmul.f32 %v628, 0.5
    %v649 = vmul.f32 %v633, 0.5
    %v650 = vmul.f32 %v636, 0.5
    %v651 = vmul.f32 %v593, 0.044715
    %v652 = vmul.f32 %v596, 0.044715
    %v653 = vmul.f32 %v601, 0.044715
    %v654 = vmul.f32 %v604, 0.044715
    %v655 = vmul.f32 %v609, 0.044715
    %v656 = vmul.f32 %v612, 0.044715
    %v657 = vmul.f32 %v617, 0.044715
    %v658 = vmul.f32 %v620, 0.044715
    %v659 = vmul.f32 %v625, 0.044715
    %v660 = vmul.f32 %v628, 0.044715
    %v661 = vmul.f32 %v633, 0.044715
    %v662 = vmul.f32 %v636, 0.044715
    %v663 = vmul.f32 %v651, %v593
    %v664 = vmul.f32 %v652, %v596
    %v665 = vmul.f32 %v653, %v601
    %v666 = vmul.f32 %v654, %v604
    %v667 = vmul.f32 %v655, %v609
    %v668 = vmul.f32 %v656, %v612
    %v669 = vmul.f32 %v657, %v617
    %v670 = vmul.f32 %v658, %v620
    %v671 = vmul.f32 %v659, %v625
    %v672 = vmul.f32 %v660, %v628
    %v673 = vmul.f32 %v661, %v633
    %v674 = vmul.f32 %v662, %v636
    %v675 = vmul.f32 %v663, %v593
    %v676 = vmul.f32 %v664, %v596
    %v677 = vmul.f32 %v665, %v601
    %v678 = vmul.f32 %v666, %v604
    %v679 = vmul.f32 %v667, %v609
    %v680 = vmul.f32 %v668, %v612
    %v681 = vmul.f32 %v669, %v617
    %v682 = vmul.f32 %v670, %v620
    %v683 = vmul.f32 %v671, %v625
    %v684 = vmul.f32 %v672, %v628
    %v685 = vmul.f32 %v673, %v633
    %v686 = vmul.f32 %v674, %v636
    %v687 = vadd.f32 %v593, %v675
    %v688 = vadd.f32 %v596, %v676
    %v689 = vadd.f32 %v601, %v677
    %v690 = vadd.f32 %v604, %v678
    %v691 = vadd.f32 %v609, %v679
    %v692 = vadd.f32 %v612, %v680
    %v693 = vadd.f32 %v617, %v681
    %v694 = vadd.f32 %v620, %v682
    %v695 = vadd.f32 %v625, %v683
    %v696 = vadd.f32 %v628, %v684
    %v697 = vadd.f32 %v633, %v685
    %v698 = vadd.f32 %v636, %v686
    %v699 = vmul.f32 %v687, 0.7978846
    %v700 = vmul.f32 %v688, 0.7978846
    %v701 = vmul.f32 %v689, 0.7978846
    %v702 = vmul.f32 %v690, 0.7978846
    %v703 = vmul.f32 %v691, 0.7978846
    %v704 = vmul.f32 %v692, 0.7978846
    %v705 = vmul.f32 %v693, 0.7978846
    %v706 = vmul.f32 %v694, 0.7978846
    %v707 = vmul.f32 %v695, 0.7978846
    %v708 = vmul.f32 %v696, 0.7978846
    %v709 = vmul.f32 %v697, 0.7978846
    %v710 = vmul.f32 %v698, 0.7978846
    %v711 = vtanh.pop %v699
    %v712 = vtanh.pop %v700
    %v713 = vtanh.pop %v701
    %v714 = vtanh.pop %v702
    %v715 = vtanh.pop %v703
    %v716 = vtanh.pop %v704
    %v717 = vtanh.pop %v705
    %v718 = vtanh.pop %v706
    %v719 = vtanh.pop %v707
    %v720 = vtanh.pop %v708
    %v721 = vtanh.pop %v709
    %v722 = vtanh.pop %v710
    %v723 = vadd.f32 %v711, 1.0
    %v724 = vadd.f32 %v712, 1.0
    %v725 = vadd.f32 %v713, 1.0
    %v726 = vadd.f32 %v714, 1.0
    %v727 = vadd.f32 %v715, 1.0
    %v728 = vadd.f32 %v716, 1.0
    %v729 = vadd.f32 %v717, 1.0
    %v730 = vadd.f32 %v718, 1.0
    %v731 = vadd.f32 %v719, 1.0
    %v732 = vadd.f32 %v720, 1.0
    %v733 = vadd.f32 %v721, 1.0
    %v734 = vadd.f32 %v722, 1.0
    %v735 = vmul.f32 %v639, %v723
    %v736 = vmul.f32 %v640, %v724
    %v737 = vmul.f32 %v641, %v725
    %v738 = vmul.f32 %v642, %v726
    %v739 = vmul.f32 %v643, %v727
    %v740 = vmul.f32 %v644, %v728
    %v741 = vmul.f32 %v645, %v729
    %v742 = vmul.f32 %v646, %v730
    %v743 = vmul.f32 %v647, %v731
    %v744 = vmul.f32 %v648, %v732
    %v745 = vmul.f32 %v649, %v733
    %v746 = vmul.f32 %v650, %v734
    %v747 = vpack.c.bf16 %v736, %v735
    %v748 = vpack.c.bf16 %v738, %v737
    %v749 = vpack.c.bf16 %v740, %v739
    %v750 = vpack.c.bf16 %v742, %v741
    %v751 = vpack.c.bf16 %v744, %v743
    %v752 = vpack.c.bf16 %v746, %v745
    %v759 = vunpack.c.l.b16 %v747
    %v760 = vunpack.c.h.b16 %v747
    %v761 = vunpack.c.l.b16 %v748
    %v762 = vunpack.c.h.b16 %v748
    %v763 = vunpack.c.l.b16 %v749
    %v764 = vunpack.c.h.b16 %v749
    %v765 = vunpack.c.l.b16 %v750
    %v766 = vunpack.c.h.b16 %v750
    %v767 = vunpack.c.l.b16 %v751
    %v768 = vunpack.c.h.b16 %v751
    %v769 = vunpack.c.l.b16 %v752
    %v770 = vunpack.c.h.b16 %v752
    %v771 = vpack.c.b16 %v759, %v759
    %v772 = vpack.c.b16 %v760, %v760
    %v773 = vpack.c.b16 %v761, %v761
    %v774 = vpack.c.b16 %v762, %v762
    %v775 = vpack.c.b16 %v763, %v763
    %v776 = vpack.c.b16 %v764, %v764
    %v777 = vpack.c.b16 %v765, %v765
    %v778 = vpack.c.b16 %v766, %v766
    %v779 = vpack.c.b16 %v767, %v767
    %v780 = vpack.c.b16 %v768, %v768
    %v781 = vpack.c.b16 %v769, %v769
    %v782 = vpack.c.b16 %v770, %v770
    %795 = vst [vmem:[#allocation11] sm:$0xf] %v771
    %796 = vst [vmem:[#allocation11 + $0x4] sm:$0xf] %v772
    %797 = vst [vmem:[#allocation11 + $0x8] sm:$0xf] %v773
    %798 = vst [vmem:[#allocation11 + $0xc] sm:$0xf] %v774
    %799 = vst [vmem:[#allocation11 + $0x10] sm:$0xf] %v775
    %800 = vst [vmem:[#allocation11 + $0x14] sm:$0xf] %v776
    %801 = vst [vmem:[#allocation11 + $0x18] sm:$0xf] %v777
    %802 = vst [vmem:[#allocation11 + $0x1c] sm:$0xf] %v778
    %803 = vst [vmem:[#allocation11 + $0x20] sm:$0xf] %v779
    %804 = vst [vmem:[#allocation11 + $0x24] sm:$0xf] %v780
    %805 = vst [vmem:[#allocation11 + $0x28] sm:$0xf] %v781
    %806 = vst [vmem:[#allocation11 + $0x2c] sm:$0xf] %v782
    %v807 = vlaneseq
    %v808 = vshrl.u32 %v807, 7
    %v809 = vadd.s32 %v808, 8
    %v810 = vadd.s32 %v808, 16
    %v811 = vadd.s32 %v808, 24
    %v812 = vadd.s32 %v808, 32
    %v813 = vadd.s32 %v808, 40
    %v814 = vadd.s32 %v808, 48
    %v815 = vadd.s32 %v808, 56
    %v816 = vadd.s32 %v808, 64
    %v817 = vadd.s32 %v808, 72
    %v818 = vadd.s32 %v808, 80
    %v819 = vadd.s32 %v808, 88
    %v820 = vadd.s32 %v808, 96
    %v821 = vadd.s32 %v808, 104
    %v822 = vadd.s32 %v808, 112
    %v823 = vadd.s32 %v808, 120
    %v824 = vld [vmem:[#allocation8] sm:$0xf]
    %v825 = vld [vmem:[#allocation8 + $0x4] sm:$0xf]
    %v826 = vld [vmem:[#allocation8 + $0x8] sm:$0xf]
    %v827 = vld [vmem:[#allocation8 + $0xc] sm:$0xf]
    %v828 = vld [vmem:[#allocation8 + $0x10] sm:$0xf]
    %v829 = vld [vmem:[#allocation8 + $0x14] sm:$0xf]
    %v830 = vld [vmem:[#allocation8 + $0x18] sm:$0xf]
    %v831 = vld [vmem:[#allocation8 + $0x1c] sm:$0xf]
    %v832 = vld [vmem:[#allocation8 + $0x20] sm:$0xf]
    %v833 = vld [vmem:[#allocation8 + $0x24] sm:$0xf]
    %v834 = vld [vmem:[#allocation8 + $0x28] sm:$0xf]
    %v835 = vld [vmem:[#allocation8 + $0x2c] sm:$0xf]
    %v836 = vld [vmem:[#allocation8 + $0x30] sm:$0xf]
    %v837 = vld [vmem:[#allocation8 + $0x34] sm:$0xf]
    %v838 = vld [vmem:[#allocation8 + $0x38] sm:$0xf]
    %v839 = vld [vmem:[#allocation8 + $0x3c] sm:$0xf]
    %v856 = vunpack.c.l.b16 %v824
    %v857 = vunpack.c.l.b16 %v825
    %v858 = vunpack.c.l.b16 %v826
    %v859 = vunpack.c.l.b16 %v827
    %v860 = vunpack.c.l.b16 %v828
    %v861 = vunpack.c.l.b16 %v829
    %v862 = vunpack.c.l.b16 %v830
    %v863 = vunpack.c.l.b16 %v831
    %v864 = vunpack.c.l.b16 %v832
    %v865 = vunpack.c.l.b16 %v833
    %v866 = vunpack.c.l.b16 %v834
    %v867 = vunpack.c.l.b16 %v835
    %v868 = vunpack.c.l.b16 %v836
    %v869 = vunpack.c.l.b16 %v837
    %v870 = vunpack.c.l.b16 %v838
    %v871 = vunpack.c.l.b16 %v839
    %v872 = vpack.c.b16 %v857, %v856
    %v873 = vpack.c.b16 %v859, %v858
    %v874 = vpack.c.b16 %v861, %v860
    %v875 = vpack.c.b16 %v863, %v862
    %v876 = vpack.c.b16 %v865, %v864
    %v877 = vpack.c.b16 %v867, %v866
    %v878 = vpack.c.b16 %v869, %v868
    %v879 = vpack.c.b16 %v871, %v870
    %vm880 = vcmask 785408
    %v882 = vsel %vm880, %v872, 0
    %v885 = vsel %vm880, %v873, 0
    %v888 = vsel %vm880, %v874, 0
    %v891 = vsel %vm880, %v875, 0
    %v894 = vsel %vm880, %v876, 0
    %v897 = vsel %vm880, %v877, 0
    %v900 = vsel %vm880, %v878, 0
    %v903 = vsel %vm880, %v879, 0
    %905 = vmatprep.subr.bf16.mxu0 0
    %906 = vmatpush1.bf16.msra.mxu0 %v747
    %907 = vmatprep.subr.bf16.mxu0 0
    %908 = vmatpush1.bf16.msra.mxu0 %v748
    %909 = vmatprep.subr.bf16.mxu0 0
    %910 = vmatpush1.bf16.msra.mxu0 %v749
    %911 = vmatprep.subr.bf16.mxu0 0
    %912 = vmatpush1.bf16.msra.mxu0 %v750
    %913 = vmatprep.subr.bf16.mxu0 0
    %914 = vmatpush1.bf16.msra.mxu0 %v751
    %915 = vmatprep.subr.bf16.mxu0 0
    %916 = vmatpush1.bf16.msra.mxu0 %v752
    %917 = vmatprep.subr.bf16.mxu0 0
    %918 = vmatpush1.bf16.msra.mxu0 0
    %919 = vmatprep.subr.bf16.mxu0 0
    %920 = vmatpush1.bf16.msra.mxu0 0
    %921 = vmatprep.subr.bf16.mxu0 0
    %922 = vmatpush1.bf16.msra.mxu0 0
    %923 = vmatprep.subr.bf16.mxu0 0
    %924 = vmatpush1.bf16.msra.mxu0 0
    %925 = vmatprep.subr.bf16.mxu0 0
    %926 = vmatpush1.bf16.msra.mxu0 0
    %927 = vmatprep.subr.bf16.mxu0 0
    %928 = vmatpush1.bf16.msra.mxu0 0
    %929 = vmatprep.subr.bf16.mxu0 0
    %930 = vmatpush1.bf16.msra.mxu0 0
    %931 = vmatprep.subr.bf16.mxu0 0
    %932 = vmatpush1.bf16.msra.mxu0 0
    %933 = vmatprep.subr.bf16.mxu0 0
    %934 = vmatpush1.bf16.msra.mxu0 0
    %935 = vmatprep.subr.bf16.mxu0 0
    %936 = vmatpush1.bf16.msra.mxu0 0
    %937 = vmatprep.mubr.bf16.mxu0 0
    %938 = vmatmul.mubr.bf16.gmra.mrb[0].mxu0 %v882
    %v939 = vpop.f32.mrb[0].mxu0
    %v940 = vadd.f32 0.0, %v939
    %v941 = vpop.f32.mrb[0].mxu0
    %v942 = vpop.f32.mrb[0].mxu0
    %v943 = vadd.f32 0.0, %v942
    %v944 = vpop.f32.mrb[0].mxu0
    %945 = vmatprep.mubr.bf16.mxu0 0
    %946 = vmatmul.mubr.bf16.gmra.mrb[0].mxu0 %v885
    %v947 = vpop.f32.mrb[0].mxu0
    %v948 = vadd.f32 0.0, %v947
    %v949 = vpop.f32.mrb[0].mxu0
    %v950 = vpop.f32.mrb[0].mxu0
    %v951 = vadd.f32 0.0, %v950
    %v952 = vpop.f32.mrb[0].mxu0
    %953 = vmatprep.mubr.bf16.mxu0 0
    %954 = vmatmul.mubr.bf16.gmra.mrb[0].mxu0 %v888
    %v955 = vpop.f32.mrb[0].mxu0
    %v956 = vadd.f32 0.0, %v955
    %v957 = vpop.f32.mrb[0].mxu0
    %v958 = vpop.f32.mrb[0].mxu0
    %v959 = vadd.f32 0.0, %v958
    %v960 = vpop.f32.mrb[0].mxu0
    %961 = vmatprep.mubr.bf16.mxu0 0
    %962 = vmatmul.mubr.bf16.gmra.mrb[0].mxu0 %v891
    %v963 = vpop.f32.mrb[0].mxu0
    %v964 = vadd.f32 0.0, %v963
    %v965 = vpop.f32.mrb[0].mxu0
    %v966 = vpop.f32.mrb[0].mxu0
    %v967 = vadd.f32 0.0, %v966
    %v968 = vpop.f32.mrb[0].mxu0
    %969 = vmatprep.mubr.bf16.mxu0 0
    %970 = vmatmul.mubr.bf16.gmra.mrb[0].mxu0 %v894
    %v971 = vpop.f32.mrb[0].mxu0
    %v972 = vadd.f32 0.0, %v971
    %v973 = vpop.f32.mrb[0].mxu0
    %v974 = vpop.f32.mrb[0].mxu0
    %v975 = vadd.f32 0.0, %v974
    %v976 = vpop.f32.mrb[0].mxu0
    %977 = vmatprep.mubr.bf16.mxu0 0
    %978 = vmatmul.mubr.bf16.gmra.mrb[0].mxu0 %v897
    %v979 = vpop.f32.mrb[0].mxu0
    %v980 = vadd.f32 0.0, %v979
    %v981 = vpop.f32.mrb[0].mxu0
    %v982 = vpop.f32.mrb[0].mxu0
    %v983 = vadd.f32 0.0, %v982
    %v984 = vpop.f32.mrb[0].mxu0
    %985 = vmatprep.mubr.bf16.mxu0 0
    %986 = vmatmul.mubr.bf16.gmra.mrb[0].mxu0 %v900
    %v987 = vpop.f32.mrb[0].mxu0
    %v988 = vadd.f32 0.0, %v987
    %v989 = vpop.f32.mrb[0].mxu0
    %v990 = vpop.f32.mrb[0].mxu0
    %v991 = vadd.f32 0.0, %v990
    %v992 = vpop.f32.mrb[0].mxu0
    %993 = vmatprep.mubr.bf16.mxu0 0
    %994 = vmatmul.mubr.bf16.gmra.mrb[0].mxu0 %v903
    %v995 = vpop.f32.mrb[0].mxu0
    %v996 = vadd.f32 0.0, %v995
    %v997 = vpop.f32.mrb[0].mxu0
    %v998 = vpop.f32.mrb[0].mxu0
    %v999 = vadd.f32 0.0, %v998
    %v1000 = vpop.f32.mrb[0].mxu0
    %1001 = vdwg.mxu0
    %v1002 = vld [vmem:[#allocation10] sm:$0xff]
    %v1003 = vld [vmem:[#allocation10 + $0x8] sm:$0xff]
    %v1004 = vld [vmem:[#allocation10 + $0x10] sm:$0xff]
    %v1005 = vld [vmem:[#allocation10 + $0x18] sm:$0xff]
    %v1006 = vld [vmem:[#allocation10 + $0x20] sm:$0xff]
    %v1007 = vld [vmem:[#allocation10 + $0x28] sm:$0xff]
    %v1008 = vld [vmem:[#allocation10 + $0x30] sm:$0xff]
    %v1009 = vld [vmem:[#allocation10 + $0x38] sm:$0xff]
    %v1010 = vld [vmem:[#allocation10 + $0x40] sm:$0xff]
    %v1011 = vld [vmem:[#allocation10 + $0x48] sm:$0xff]
    %v1012 = vld [vmem:[#allocation10 + $0x50] sm:$0xff]
    %v1013 = vld [vmem:[#allocation10 + $0x58] sm:$0xff]
    %v1014 = vld [vmem:[#allocation10 + $0x60] sm:$0xff]
    %v1015 = vld [vmem:[#allocation10 + $0x68] sm:$0xff]
    %v1016 = vld [vmem:[#allocation10 + $0x70] sm:$0xff]
    %v1017 = vld [vmem:[#allocation10 + $0x78] sm:$0xff]
    %1019 = vset.pattern.permute.xlu0 0
    %1020 = vperm.xlu0 %1019, %v1002
    %v1021 = vpop.permute.xlu0 %1020
    %1024 = vset.pattern.permute.xlu0 0
    %1025 = vperm.xlu0 %1024, %v1003
    %v1026 = vpop.permute.xlu0 %1025
    %1029 = vset.pattern.permute.xlu0 0
    %1030 = vperm.xlu0 %1029, %v1004
    %v1031 = vpop.permute.xlu0 %1030
    %1034 = vset.pattern.permute.xlu0 0
    %1035 = vperm.xlu0 %1034, %v1005
    %v1036 = vpop.permute.xlu0 %1035
    %1039 = vset.pattern.permute.xlu0 0
    %1040 = vperm.xlu0 %1039, %v1006
    %v1041 = vpop.permute.xlu0 %1040
    %1044 = vset.pattern.permute.xlu0 0
    %1045 = vperm.xlu0 %1044, %v1007
    %v1046 = vpop.permute.xlu0 %1045
    %1049 = vset.pattern.permute.xlu0 0
    %1050 = vperm.xlu0 %1049, %v1008
    %v1051 = vpop.permute.xlu0 %1050
    %1054 = vset.pattern.permute.xlu0 0
    %1055 = vperm.xlu0 %1054, %v1009
    %v1056 = vpop.permute.xlu0 %1055
    %1059 = vset.pattern.permute.xlu0 0
    %1060 = vperm.xlu0 %1059, %v1010
    %v1061 = vpop.permute.xlu0 %1060
    %1064 = vset.pattern.permute.xlu0 0
    %1065 = vperm.xlu0 %1064, %v1011
    %v1066 = vpop.permute.xlu0 %1065
    %1069 = vset.pattern.permute.xlu0 0
    %1070 = vperm.xlu0 %1069, %v1012
    %v1071 = vpop.permute.xlu0 %1070
    %1074 = vset.pattern.permute.xlu0 0
    %1075 = vperm.xlu0 %1074, %v1013
    %v1076 = vpop.permute.xlu0 %1075
    %1079 = vset.pattern.permute.xlu0 0
    %1080 = vperm.xlu0 %1079, %v1014
    %v1081 = vpop.permute.xlu0 %1080
    %1084 = vset.pattern.permute.xlu0 0
    %1085 = vperm.xlu0 %1084, %v1015
    %v1086 = vpop.permute.xlu0 %1085
    %1089 = vset.pattern.permute.xlu0 0
    %1090 = vperm.xlu0 %1089, %v1016
    %v1091 = vpop.permute.xlu0 %1090
    %1094 = vset.pattern.permute.xlu0 0
    %1095 = vperm.xlu0 %1094, %v1017
    %v1096 = vpop.permute.xlu0 %1095
    %v1098 = vsub.f32 %v940, %v1021
    %v1099 = vsub.f32 %v943, %v1026
    %v1100 = vsub.f32 %v948, %v1031
    %v1101 = vsub.f32 %v951, %v1036
    %v1102 = vsub.f32 %v956, %v1041
    %v1103 = vsub.f32 %v959, %v1046
    %v1104 = vsub.f32 %v964, %v1051
    %v1105 = vsub.f32 %v967, %v1056
    %v1106 = vsub.f32 %v972, %v1061
    %v1107 = vsub.f32 %v975, %v1066
    %v1108 = vsub.f32 %v980, %v1071
    %v1109 = vsub.f32 %v983, %v1076
    %v1110 = vsub.f32 %v988, %v1081
    %v1111 = vsub.f32 %v991, %v1086
    %v1112 = vsub.f32 %v996, %v1091
    %v1113 = vsub.f32 %v999, %v1096
    %v1114 = vmax.f32 %v1098, %v1102
    %v1115 = vmax.f32 %v1099, %v1103
    %v1116 = vmax.f32 %v1100, %v1104
    %v1117 = vmax.f32 %v1101, %v1105
    %v1118 = vmax.f32 %v1114, %v1106
    %v1119 = vmax.f32 %v1115, %v1107
    %v1120 = vmax.f32 %v1116, %v1108
    %v1121 = vmax.f32 %v1117, %v1109
    %v1122 = vmax.f32 %v1118, %v1110
    %v1123 = vmax.f32 %v1119, %v1111
    %v1124 = vmax.f32 %v1120, %v1112
    %v1125 = vmax.f32 %v1121, %v1113
    %v1126 = vmax.f32 %v1122, %v1123
    %v1127 = vmax.f32 %v1124, %v1125
    %v1128 = vmax.f32 %v1126, %v1127
    %v1129 = vrot.slane %v1128, 4
    %v1130 = vmax.f32 %v1128, %v1129
    %v1131 = vrot.slane %v1130, 2
    %v1132 = vmax.f32 %v1130, %v1131
    %v1133 = vrot.slane %v1132, 1
    %v1134 = vmax.f32 %v1132, %v1133
    %vm1135 = vcmp.ge.f32.partialorder %v1098, %v1134
    %vm1136 = vcmp.ge.f32.partialorder %v1099, %v1134
    %vm1137 = vcmp.ge.f32.partialorder %v1100, %v1134
    %vm1138 = vcmp.ge.f32.partialorder %v1101, %v1134
    %vm1139 = vcmp.ge.f32.partialorder %v1102, %v1134
    %vm1140 = vcmp.ge.f32.partialorder %v1103, %v1134
    %vm1141 = vcmp.ge.f32.partialorder %v1104, %v1134
    %vm1142 = vcmp.ge.f32.partialorder %v1105, %v1134
    %vm1143 = vcmp.ge.f32.partialorder %v1106, %v1134
    %vm1144 = vcmp.ge.f32.partialorder %v1107, %v1134
    %vm1145 = vcmp.ge.f32.partialorder %v1108, %v1134
    %vm1146 = vcmp.ge.f32.partialorder %v1109, %v1134
    %vm1147 = vcmp.ge.f32.partialorder %v1110, %v1134
    %vm1148 = vcmp.ge.f32.partialorder %v1111, %v1134
    %vm1149 = vcmp.ge.f32.partialorder %v1112, %v1134
    %vm1150 = vcmp.ge.f32.partialorder %v1113, %v1134
    %v1151 = vsel %vm1135, %v808, 128
    %v1152 = vsel %vm1136, %v809, 128
    %v1153 = vsel %vm1137, %v810, 128
    %v1154 = vsel %vm1138, %v811, 128
    %v1155 = vsel %vm1139, %v812, 128
    %v1156 = vsel %vm1140, %v813, 128
    %v1157 = vsel %vm1141, %v814, 128
    %v1158 = vsel %vm1142, %v815, 128
    %v1159 = vsel %vm1143, %v816, 128
    %v1160 = vsel %vm1144, %v817, 128
    %v1161 = vsel %vm1145, %v818, 128
    %v1162 = vsel %vm1146, %v819, 128
    %v1163 = vsel %vm1147, %v820, 128
    %v1164 = vsel %vm1148, %v821, 128
    %v1165 = vsel %vm1149, %v822, 128
    %v1166 = vsel %vm1150, %v823, 128
    %vm1167 = vcmp.lt.s32.totalorder %v1151, %v1155
    %v1168 = vsel %vm1167, %v1151, %v1155
    %vm1169 = vcmp.lt.s32.totalorder %v1152, %v1156
    %v1170 = vsel %vm1169, %v1152, %v1156
    %vm1171 = vcmp.lt.s32.totalorder %v1153, %v1157
    %v1172 = vsel %vm1171, %v1153, %v1157
    %vm1173 = vcmp.lt.s32.totalorder %v1154, %v1158
    %v1174 = vsel %vm1173, %v1154, %v1158
    %vm1175 = vcmp.lt.s32.totalorder %v1168, %v1159
    %v1176 = vsel %vm1175, %v1168, %v1159
    %vm1177 = vcmp.lt.s32.totalorder %v1170, %v1160
    %v1178 = vsel %vm1177, %v1170, %v1160
    %vm1179 = vcmp.lt.s32.totalorder %v1172, %v1161
    %v1180 = vsel %vm1179, %v1172, %v1161
    %vm1181 = vcmp.lt.s32.totalorder %v1174, %v1162
    %v1182 = vsel %vm1181, %v1174, %v1162
    %vm1183 = vcmp.lt.s32.totalorder %v1176, %v1163
    %v1184 = vsel %vm1183, %v1176, %v1163
    %vm1185 = vcmp.lt.s32.totalorder %v1178, %v1164
    %v1186 = vsel %vm1185, %v1178, %v1164
    %vm1187 = vcmp.lt.s32.totalorder %v1180, %v1165
    %v1188 = vsel %vm1187, %v1180, %v1165
    %vm1189 = vcmp.lt.s32.totalorder %v1182, %v1166
    %v1190 = vsel %vm1189, %v1182, %v1166
    %vm1191 = vcmp.lt.s32.totalorder %v1184, %v1186
    %v1192 = vsel %vm1191, %v1184, %v1186
    %vm1193 = vcmp.lt.s32.totalorder %v1188, %v1190
    %v1194 = vsel %vm1193, %v1188, %v1190
    %vm1195 = vcmp.lt.s32.totalorder %v1192, %v1194
    %v1196 = vsel %vm1195, %v1192, %v1194
    %v1197 = vrot.slane %v1196, 4
    %vm1198 = vcmp.lt.s32.totalorder %v1196, %v1197
    %v1199 = vsel %vm1198, %v1196, %v1197
    %v1200 = vrot.slane %v1199, 2
    %vm1201 = vcmp.lt.s32.totalorder %v1199, %v1200
    %v1202 = vsel %vm1201, %v1199, %v1200
    %v1203 = vrot.slane %v1202, 1
    %vm1204 = vcmp.lt.s32.totalorder %v1202, %v1203
    %v1205 = vsel %vm1204, %v1202, %v1203
    %vm1206 = vcmp.gt.f32.partialorder %v1134, -inf
    %v1207 = vsel %vm1206, %v1205, 0
    %v1208 = vsel %vm1206, %v1134, -inf
    %v1209 = vld [vmem:[#allocation8 + $0x40] sm:$0xf]
    %v1210 = vld [vmem:[#allocation8 + $0x44] sm:$0xf]
    %v1211 = vld [vmem:[#allocation8 + $0x48] sm:$0xf]
    %v1212 = vld [vmem:[#allocation8 + $0x4c] sm:$0xf]
    %v1213 = vld [vmem:[#allocation8 + $0x50] sm:$0xf]
    %v1214 = vld [vmem:[#allocation8 + $0x54] sm:$0xf]
    %v1215 = vld [vmem:[#allocation8 + $0x58] sm:$0xf]
    %v1216 = vld [vmem:[#allocation8 + $0x5c] sm:$0xf]
    %v1217 = vld [vmem:[#allocation8 + $0x60] sm:$0xf]
    %v1218 = vld [vmem:[#allocation8 + $0x64] sm:$0xf]
    %v1219 = vld [vmem:[#allocation8 + $0x68] sm:$0xf]
    %v1220 = vld [vmem:[#allocation8 + $0x6c] sm:$0xf]
    %v1221 = vld [vmem:[#allocation8 + $0x70] sm:$0xf]
    %v1222 = vld [vmem:[#allocation8 + $0x74] sm:$0xf]
    %v1223 = vld [vmem:[#allocation8 + $0x78] sm:$0xf]
    %v1224 = vld [vmem:[#allocation8 + $0x7c] sm:$0xf]
    %v1241 = vunpack.c.l.b16 %v1209
    %v1242 = vunpack.c.l.b16 %v1210
    %v1243 = vunpack.c.l.b16 %v1211
    %v1244 = vunpack.c.l.b16 %v1212
    %v1245 = vunpack.c.l.b16 %v1213
    %v1246 = vunpack.c.l.b16 %v1214
    %v1247 = vunpack.c.l.b16 %v1215
    %v1248 = vunpack.c.l.b16 %v1216
    %v1249 = vunpack.c.l.b16 %v1217
    %v1250 = vunpack.c.l.b16 %v1218
    %v1251 = vunpack.c.l.b16 %v1219
    %v1252 = vunpack.c.l.b16 %v1220
    %v1253 = vunpack.c.l.b16 %v1221
    %v1254 = vunpack.c.l.b16 %v1222
    %v1255 = vunpack.c.l.b16 %v1223
    %v1256 = vunpack.c.l.b16 %v1224
    %v1257 = vpack.c.b16 %v1242, %v1241
    %v1258 = vpack.c.b16 %v1244, %v1243
    %v1259 = vpack.c.b16 %v1246, %v1245
    %v1260 = vpack.c.b16 %v1248, %v1247
    %v1261 = vpack.c.b16 %v1250, %v1249
    %v1262 = vpack.c.b16 %v1252, %v1251
    %v1263 = vpack.c.b16 %v1254, %v1253
    %v1264 = vpack.c.b16 %v1256, %v1255
    %v1266 = vsel %vm880, %v1257, 0
    %v1269 = vsel %vm880, %v1258, 0
    %v1272 = vsel %vm880, %v1259, 0
    %v1275 = vsel %vm880, %v1260, 0
    %v1278 = vsel %vm880, %v1261, 0
    %v1281 = vsel %vm880, %v1262, 0
    %v1284 = vsel %vm880, %v1263, 0
    %v1287 = vsel %vm880, %v1264, 0
    %1289 = vmatprep.subr.bf16.mxu0 0
    %1290 = vmatpush1.bf16.msra.mxu0 %v747
    %1291 = vmatprep.subr.bf16.mxu0 0
    %1292 = vmatpush1.bf16.msra.mxu0 %v748
    %1293 = vmatprep.subr.bf16.mxu0 0
    %1294 = vmatpush1.bf16.msra.mxu0 %v749
    %1295 = vmatprep.subr.bf16.mxu0 0
    %1296 = vmatpush1.bf16.msra.mxu0 %v750
    %1297 = vmatprep.subr.bf16.mxu0 0
    %1298 = vmatpush1.bf16.msra.mxu0 %v751
    %1299 = vmatprep.subr.bf16.mxu0 0
    %1300 = vmatpush1.bf16.msra.mxu0 %v752
    %1301 = vmatprep.subr.bf16.mxu0 0
    %1302 = vmatpush1.bf16.msra.mxu0 0
    %1303 = vmatprep.subr.bf16.mxu0 0
    %1304 = vmatpush1.bf16.msra.mxu0 0
    %1305 = vmatprep.subr.bf16.mxu0 0
    %1306 = vmatpush1.bf16.msra.mxu0 0
    %1307 = vmatprep.subr.bf16.mxu0 0
    %1308 = vmatpush1.bf16.msra.mxu0 0
    %1309 = vmatprep.subr.bf16.mxu0 0
    %1310 = vmatpush1.bf16.msra.mxu0 0
    %1311 = vmatprep.subr.bf16.mxu0 0
    %1312 = vmatpush1.bf16.msra.mxu0 0
    %1313 = vmatprep.subr.bf16.mxu0 0
    %1314 = vmatpush1.bf16.msra.mxu0 0
    %1315 = vmatprep.subr.bf16.mxu0 0
    %1316 = vmatpush1.bf16.msra.mxu0 0
    %1317 = vmatprep.subr.bf16.mxu0 0
    %1318 = vmatpush1.bf16.msra.mxu0 0
    %1319 = vmatprep.subr.bf16.mxu0 0
    %1320 = vmatpush1.bf16.msra.mxu0 0
    %1321 = vmatprep.mubr.bf16.mxu0 0
    %1322 = vmatmul.mubr.bf16.gmra.mrb[0].mxu0 %v1266
    %v1323 = vpop.f32.mrb[0].mxu0
    %v1324 = vadd.f32 0.0, %v1323
    %v1325 = vpop.f32.mrb[0].mxu0
    %v1326 = vpop.f32.mrb[0].mxu0
    %v1327 = vadd.f32 0.0, %v1326
    %v1328 = vpop.f32.mrb[0].mxu0
    %1329 = vmatprep.mubr.bf16.mxu0 0
    %1330 = vmatmul.mubr.bf16.gmra.mrb[0].mxu0 %v1269
    %v1331 = vpop.f32.mrb[0].mxu0
    %v1332 = vadd.f32 0.0, %v1331
    %v1333 = vpop.f32.mrb[0].mxu0
    %v1334 = vpop.f32.mrb[0].mxu0
    %v1335 = vadd.f32 0.0, %v1334
    %v1336 = vpop.f32.mrb[0].mxu0
    %1337 = vmatprep.mubr.bf16.mxu0 0
    %1338 = vmatmul.mubr.bf16.gmra.mrb[0].mxu0 %v1272
    %v1339 = vpop.f32.mrb[0].mxu0
    %v1340 = vadd.f32 0.0, %v1339
    %v1341 = vpop.f32.mrb[0].mxu0
    %v1342 = vpop.f32.mrb[0].mxu0
    %v1343 = vadd.f32 0.0, %v1342
    %v1344 = vpop.f32.mrb[0].mxu0
    %1345 = vmatprep.mubr.bf16.mxu0 0
    %1346 = vmatmul.mubr.bf16.gmra.mrb[0].mxu0 %v1275
    %v1347 = vpop.f32.mrb[0].mxu0
    %v1348 = vadd.f32 0.0, %v1347
    %v1349 = vpop.f32.mrb[0].mxu0
    %v1350 = vpop.f32.mrb[0].mxu0
    %v1351 = vadd.f32 0.0, %v1350
    %v1352 = vpop.f32.mrb[0].mxu0
    %1353 = vmatprep.mubr.bf16.mxu0 0
    %1354 = vmatmul.mubr.bf16.gmra.mrb[0].mxu0 %v1278
    %v1355 = vpop.f32.mrb[0].mxu0
    %v1356 = vadd.f32 0.0, %v1355
    %v1357 = vpop.f32.mrb[0].mxu0
    %v1358 = vpop.f32.mrb[0].mxu0
    %v1359 = vadd.f32 0.0, %v1358
    %v1360 = vpop.f32.mrb[0].mxu0
    %1361 = vmatprep.mubr.bf16.mxu0 0
    %1362 = vmatmul.mubr.bf16.gmra.mrb[0].mxu0 %v1281
    %v1363 = vpop.f32.mrb[0].mxu0
    %v1364 = vadd.f32 0.0, %v1363
    %v1365 = vpop.f32.mrb[0].mxu0
    %v1366 = vpop.f32.mrb[0].mxu0
    %v1367 = vadd.f32 0.0, %v1366
    %v1368 = vpop.f32.mrb[0].mxu0
    %1369 = vmatprep.mubr.bf16.mxu0 0
    %1370 = vmatmul.mubr.bf16.gmra.mrb[0].mxu0 %v1284
    %v1371 = vpop.f32.mrb[0].mxu0
    %v1372 = vadd.f32 0.0, %v1371
    %v1373 = vpop.f32.mrb[0].mxu0
    %v1374 = vpop.f32.mrb[0].mxu0
    %v1375 = vadd.f32 0.0, %v1374
    %v1376 = vpop.f32.mrb[0].mxu0
    %1377 = vmatprep.mubr.bf16.mxu0 0
    %1378 = vmatmul.mubr.bf16.gmra.mrb[0].mxu0 %v1287
    %v1379 = vpop.f32.mrb[0].mxu0
    %v1380 = vadd.f32 0.0, %v1379
    %v1381 = vpop.f32.mrb[0].mxu0
    %v1382 = vpop.f32.mrb[0].mxu0
    %v1383 = vadd.f32 0.0, %v1382
    %v1384 = vpop.f32.mrb[0].mxu0
    %1385 = vdwg.mxu0
    %v1386 = vld [vmem:[#allocation10 + $0x80] sm:$0xff]
    %v1387 = vld [vmem:[#allocation10 + $0x88] sm:$0xff]
    %v1388 = vld [vmem:[#allocation10 + $0x90] sm:$0xff]
    %v1389 = vld [vmem:[#allocation10 + $0x98] sm:$0xff]
    %v1390 = vld [vmem:[#allocation10 + $0xa0] sm:$0xff]
    %v1391 = vld [vmem:[#allocation10 + $0xa8] sm:$0xff]
    %v1392 = vld [vmem:[#allocation10 + $0xb0] sm:$0xff]
    %v1393 = vld [vmem:[#allocation10 + $0xb8] sm:$0xff]
    %v1394 = vld [vmem:[#allocation10 + $0xc0] sm:$0xff]
    %v1395 = vld [vmem:[#allocation10 + $0xc8] sm:$0xff]
    %v1396 = vld [vmem:[#allocation10 + $0xd0] sm:$0xff]
    %v1397 = vld [vmem:[#allocation10 + $0xd8] sm:$0xff]
    %v1398 = vld [vmem:[#allocation10 + $0xe0] sm:$0xff]
    %v1399 = vld [vmem:[#allocation10 + $0xe8] sm:$0xff]
    %v1400 = vld [vmem:[#allocation10 + $0xf0] sm:$0xff]
    %v1401 = vld [vmem:[#allocation10 + $0xf8] sm:$0xff]
    %1403 = vset.pattern.permute.xlu0 0
    %1404 = vperm.xlu0 %1403, %v1386
    %v1405 = vpop.permute.xlu0 %1404
    %1408 = vset.pattern.permute.xlu0 0
    %1409 = vperm.xlu0 %1408, %v1387
    %v1410 = vpop.permute.xlu0 %1409
    %1413 = vset.pattern.permute.xlu0 0
    %1414 = vperm.xlu0 %1413, %v1388
    %v1415 = vpop.permute.xlu0 %1414
    %1418 = vset.pattern.permute.xlu0 0
    %1419 = vperm.xlu0 %1418, %v1389
    %v1420 = vpop.permute.xlu0 %1419
    %1423 = vset.pattern.permute.xlu0 0
    %1424 = vperm.xlu0 %1423, %v1390
    %v1425 = vpop.permute.xlu0 %1424
    %1428 = vset.pattern.permute.xlu0 0
    %1429 = vperm.xlu0 %1428, %v1391
    %v1430 = vpop.permute.xlu0 %1429
    %1433 = vset.pattern.permute.xlu0 0
    %1434 = vperm.xlu0 %1433, %v1392
    %v1435 = vpop.permute.xlu0 %1434
    %1438 = vset.pattern.permute.xlu0 0
    %1439 = vperm.xlu0 %1438, %v1393
    %v1440 = vpop.permute.xlu0 %1439
    %1443 = vset.pattern.permute.xlu0 0
    %1444 = vperm.xlu0 %1443, %v1394
    %v1445 = vpop.permute.xlu0 %1444
    %1448 = vset.pattern.permute.xlu0 0
    %1449 = vperm.xlu0 %1448, %v1395
    %v1450 = vpop.permute.xlu0 %1449
    %1453 = vset.pattern.permute.xlu0 0
    %1454 = vperm.xlu0 %1453, %v1396
    %v1455 = vpop.permute.xlu0 %1454
    %1458 = vset.pattern.permute.xlu0 0
    %1459 = vperm.xlu0 %1458, %v1397
    %v1460 = vpop.permute.xlu0 %1459
    %1463 = vset.pattern.permute.xlu0 0
    %1464 = vperm.xlu0 %1463, %v1398
    %v1465 = vpop.permute.xlu0 %1464
    %1468 = vset.pattern.permute.xlu0 0
    %1469 = vperm.xlu0 %1468, %v1399
    %v1470 = vpop.permute.xlu0 %1469
    %1473 = vset.pattern.permute.xlu0 0
    %1474 = vperm.xlu0 %1473, %v1400
    %v1475 = vpop.permute.xlu0 %1474
    %1478 = vset.pattern.permute.xlu0 0
    %1479 = vperm.xlu0 %1478, %v1401
    %v1480 = vpop.permute.xlu0 %1479
    %v1482 = vsub.f32 %v1324, %v1405
    %v1483 = vsub.f32 %v1327, %v1410
    %v1484 = vsub.f32 %v1332, %v1415
    %v1485 = vsub.f32 %v1335, %v1420
    %v1486 = vsub.f32 %v1340, %v1425
    %v1487 = vsub.f32 %v1343, %v1430
    %v1488 = vsub.f32 %v1348, %v1435
    %v1489 = vsub.f32 %v1351, %v1440
    %v1490 = vsub.f32 %v1356, %v1445
    %v1491 = vsub.f32 %v1359, %v1450
    %v1492 = vsub.f32 %v1364, %v1455
    %v1493 = vsub.f32 %v1367, %v1460
    %v1494 = vsub.f32 %v1372, %v1465
    %v1495 = vsub.f32 %v1375, %v1470
    %v1496 = vsub.f32 %v1380, %v1475
    %v1497 = vsub.f32 %v1383, %v1480
    %v1498 = vmax.f32 %v1482, %v1486
    %v1499 = vmax.f32 %v1483, %v1487
    %v1500 = vmax.f32 %v1484, %v1488
    %v1501 = vmax.f32 %v1485, %v1489
    %v1502 = vmax.f32 %v1498, %v1490
    %v1503 = vmax.f32 %v1499, %v1491
    %v1504 = vmax.f32 %v1500, %v1492
    %v1505 = vmax.f32 %v1501, %v1493
    %v1506 = vmax.f32 %v1502, %v1494
    %v1507 = vmax.f32 %v1503, %v1495
    %v1508 = vmax.f32 %v1504, %v1496
    %v1509 = vmax.f32 %v1505, %v1497
    %v1510 = vmax.f32 %v1506, %v1507
    %v1511 = vmax.f32 %v1508, %v1509
    %v1512 = vmax.f32 %v1510, %v1511
    %v1513 = vrot.slane %v1512, 4
    %v1514 = vmax.f32 %v1512, %v1513
    %v1515 = vrot.slane %v1514, 2
    %v1516 = vmax.f32 %v1514, %v1515
    %v1517 = vrot.slane %v1516, 1
    %v1518 = vmax.f32 %v1516, %v1517
    %vm1519 = vcmp.ge.f32.partialorder %v1482, %v1518
    %vm1520 = vcmp.ge.f32.partialorder %v1483, %v1518
    %vm1521 = vcmp.ge.f32.partialorder %v1484, %v1518
    %vm1522 = vcmp.ge.f32.partialorder %v1485, %v1518
    %vm1523 = vcmp.ge.f32.partialorder %v1486, %v1518
    %vm1524 = vcmp.ge.f32.partialorder %v1487, %v1518
    %vm1525 = vcmp.ge.f32.partialorder %v1488, %v1518
    %vm1526 = vcmp.ge.f32.partialorder %v1489, %v1518
    %vm1527 = vcmp.ge.f32.partialorder %v1490, %v1518
    %vm1528 = vcmp.ge.f32.partialorder %v1491, %v1518
    %vm1529 = vcmp.ge.f32.partialorder %v1492, %v1518
    %vm1530 = vcmp.ge.f32.partialorder %v1493, %v1518
    %vm1531 = vcmp.ge.f32.partialorder %v1494, %v1518
    %vm1532 = vcmp.ge.f32.partialorder %v1495, %v1518
    %vm1533 = vcmp.ge.f32.partialorder %v1496, %v1518
    %vm1534 = vcmp.ge.f32.partialorder %v1497, %v1518
    %v1535 = vsel %vm1519, %v808, 128
    %v1536 = vsel %vm1520, %v809, 128
    %v1537 = vsel %vm1521, %v810, 128
    %v1538 = vsel %vm1522, %v811, 128
    %v1539 = vsel %vm1523, %v812, 128
    %v1540 = vsel %vm1524, %v813, 128
    %v1541 = vsel %vm1525, %v814, 128
    %v1542 = vsel %vm1526, %v815, 128
    %v1543 = vsel %vm1527, %v816, 128
    %v1544 = vsel %vm1528, %v817, 128
    %v1545 = vsel %vm1529, %v818, 128
    %v1546 = vsel %vm1530, %v819, 128
    %v1547 = vsel %vm1531, %v820, 128
    %v1548 = vsel %vm1532, %v821, 128
    %v1549 = vsel %vm1533, %v822, 128
    %v1550 = vsel %vm1534, %v823, 128
    %vm1551 = vcmp.lt.s32.totalorder %v1535, %v1539
    %v1552 = vsel %vm1551, %v1535, %v1539
    %vm1553 = vcmp.lt.s32.totalorder %v1536, %v1540
    %v1554 = vsel %vm1553, %v1536, %v1540
    %vm1555 = vcmp.lt.s32.totalorder %v1537, %v1541
    %v1556 = vsel %vm1555, %v1537, %v1541
    %vm1557 = vcmp.lt.s32.totalorder %v1538, %v1542
    %v1558 = vsel %vm1557, %v1538, %v1542
    %vm1559 = vcmp.lt.s32.totalorder %v1552, %v1543
    %v1560 = vsel %vm1559, %v1552, %v1543
    %vm1561 = vcmp.lt.s32.totalorder %v1554, %v1544
    %v1562 = vsel %vm1561, %v1554, %v1544
    %vm1563 = vcmp.lt.s32.totalorder %v1556, %v1545
    %v1564 = vsel %vm1563, %v1556, %v1545
    %vm1565 = vcmp.lt.s32.totalorder %v1558, %v1546
    %v1566 = vsel %vm1565, %v1558, %v1546
    %vm1567 = vcmp.lt.s32.totalorder %v1560, %v1547
    %v1568 = vsel %vm1567, %v1560, %v1547
    %vm1569 = vcmp.lt.s32.totalorder %v1562, %v1548
    %v1570 = vsel %vm1569, %v1562, %v1548
    %vm1571 = vcmp.lt.s32.totalorder %v1564, %v1549
    %v1572 = vsel %vm1571, %v1564, %v1549
    %vm1573 = vcmp.lt.s32.totalorder %v1566, %v1550
    %v1574 = vsel %vm1573, %v1566, %v1550
    %vm1575 = vcmp.lt.s32.totalorder %v1568, %v1570
    %v1576 = vsel %vm1575, %v1568, %v1570
    %vm1577 = vcmp.lt.s32.totalorder %v1572, %v1574
    %v1578 = vsel %vm1577, %v1572, %v1574
    %vm1579 = vcmp.lt.s32.totalorder %v1576, %v1578
    %v1580 = vsel %vm1579, %v1576, %v1578
    %v1581 = vrot.slane %v1580, 4
    %vm1582 = vcmp.lt.s32.totalorder %v1580, %v1581
    %v1583 = vsel %vm1582, %v1580, %v1581
    %v1584 = vrot.slane %v1583, 2
    %vm1585 = vcmp.lt.s32.totalorder %v1583, %v1584
    %v1586 = vsel %vm1585, %v1583, %v1584
    %v1587 = vrot.slane %v1586, 1
    %vm1588 = vcmp.lt.s32.totalorder %v1586, %v1587
    %v1589 = vsel %vm1588, %v1586, %v1587
    %v1590 = vadd.s32 %v1589, 128
    %vm1591 = vcmp.gt.f32.partialorder %v1518, %v1208
    %v1592 = vsel %vm1591, %v1590, %v1207
    %v1593 = vsel %vm1591, %v1518, %v1208
    %v1594 = vld [vmem:[#allocation8 + $0x80] sm:$0xf]
    %v1595 = vld [vmem:[#allocation8 + $0x84] sm:$0xf]
    %v1596 = vld [vmem:[#allocation8 + $0x88] sm:$0xf]
    %v1597 = vld [vmem:[#allocation8 + $0x8c] sm:$0xf]
    %v1598 = vld [vmem:[#allocation8 + $0x90] sm:$0xf]
    %v1599 = vld [vmem:[#allocation8 + $0x94] sm:$0xf]
    %v1600 = vld [vmem:[#allocation8 + $0x98] sm:$0xf]
    %v1601 = vld [vmem:[#allocation8 + $0x9c] sm:$0xf]
    %v1602 = vld [vmem:[#allocation8 + $0xa0] sm:$0xf]
    %v1603 = vld [vmem:[#allocation8 + $0xa4] sm:$0xf]
    %v1604 = vld [vmem:[#allocation8 + $0xa8] sm:$0xf]
    %v1605 = vld [vmem:[#allocation8 + $0xac] sm:$0xf]
    %v1606 = vld [vmem:[#allocation8 + $0xb0] sm:$0xf]
    %v1607 = vld [vmem:[#allocation8 + $0xb4] sm:$0xf]
    %v1608 = vld [vmem:[#allocation8 + $0xb8] sm:$0xf]
    %v1609 = vld [vmem:[#allocation8 + $0xbc] sm:$0xf]
    %v1626 = vunpack.c.l.b16 %v1594
    %v1627 = vunpack.c.l.b16 %v1595
    %v1628 = vunpack.c.l.b16 %v1596
    %v1629 = vunpack.c.l.b16 %v1597
    %v1630 = vunpack.c.l.b16 %v1598
    %v1631 = vunpack.c.l.b16 %v1599
    %v1632 = vunpack.c.l.b16 %v1600
    %v1633 = vunpack.c.l.b16 %v1601
    %v1634 = vunpack.c.l.b16 %v1602
    %v1635 = vunpack.c.l.b16 %v1603
    %v1636 = vunpack.c.l.b16 %v1604
    %v1637 = vunpack.c.l.b16 %v1605
    %v1638 = vunpack.c.l.b16 %v1606
    %v1639 = vunpack.c.l.b16 %v1607
    %v1640 = vunpack.c.l.b16 %v1608
    %v1641 = vunpack.c.l.b16 %v1609
    %v1642 = vpack.c.b16 %v1627, %v1626
    %v1643 = vpack.c.b16 %v1629, %v1628
    %v1644 = vpack.c.b16 %v1631, %v1630
    %v1645 = vpack.c.b16 %v1633, %v1632
    %v1646 = vpack.c.b16 %v1635, %v1634
    %v1647 = vpack.c.b16 %v1637, %v1636
    %v1648 = vpack.c.b16 %v1639, %v1638
    %v1649 = vpack.c.b16 %v1641, %v1640
    %v1651 = vsel %vm880, %v1642, 0
    %v1654 = vsel %vm880, %v1643, 0
    %v1657 = vsel %vm880, %v1644, 0
    %v1660 = vsel %vm880, %v1645, 0
    %v1663 = vsel %vm880, %v1646, 0
    %v1666 = vsel %vm880, %v1647, 0
    %v1669 = vsel %vm880, %v1648, 0
    %v1672 = vsel %vm880, %v1649, 0
    %1674 = vmatprep.subr.bf16.mxu0 0
    %1675 = vmatpush1.bf16.msra.mxu0 %v747
    %1676 = vmatprep.subr.bf16.mxu0 0
    %1677 = vmatpush1.bf16.msra.mxu0 %v748
    %1678 = vmatprep.subr.bf16.mxu0 0
    %1679 = vmatpush1.bf16.msra.mxu0 %v749
    %1680 = vmatprep.subr.bf16.mxu0 0
    %1681 = vmatpush1.bf16.msra.mxu0 %v750
    %1682 = vmatprep.subr.bf16.mxu0 0
    %1683 = vmatpush1.bf16.msra.mxu0 %v751
    %1684 = vmatprep.subr.bf16.mxu0 0
    %1685 = vmatpush1.bf16.msra.mxu0 %v752
    %1686 = vmatprep.subr.bf16.mxu0 0
    %1687 = vmatpush1.bf16.msra.mxu0 0
    %1688 = vmatprep.subr.bf16.mxu0 0
    %1689 = vmatpush1.bf16.msra.mxu0 0
    %1690 = vmatprep.subr.bf16.mxu0 0
    %1691 = vmatpush1.bf16.msra.mxu0 0
    %1692 = vmatprep.subr.bf16.mxu0 0
    %1693 = vmatpush1.bf16.msra.mxu0 0
    %1694 = vmatprep.subr.bf16.mxu0 0
    %1695 = vmatpush1.bf16.msra.mxu0 0
    %1696 = vmatprep.subr.bf16.mxu0 0
    %1697 = vmatpush1.bf16.msra.mxu0 0
    %1698 = vmatprep.subr.bf16.mxu0 0
    %1699 = vmatpush1.bf16.msra.mxu0 0
    %1700 = vmatprep.subr.bf16.mxu0 0
    %1701 = vmatpush1.bf16.msra.mxu0 0
    %1702 = vmatprep.subr.bf16.mxu0 0
    %1703 = vmatpush1.bf16.msra.mxu0 0
    %1704 = vmatprep.subr.bf16.mxu0 0
    %1705 = vmatpush1.bf16.msra.mxu0 0
    %1706 = vmatprep.mubr.bf16.mxu0 0
    %1707 = vmatmul.mubr.bf16.gmra.mrb[0].mxu0 %v1651
    %v1708 = vpop.f32.mrb[0].mxu0
    %v1709 = vadd.f32 0.0, %v1708
    %v1710 = vpop.f32.mrb[0].mxu0
    %v1711 = vpop.f32.mrb[0].mxu0
    %v1712 = vadd.f32 0.0, %v1711
    %v1713 = vpop.f32.mrb[0].mxu0
    %1714 = vmatprep.mubr.bf16.mxu0 0
    %1715 = vmatmul.mubr.bf16.gmra.mrb[0].mxu0 %v1654
    %v1716 = vpop.f32.mrb[0].mxu0
    %v1717 = vadd.f32 0.0, %v1716
    %v1718 = vpop.f32.mrb[0].mxu0
    %v1719 = vpop.f32.mrb[0].mxu0
    %v1720 = vadd.f32 0.0, %v1719
    %v1721 = vpop.f32.mrb[0].mxu0
    %1722 = vmatprep.mubr.bf16.mxu0 0
    %1723 = vmatmul.mubr.bf16.gmra.mrb[0].mxu0 %v1657
    %v1724 = vpop.f32.mrb[0].mxu0
    %v1725 = vadd.f32 0.0, %v1724
    %v1726 = vpop.f32.mrb[0].mxu0
    %v1727 = vpop.f32.mrb[0].mxu0
    %v1728 = vadd.f32 0.0, %v1727
    %v1729 = vpop.f32.mrb[0].mxu0
    %1730 = vmatprep.mubr.bf16.mxu0 0
    %1731 = vmatmul.mubr.bf16.gmra.mrb[0].mxu0 %v1660
    %v1732 = vpop.f32.mrb[0].mxu0
    %v1733 = vadd.f32 0.0, %v1732
    %v1734 = vpop.f32.mrb[0].mxu0
    %v1735 = vpop.f32.mrb[0].mxu0
    %v1736 = vadd.f32 0.0, %v1735
    %v1737 = vpop.f32.mrb[0].mxu0
    %1738 = vmatprep.mubr.bf16.mxu0 0
    %1739 = vmatmul.mubr.bf16.gmra.mrb[0].mxu0 %v1663
    %v1740 = vpop.f32.mrb[0].mxu0
    %v1741 = vadd.f32 0.0, %v1740
    %v1742 = vpop.f32.mrb[0].mxu0
    %v1743 = vpop.f32.mrb[0].mxu0
    %v1744 = vadd.f32 0.0, %v1743
    %v1745 = vpop.f32.mrb[0].mxu0
    %1746 = vmatprep.mubr.bf16.mxu0 0
    %1747 = vmatmul.mubr.bf16.gmra.mrb[0].mxu0 %v1666
    %v1748 = vpop.f32.mrb[0].mxu0
    %v1749 = vadd.f32 0.0, %v1748
    %v1750 = vpop.f32.mrb[0].mxu0
    %v1751 = vpop.f32.mrb[0].mxu0
    %v1752 = vadd.f32 0.0, %v1751
    %v1753 = vpop.f32.mrb[0].mxu0
    %1754 = vmatprep.mubr.bf16.mxu0 0
    %1755 = vmatmul.mubr.bf16.gmra.mrb[0].mxu0 %v1669
    %v1756 = vpop.f32.mrb[0].mxu0
    %v1757 = vadd.f32 0.0, %v1756
    %v1758 = vpop.f32.mrb[0].mxu0
    %v1759 = vpop.f32.mrb[0].mxu0
    %v1760 = vadd.f32 0.0, %v1759
    %v1761 = vpop.f32.mrb[0].mxu0
    %1762 = vmatprep.mubr.bf16.mxu0 0
    %1763 = vmatmul.mubr.bf16.gmra.mrb[0].mxu0 %v1672
    %v1764 = vpop.f32.mrb[0].mxu0
    %v1765 = vadd.f32 0.0, %v1764
    %v1766 = vpop.f32.mrb[0].mxu0
    %v1767 = vpop.f32.mrb[0].mxu0
    %v1768 = vadd.f32 0.0, %v1767
    %v1769 = vpop.f32.mrb[0].mxu0
    %1770 = vdwg.mxu0
    %v1771 = vld [vmem:[#allocation10 + $0x100] sm:$0xff]
    %v1772 = vld [vmem:[#allocation10 + $0x108] sm:$0xff]
    %v1773 = vld [vmem:[#allocation10 + $0x110] sm:$0xff]
    %v1774 = vld [vmem:[#allocation10 + $0x118] sm:$0xff]
    %v1775 = vld [vmem:[#allocation10 + $0x120] sm:$0xff]
    %v1776 = vld [vmem:[#allocation10 + $0x128] sm:$0xff]
    %v1777 = vld [vmem:[#allocation10 + $0x130] sm:$0xff]
    %v1778 = vld [vmem:[#allocation10 + $0x138] sm:$0xff]
    %v1779 = vld [vmem:[#allocation10 + $0x140] sm:$0xff]
    %v1780 = vld [vmem:[#allocation10 + $0x148] sm:$0xff]
    %v1781 = vld [vmem:[#allocation10 + $0x150] sm:$0xff]
    %v1782 = vld [vmem:[#allocation10 + $0x158] sm:$0xff]
    %v1783 = vld [vmem:[#allocation10 + $0x160] sm:$0xff]
    %v1784 = vld [vmem:[#allocation10 + $0x168] sm:$0xff]
    %v1785 = vld [vmem:[#allocation10 + $0x170] sm:$0xff]
    %v1786 = vld [vmem:[#allocation10 + $0x178] sm:$0xff]
    %1788 = vset.pattern.permute.xlu0 0
    %1789 = vperm.xlu0 %1788, %v1771
    %v1790 = vpop.permute.xlu0 %1789
    %1793 = vset.pattern.permute.xlu0 0
    %1794 = vperm.xlu0 %1793, %v1772
    %v1795 = vpop.permute.xlu0 %1794
    %1798 = vset.pattern.permute.xlu0 0
    %1799 = vperm.xlu0 %1798, %v1773
    %v1800 = vpop.permute.xlu0 %1799
    %1803 = vset.pattern.permute.xlu0 0
    %1804 = vperm.xlu0 %1803, %v1774
    %v1805 = vpop.permute.xlu0 %1804
    %1808 = vset.pattern.permute.xlu0 0
    %1809 = vperm.xlu0 %1808, %v1775
    %v1810 = vpop.permute.xlu0 %1809
    %1813 = vset.pattern.permute.xlu0 0
    %1814 = vperm.xlu0 %1813, %v1776
    %v1815 = vpop.permute.xlu0 %1814
    %1818 = vset.pattern.permute.xlu0 0
    %1819 = vperm.xlu0 %1818, %v1777
    %v1820 = vpop.permute.xlu0 %1819
    %1823 = vset.pattern.permute.xlu0 0
    %1824 = vperm.xlu0 %1823, %v1778
    %v1825 = vpop.permute.xlu0 %1824
    %1828 = vset.pattern.permute.xlu0 0
    %1829 = vperm.xlu0 %1828, %v1779
    %v1830 = vpop.permute.xlu0 %1829
    %1833 = vset.pattern.permute.xlu0 0
    %1834 = vperm.xlu0 %1833, %v1780
    %v1835 = vpop.permute.xlu0 %1834
    %1838 = vset.pattern.permute.xlu0 0
    %1839 = vperm.xlu0 %1838, %v1781
    %v1840 = vpop.permute.xlu0 %1839
    %1843 = vset.pattern.permute.xlu0 0
    %1844 = vperm.xlu0 %1843, %v1782
    %v1845 = vpop.permute.xlu0 %1844
    %1848 = vset.pattern.permute.xlu0 0
    %1849 = vperm.xlu0 %1848, %v1783
    %v1850 = vpop.permute.xlu0 %1849
    %1853 = vset.pattern.permute.xlu0 0
    %1854 = vperm.xlu0 %1853, %v1784
    %v1855 = vpop.permute.xlu0 %1854
    %1858 = vset.pattern.permute.xlu0 0
    %1859 = vperm.xlu0 %1858, %v1785
    %v1860 = vpop.permute.xlu0 %1859
    %1863 = vset.pattern.permute.xlu0 0
    %1864 = vperm.xlu0 %1863, %v1786
    %v1865 = vpop.permute.xlu0 %1864
    %v1867 = vsub.f32 %v1709, %v1790
    %v1868 = vsub.f32 %v1712, %v1795
    %v1869 = vsub.f32 %v1717, %v1800
    %v1870 = vsub.f32 %v1720, %v1805
    %v1871 = vsub.f32 %v1725, %v1810
    %v1872 = vsub.f32 %v1728, %v1815
    %v1873 = vsub.f32 %v1733, %v1820
    %v1874 = vsub.f32 %v1736, %v1825
    %v1875 = vsub.f32 %v1741, %v1830
    %v1876 = vsub.f32 %v1744, %v1835
    %v1877 = vsub.f32 %v1749, %v1840
    %v1878 = vsub.f32 %v1752, %v1845
    %v1879 = vsub.f32 %v1757, %v1850
    %v1880 = vsub.f32 %v1760, %v1855
    %v1881 = vsub.f32 %v1765, %v1860
    %v1882 = vsub.f32 %v1768, %v1865
    %v1883 = vmax.f32 %v1867, %v1871
    %v1884 = vmax.f32 %v1868, %v1872
    %v1885 = vmax.f32 %v1869, %v1873
    %v1886 = vmax.f32 %v1870, %v1874
    %v1887 = vmax.f32 %v1883, %v1875
    %v1888 = vmax.f32 %v1884, %v1876
    %v1889 = vmax.f32 %v1885, %v1877
    %v1890 = vmax.f32 %v1886, %v1878
    %v1891 = vmax.f32 %v1887, %v1879
    %v1892 = vmax.f32 %v1888, %v1880
    %v1893 = vmax.f32 %v1889, %v1881
    %v1894 = vmax.f32 %v1890, %v1882
    %v1895 = vmax.f32 %v1891, %v1892
    %v1896 = vmax.f32 %v1893, %v1894
    %v1897 = vmax.f32 %v1895, %v1896
    %v1898 = vrot.slane %v1897, 4
    %v1899 = vmax.f32 %v1897, %v1898
    %v1900 = vrot.slane %v1899, 2
    %v1901 = vmax.f32 %v1899, %v1900
    %v1902 = vrot.slane %v1901, 1
    %v1903 = vmax.f32 %v1901, %v1902
    %vm1904 = vcmp.ge.f32.partialorder %v1867, %v1903
    %vm1905 = vcmp.ge.f32.partialorder %v1868, %v1903
    %vm1906 = vcmp.ge.f32.partialorder %v1869, %v1903
    %vm1907 = vcmp.ge.f32.partialorder %v1870, %v1903
    %vm1908 = vcmp.ge.f32.partialorder %v1871, %v1903
    %vm1909 = vcmp.ge.f32.partialorder %v1872, %v1903
    %vm1910 = vcmp.ge.f32.partialorder %v1873, %v1903
    %vm1911 = vcmp.ge.f32.partialorder %v1874, %v1903
    %vm1912 = vcmp.ge.f32.partialorder %v1875, %v1903
    %vm1913 = vcmp.ge.f32.partialorder %v1876, %v1903
    %vm1914 = vcmp.ge.f32.partialorder %v1877, %v1903
    %vm1915 = vcmp.ge.f32.partialorder %v1878, %v1903
    %vm1916 = vcmp.ge.f32.partialorder %v1879, %v1903
    %vm1917 = vcmp.ge.f32.partialorder %v1880, %v1903
    %vm1918 = vcmp.ge.f32.partialorder %v1881, %v1903
    %vm1919 = vcmp.ge.f32.partialorder %v1882, %v1903
    %v1920 = vsel %vm1904, %v808, 128
    %v1921 = vsel %vm1905, %v809, 128
    %v1922 = vsel %vm1906, %v810, 128
    %v1923 = vsel %vm1907, %v811, 128
    %v1924 = vsel %vm1908, %v812, 128
    %v1925 = vsel %vm1909, %v813, 128
    %v1926 = vsel %vm1910, %v814, 128
    %v1927 = vsel %vm1911, %v815, 128
    %v1928 = vsel %vm1912, %v816, 128
    %v1929 = vsel %vm1913, %v817, 128
    %v1930 = vsel %vm1914, %v818, 128
    %v1931 = vsel %vm1915, %v819, 128
    %v1932 = vsel %vm1916, %v820, 128
    %v1933 = vsel %vm1917, %v821, 128
    %v1934 = vsel %vm1918, %v822, 128
    %v1935 = vsel %vm1919, %v823, 128
    %vm1936 = vcmp.lt.s32.totalorder %v1920, %v1924
    %v1937 = vsel %vm1936, %v1920, %v1924
    %vm1938 = vcmp.lt.s32.totalorder %v1921, %v1925
    %v1939 = vsel %vm1938, %v1921, %v1925
    %vm1940 = vcmp.lt.s32.totalorder %v1922, %v1926
    %v1941 = vsel %vm1940, %v1922, %v1926
    %vm1942 = vcmp.lt.s32.totalorder %v1923, %v1927
    %v1943 = vsel %vm1942, %v1923, %v1927
    %vm1944 = vcmp.lt.s32.totalorder %v1937, %v1928
    %v1945 = vsel %vm1944, %v1937, %v1928
    %vm1946 = vcmp.lt.s32.totalorder %v1939, %v1929
    %v1947 = vsel %vm1946, %v1939, %v1929
    %vm1948 = vcmp.lt.s32.totalorder %v1941, %v1930
    %v1949 = vsel %vm1948, %v1941, %v1930
    %vm1950 = vcmp.lt.s32.totalorder %v1943, %v1931
    %v1951 = vsel %vm1950, %v1943, %v1931
    %vm1952 = vcmp.lt.s32.totalorder %v1945, %v1932
    %v1953 = vsel %vm1952, %v1945, %v1932
    %vm1954 = vcmp.lt.s32.totalorder %v1947, %v1933
    %v1955 = vsel %vm1954, %v1947, %v1933
    %vm1956 = vcmp.lt.s32.totalorder %v1949, %v1934
    %v1957 = vsel %vm1956, %v1949, %v1934
    %vm1958 = vcmp.lt.s32.totalorder %v1951, %v1935
    %v1959 = vsel %vm1958, %v1951, %v1935
    %vm1960 = vcmp.lt.s32.totalorder %v1953, %v1955
    %v1961 = vsel %vm1960, %v1953, %v1955
    %vm1962 = vcmp.lt.s32.totalorder %v1957, %v1959
    %v1963 = vsel %vm1962, %v1957, %v1959
    %vm1964 = vcmp.lt.s32.totalorder %v1961, %v1963
    %v1965 = vsel %vm1964, %v1961, %v1963
    %v1966 = vrot.slane %v1965, 4
    %vm1967 = vcmp.lt.s32.totalorder %v1965, %v1966
    %v1968 = vsel %vm1967, %v1965, %v1966
    %v1969 = vrot.slane %v1968, 2
    %vm1970 = vcmp.lt.s32.totalorder %v1968, %v1969
    %v1971 = vsel %vm1970, %v1968, %v1969
    %v1972 = vrot.slane %v1971, 1
    %vm1973 = vcmp.lt.s32.totalorder %v1971, %v1972
    %v1974 = vsel %vm1973, %v1971, %v1972
    %v1975 = vadd.s32 %v1974, 256
    %vm1976 = vcmp.gt.f32.partialorder %v1903, %v1593
    %v1977 = vsel %vm1976, %v1975, %v1592
    %v1978 = vsel %vm1976, %v1903, %v1593
    %v1979 = vld [vmem:[#allocation8 + $0xc0] sm:$0xf]
    %v1980 = vld [vmem:[#allocation8 + $0xc4] sm:$0xf]
    %v1981 = vld [vmem:[#allocation8 + $0xc8] sm:$0xf]
    %v1982 = vld [vmem:[#allocation8 + $0xcc] sm:$0xf]
    %v1983 = vld [vmem:[#allocation8 + $0xd0] sm:$0xf]
    %v1984 = vld [vmem:[#allocation8 + $0xd4] sm:$0xf]
    %v1985 = vld [vmem:[#allocation8 + $0xd8] sm:$0xf]
    %v1986 = vld [vmem:[#allocation8 + $0xdc] sm:$0xf]
    %v1987 = vld [vmem:[#allocation8 + $0xe0] sm:$0xf]
    %v1988 = vld [vmem:[#allocation8 + $0xe4] sm:$0xf]
    %v1989 = vld [vmem:[#allocation8 + $0xe8] sm:$0xf]
    %v1990 = vld [vmem:[#allocation8 + $0xec] sm:$0xf]
    %v1991 = vld [vmem:[#allocation8 + $0xf0] sm:$0xf]
    %v1992 = vld [vmem:[#allocation8 + $0xf4] sm:$0xf]
    %v1993 = vld [vmem:[#allocation8 + $0xf8] sm:$0xf]
    %v1994 = vld [vmem:[#allocation8 + $0xfc] sm:$0xf]
    %v2011 = vunpack.c.l.b16 %v1979
    %v2012 = vunpack.c.l.b16 %v1980
    %v2013 = vunpack.c.l.b16 %v1981
    %v2014 = vunpack.c.l.b16 %v1982
    %v2015 = vunpack.c.l.b16 %v1983
    %v2016 = vunpack.c.l.b16 %v1984
    %v2017 = vunpack.c.l.b16 %v1985
    %v2018 = vunpack.c.l.b16 %v1986
    %v2019 = vunpack.c.l.b16 %v1987
    %v2020 = vunpack.c.l.b16 %v1988
    %v2021 = vunpack.c.l.b16 %v1989
    %v2022 = vunpack.c.l.b16 %v1990
    %v2023 = vunpack.c.l.b16 %v1991
    %v2024 = vunpack.c.l.b16 %v1992
    %v2025 = vunpack.c.l.b16 %v1993
    %v2026 = vunpack.c.l.b16 %v1994
    %v2027 = vpack.c.b16 %v2012, %v2011
    %v2028 = vpack.c.b16 %v2014, %v2013
    %v2029 = vpack.c.b16 %v2016, %v2015
    %v2030 = vpack.c.b16 %v2018, %v2017
    %v2031 = vpack.c.b16 %v2020, %v2019
    %v2032 = vpack.c.b16 %v2022, %v2021
    %v2033 = vpack.c.b16 %v2024, %v2023
    %v2034 = vpack.c.b16 %v2026, %v2025
    %v2036 = vsel %vm880, %v2027, 0
    %v2039 = vsel %vm880, %v2028, 0
    %v2042 = vsel %vm880, %v2029, 0
    %v2045 = vsel %vm880, %v2030, 0
    %v2048 = vsel %vm880, %v2031, 0
    %v2051 = vsel %vm880, %v2032, 0
    %v2054 = vsel %vm880, %v2033, 0
    %v2057 = vsel %vm880, %v2034, 0
    %2059 = vmatprep.subr.bf16.mxu0 0
    %2060 = vmatpush1.bf16.msra.mxu0 %v747
    %2061 = vmatprep.subr.bf16.mxu0 0
    %2062 = vmatpush1.bf16.msra.mxu0 %v748
    %2063 = vmatprep.subr.bf16.mxu0 0
    %2064 = vmatpush1.bf16.msra.mxu0 %v749
    %2065 = vmatprep.subr.bf16.mxu0 0
    %2066 = vmatpush1.bf16.msra.mxu0 %v750
    %2067 = vmatprep.subr.bf16.mxu0 0
    %2068 = vmatpush1.bf16.msra.mxu0 %v751
    %2069 = vmatprep.subr.bf16.mxu0 0
    %2070 = vmatpush1.bf16.msra.mxu0 %v752
    %2071 = vmatprep.subr.bf16.mxu0 0
    %2072 = vmatpush1.bf16.msra.mxu0 0
    %2073 = vmatprep.subr.bf16.mxu0 0
    %2074 = vmatpush1.bf16.msra.mxu0 0
    %2075 = vmatprep.subr.bf16.mxu0 0
    %2076 = vmatpush1.bf16.msra.mxu0 0
    %2077 = vmatprep.subr.bf16.mxu0 0
    %2078 = vmatpush1.bf16.msra.mxu0 0
    %2079 = vmatprep.subr.bf16.mxu0 0
    %2080 = vmatpush1.bf16.msra.mxu0 0
    %2081 = vmatprep.subr.bf16.mxu0 0
    %2082 = vmatpush1.bf16.msra.mxu0 0
    %2083 = vmatprep.subr.bf16.mxu0 0
    %2084 = vmatpush1.bf16.msra.mxu0 0
    %2085 = vmatprep.subr.bf16.mxu0 0
    %2086 = vmatpush1.bf16.msra.mxu0 0
    %2087 = vmatprep.subr.bf16.mxu0 0
    %2088 = vmatpush1.bf16.msra.mxu0 0
    %2089 = vmatprep.subr.bf16.mxu0 0
    %2090 = vmatpush1.bf16.msra.mxu0 0
    %2091 = vmatprep.mubr.bf16.mxu0 0
    %2092 = vmatmul.mubr.bf16.gmra.mrb[0].mxu0 %v2036
    %v2093 = vpop.f32.mrb[0].mxu0
    %v2094 = vadd.f32 0.0, %v2093
    %v2095 = vpop.f32.mrb[0].mxu0
    %v2096 = vpop.f32.mrb[0].mxu0
    %v2097 = vadd.f32 0.0, %v2096
    %v2098 = vpop.f32.mrb[0].mxu0
    %2099 = vmatprep.mubr.bf16.mxu0 0
    %2100 = vmatmul.mubr.bf16.gmra.mrb[0].mxu0 %v2039
    %v2101 = vpop.f32.mrb[0].mxu0
    %v2102 = vadd.f32 0.0, %v2101
    %v2103 = vpop.f32.mrb[0].mxu0
    %v2104 = vpop.f32.mrb[0].mxu0
    %v2105 = vadd.f32 0.0, %v2104
    %v2106 = vpop.f32.mrb[0].mxu0
    %2107 = vmatprep.mubr.bf16.mxu0 0
    %2108 = vmatmul.mubr.bf16.gmra.mrb[0].mxu0 %v2042
    %v2109 = vpop.f32.mrb[0].mxu0
    %v2110 = vadd.f32 0.0, %v2109
    %v2111 = vpop.f32.mrb[0].mxu0
    %v2112 = vpop.f32.mrb[0].mxu0
    %v2113 = vadd.f32 0.0, %v2112
    %v2114 = vpop.f32.mrb[0].mxu0
    %2115 = vmatprep.mubr.bf16.mxu0 0
    %2116 = vmatmul.mubr.bf16.gmra.mrb[0].mxu0 %v2045
    %v2117 = vpop.f32.mrb[0].mxu0
    %v2118 = vadd.f32 0.0, %v2117
    %v2119 = vpop.f32.mrb[0].mxu0
    %v2120 = vpop.f32.mrb[0].mxu0
    %v2121 = vadd.f32 0.0, %v2120
    %v2122 = vpop.f32.mrb[0].mxu0
    %2123 = vmatprep.mubr.bf16.mxu0 0
    %2124 = vmatmul.mubr.bf16.gmra.mrb[0].mxu0 %v2048
    %v2125 = vpop.f32.mrb[0].mxu0
    %v2126 = vadd.f32 0.0, %v2125
    %v2127 = vpop.f32.mrb[0].mxu0
    %v2128 = vpop.f32.mrb[0].mxu0
    %v2129 = vadd.f32 0.0, %v2128
    %v2130 = vpop.f32.mrb[0].mxu0
    %2131 = vmatprep.mubr.bf16.mxu0 0
    %2132 = vmatmul.mubr.bf16.gmra.mrb[0].mxu0 %v2051
    %v2133 = vpop.f32.mrb[0].mxu0
    %v2134 = vadd.f32 0.0, %v2133
    %v2135 = vpop.f32.mrb[0].mxu0
    %v2136 = vpop.f32.mrb[0].mxu0
    %v2137 = vadd.f32 0.0, %v2136
    %v2138 = vpop.f32.mrb[0].mxu0
    %2139 = vmatprep.mubr.bf16.mxu0 0
    %2140 = vmatmul.mubr.bf16.gmra.mrb[0].mxu0 %v2054
    %v2141 = vpop.f32.mrb[0].mxu0
    %v2142 = vadd.f32 0.0, %v2141
    %v2143 = vpop.f32.mrb[0].mxu0
    %v2144 = vpop.f32.mrb[0].mxu0
    %v2145 = vadd.f32 0.0, %v2144
    %v2146 = vpop.f32.mrb[0].mxu0
    %2147 = vmatprep.mubr.bf16.mxu0 0
    %2148 = vmatmul.mubr.bf16.gmra.mrb[0].mxu0 %v2057
    %v2149 = vpop.f32.mrb[0].mxu0
    %v2150 = vadd.f32 0.0, %v2149
    %v2151 = vpop.f32.mrb[0].mxu0
    %v2152 = vpop.f32.mrb[0].mxu0
    %v2153 = vadd.f32 0.0, %v2152
    %v2154 = vpop.f32.mrb[0].mxu0
    %2155 = vdwg.mxu0
    %v2156 = vld [vmem:[#allocation10 + $0x180] sm:$0xff]
    %v2157 = vld [vmem:[#allocation10 + $0x188] sm:$0xff]
    %v2158 = vld [vmem:[#allocation10 + $0x190] sm:$0xff]
    %v2159 = vld [vmem:[#allocation10 + $0x198] sm:$0xff]
    %v2160 = vld [vmem:[#allocation10 + $0x1a0] sm:$0xff]
    %v2161 = vld [vmem:[#allocation10 + $0x1a8] sm:$0xff]
    %v2162 = vld [vmem:[#allocation10 + $0x1b0] sm:$0xff]
    %v2163 = vld [vmem:[#allocation10 + $0x1b8] sm:$0xff]
    %v2164 = vld [vmem:[#allocation10 + $0x1c0] sm:$0xff]
    %v2165 = vld [vmem:[#allocation10 + $0x1c8] sm:$0xff]
    %v2166 = vld [vmem:[#allocation10 + $0x1d0] sm:$0xff]
    %v2167 = vld [vmem:[#allocation10 + $0x1d8] sm:$0xff]
    %v2168 = vld [vmem:[#allocation10 + $0x1e0] sm:$0xff]
    %v2169 = vld [vmem:[#allocation10 + $0x1e8] sm:$0xff]
    %v2170 = vld [vmem:[#allocation10 + $0x1f0] sm:$0xff]
    %v2171 = vld [vmem:[#allocation10 + $0x1f8] sm:$0xff]
    %2173 = vset.pattern.permute.xlu0 0
    %2174 = vperm.xlu0 %2173, %v2156
    %v2175 = vpop.permute.xlu0 %2174
    %2178 = vset.pattern.permute.xlu0 0
    %2179 = vperm.xlu0 %2178, %v2157
    %v2180 = vpop.permute.xlu0 %2179
    %2183 = vset.pattern.permute.xlu0 0
    %2184 = vperm.xlu0 %2183, %v2158
    %v2185 = vpop.permute.xlu0 %2184
    %2188 = vset.pattern.permute.xlu0 0
    %2189 = vperm.xlu0 %2188, %v2159
    %v2190 = vpop.permute.xlu0 %2189
    %2193 = vset.pattern.permute.xlu0 0
    %2194 = vperm.xlu0 %2193, %v2160
    %v2195 = vpop.permute.xlu0 %2194
    %2198 = vset.pattern.permute.xlu0 0
    %2199 = vperm.xlu0 %2198, %v2161
    %v2200 = vpop.permute.xlu0 %2199
    %2203 = vset.pattern.permute.xlu0 0
    %2204 = vperm.xlu0 %2203, %v2162
    %v2205 = vpop.permute.xlu0 %2204
    %2208 = vset.pattern.permute.xlu0 0
    %2209 = vperm.xlu0 %2208, %v2163
    %v2210 = vpop.permute.xlu0 %2209
    %2213 = vset.pattern.permute.xlu0 0
    %2214 = vperm.xlu0 %2213, %v2164
    %v2215 = vpop.permute.xlu0 %2214
    %2218 = vset.pattern.permute.xlu0 0
    %2219 = vperm.xlu0 %2218, %v2165
    %v2220 = vpop.permute.xlu0 %2219
    %2223 = vset.pattern.permute.xlu0 0
    %2224 = vperm.xlu0 %2223, %v2166
    %v2225 = vpop.permute.xlu0 %2224
    %2228 = vset.pattern.permute.xlu0 0
    %2229 = vperm.xlu0 %2228, %v2167
    %v2230 = vpop.permute.xlu0 %2229
    %2233 = vset.pattern.permute.xlu0 0
    %2234 = vperm.xlu0 %2233, %v2168
    %v2235 = vpop.permute.xlu0 %2234
    %2238 = vset.pattern.permute.xlu0 0
    %2239 = vperm.xlu0 %2238, %v2169
    %v2240 = vpop.permute.xlu0 %2239
    %2243 = vset.pattern.permute.xlu0 0
    %2244 = vperm.xlu0 %2243, %v2170
    %v2245 = vpop.permute.xlu0 %2244
    %2248 = vset.pattern.permute.xlu0 0
    %2249 = vperm.xlu0 %2248, %v2171
    %v2250 = vpop.permute.xlu0 %2249
    %v2252 = vsub.f32 %v2094, %v2175
    %v2253 = vsub.f32 %v2097, %v2180
    %v2254 = vsub.f32 %v2102, %v2185
    %v2255 = vsub.f32 %v2105, %v2190
    %v2256 = vsub.f32 %v2110, %v2195
    %v2257 = vsub.f32 %v2113, %v2200
    %v2258 = vsub.f32 %v2118, %v2205
    %v2259 = vsub.f32 %v2121, %v2210
    %v2260 = vsub.f32 %v2126, %v2215
    %v2261 = vsub.f32 %v2129, %v2220
    %v2262 = vsub.f32 %v2134, %v2225
    %v2263 = vsub.f32 %v2137, %v2230
    %v2264 = vsub.f32 %v2142, %v2235
    %v2265 = vsub.f32 %v2145, %v2240
    %v2266 = vsub.f32 %v2150, %v2245
    %v2267 = vsub.f32 %v2153, %v2250
    %v2268 = vmax.f32 %v2252, %v2256
    %v2269 = vmax.f32 %v2253, %v2257
    %v2270 = vmax.f32 %v2254, %v2258
    %v2271 = vmax.f32 %v2255, %v2259
    %v2272 = vmax.f32 %v2268, %v2260
    %v2273 = vmax.f32 %v2269, %v2261
    %v2274 = vmax.f32 %v2270, %v2262
    %v2275 = vmax.f32 %v2271, %v2263
    %v2276 = vmax.f32 %v2272, %v2264
    %v2277 = vmax.f32 %v2273, %v2265
    %v2278 = vmax.f32 %v2274, %v2266
    %v2279 = vmax.f32 %v2275, %v2267
    %v2280 = vmax.f32 %v2276, %v2277
    %v2281 = vmax.f32 %v2278, %v2279
    %v2282 = vmax.f32 %v2280, %v2281
    %v2283 = vrot.slane %v2282, 4
    %v2284 = vmax.f32 %v2282, %v2283
    %v2285 = vrot.slane %v2284, 2
    %v2286 = vmax.f32 %v2284, %v2285
    %v2287 = vrot.slane %v2286, 1
    %v2288 = vmax.f32 %v2286, %v2287
    %vm2289 = vcmp.ge.f32.partialorder %v2252, %v2288
    %vm2290 = vcmp.ge.f32.partialorder %v2253, %v2288
    %vm2291 = vcmp.ge.f32.partialorder %v2254, %v2288
    %vm2292 = vcmp.ge.f32.partialorder %v2255, %v2288
    %vm2293 = vcmp.ge.f32.partialorder %v2256, %v2288
    %vm2294 = vcmp.ge.f32.partialorder %v2257, %v2288
    %vm2295 = vcmp.ge.f32.partialorder %v2258, %v2288
    %vm2296 = vcmp.ge.f32.partialorder %v2259, %v2288
    %vm2297 = vcmp.ge.f32.partialorder %v2260, %v2288
    %vm2298 = vcmp.ge.f32.partialorder %v2261, %v2288
    %vm2299 = vcmp.ge.f32.partialorder %v2262, %v2288
    %vm2300 = vcmp.ge.f32.partialorder %v2263, %v2288
    %vm2301 = vcmp.ge.f32.partialorder %v2264, %v2288
    %vm2302 = vcmp.ge.f32.partialorder %v2265, %v2288
    %vm2303 = vcmp.ge.f32.partialorder %v2266, %v2288
    %vm2304 = vcmp.ge.f32.partialorder %v2267, %v2288
    %v2305 = vsel %vm2289, %v808, 128
    %v2306 = vsel %vm2290, %v809, 128
    %v2307 = vsel %vm2291, %v810, 128
    %v2308 = vsel %vm2292, %v811, 128
    %v2309 = vsel %vm2293, %v812, 128
    %v2310 = vsel %vm2294, %v813, 128
    %v2311 = vsel %vm2295, %v814, 128
    %v2312 = vsel %vm2296, %v815, 128
    %v2313 = vsel %vm2297, %v816, 128
    %v2314 = vsel %vm2298, %v817, 128
    %v2315 = vsel %vm2299, %v818, 128
    %v2316 = vsel %vm2300, %v819, 128
    %v2317 = vsel %vm2301, %v820, 128
    %v2318 = vsel %vm2302, %v821, 128
    %v2319 = vsel %vm2303, %v822, 128
    %v2320 = vsel %vm2304, %v823, 128
    %vm2321 = vcmp.lt.s32.totalorder %v2305, %v2309
    %v2322 = vsel %vm2321, %v2305, %v2309
    %vm2323 = vcmp.lt.s32.totalorder %v2306, %v2310
    %v2324 = vsel %vm2323, %v2306, %v2310
    %vm2325 = vcmp.lt.s32.totalorder %v2307, %v2311
    %v2326 = vsel %vm2325, %v2307, %v2311
    %vm2327 = vcmp.lt.s32.totalorder %v2308, %v2312
    %v2328 = vsel %vm2327, %v2308, %v2312
    %vm2329 = vcmp.lt.s32.totalorder %v2322, %v2313
    %v2330 = vsel %vm2329, %v2322, %v2313
    %vm2331 = vcmp.lt.s32.totalorder %v2324, %v2314
    %v2332 = vsel %vm2331, %v2324, %v2314
    %vm2333 = vcmp.lt.s32.totalorder %v2326, %v2315
    %v2334 = vsel %vm2333, %v2326, %v2315
    %vm2335 = vcmp.lt.s32.totalorder %v2328, %v2316
    %v2336 = vsel %vm2335, %v2328, %v2316
    %vm2337 = vcmp.lt.s32.totalorder %v2330, %v2317
    %v2338 = vsel %vm2337, %v2330, %v2317
    %vm2339 = vcmp.lt.s32.totalorder %v2332, %v2318
    %v2340 = vsel %vm2339, %v2332, %v2318
    %vm2341 = vcmp.lt.s32.totalorder %v2334, %v2319
    %v2342 = vsel %vm2341, %v2334, %v2319
    %vm2343 = vcmp.lt.s32.totalorder %v2336, %v2320
    %v2344 = vsel %vm2343, %v2336, %v2320
    %vm2345 = vcmp.lt.s32.totalorder %v2338, %v2340
    %v2346 = vsel %vm2345, %v2338, %v2340
    %vm2347 = vcmp.lt.s32.totalorder %v2342, %v2344
    %v2348 = vsel %vm2347, %v2342, %v2344
    %vm2349 = vcmp.lt.s32.totalorder %v2346, %v2348
    %v2350 = vsel %vm2349, %v2346, %v2348
    %v2351 = vrot.slane %v2350, 4
    %vm2352 = vcmp.lt.s32.totalorder %v2350, %v2351
    %v2353 = vsel %vm2352, %v2350, %v2351
    %v2354 = vrot.slane %v2353, 2
    %vm2355 = vcmp.lt.s32.totalorder %v2353, %v2354
    %v2356 = vsel %vm2355, %v2353, %v2354
    %v2357 = vrot.slane %v2356, 1
    %vm2358 = vcmp.lt.s32.totalorder %v2356, %v2357
    %v2359 = vsel %vm2358, %v2356, %v2357
    %v2360 = vadd.s32 %v2359, 384
    %vm2361 = vcmp.gt.f32.partialorder %v2288, %v1978
    %v2362 = vsel %vm2361, %v2360, %v1977
    %v2363 = vsel %vm2361, %v2288, %v1978
    %v2364 = vld [vmem:[#allocation8 + $0x100] sm:$0xf]
    %v2365 = vld [vmem:[#allocation8 + $0x104] sm:$0xf]
    %v2366 = vld [vmem:[#allocation8 + $0x108] sm:$0xf]
    %v2367 = vld [vmem:[#allocation8 + $0x10c] sm:$0xf]
    %v2368 = vld [vmem:[#allocation8 + $0x110] sm:$0xf]
    %v2369 = vld [vmem:[#allocation8 + $0x114] sm:$0xf]
    %v2370 = vld [vmem:[#allocation8 + $0x118] sm:$0xf]
    %v2371 = vld [vmem:[#allocation8 + $0x11c] sm:$0xf]
    %v2372 = vld [vmem:[#allocation8 + $0x120] sm:$0xf]
    %v2373 = vld [vmem:[#allocation8 + $0x124] sm:$0xf]
    %v2374 = vld [vmem:[#allocation8 + $0x128] sm:$0xf]
    %v2375 = vld [vmem:[#allocation8 + $0x12c] sm:$0xf]
    %v2376 = vld [vmem:[#allocation8 + $0x130] sm:$0xf]
    %v2377 = vld [vmem:[#allocation8 + $0x134] sm:$0xf]
    %v2378 = vld [vmem:[#allocation8 + $0x138] sm:$0xf]
    %v2379 = vld [vmem:[#allocation8 + $0x13c] sm:$0xf]
    %v2396 = vunpack.c.l.b16 %v2364
    %v2397 = vunpack.c.l.b16 %v2365
    %v2398 = vunpack.c.l.b16 %v2366
    %v2399 = vunpack.c.l.b16 %v2367
    %v2400 = vunpack.c.l.b16 %v2368
    %v2401 = vunpack.c.l.b16 %v2369
    %v2402 = vunpack.c.l.b16 %v2370
    %v2403 = vunpack.c.l.b16 %v2371
    %v2404 = vunpack.c.l.b16 %v2372
    %v2405 = vunpack.c.l.b16 %v2373
    %v2406 = vunpack.c.l.b16 %v2374
    %v2407 = vunpack.c.l.b16 %v2375
    %v2408 = vunpack.c.l.b16 %v2376
    %v2409 = vunpack.c.l.b16 %v2377
    %v2410 = vunpack.c.l.b16 %v2378
    %v2411 = vunpack.c.l.b16 %v2379
    %v2412 = vpack.c.b16 %v2397, %v2396
    %v2413 = vpack.c.b16 %v2399, %v2398
    %v2414 = vpack.c.b16 %v2401, %v2400
    %v2415 = vpack.c.b16 %v2403, %v2402
    %v2416 = vpack.c.b16 %v2405, %v2404
    %v2417 = vpack.c.b16 %v2407, %v2406
    %v2418 = vpack.c.b16 %v2409, %v2408
    %v2419 = vpack.c.b16 %v2411, %v2410
    %v2421 = vsel %vm880, %v2412, 0
    %v2424 = vsel %vm880, %v2413, 0
    %v2427 = vsel %vm880, %v2414, 0
    %v2430 = vsel %vm880, %v2415, 0
    %v2433 = vsel %vm880, %v2416, 0
    %v2436 = vsel %vm880, %v2417, 0
    %v2439 = vsel %vm880, %v2418, 0
    %v2442 = vsel %vm880, %v2419, 0
    %2444 = vmatprep.subr.bf16.mxu0 0
    %2445 = vmatpush1.bf16.msra.mxu0 %v747
    %2446 = vmatprep.subr.bf16.mxu0 0
    %2447 = vmatpush1.bf16.msra.mxu0 %v748
    %2448 = vmatprep.subr.bf16.mxu0 0
    %2449 = vmatpush1.bf16.msra.mxu0 %v749
    %2450 = vmatprep.subr.bf16.mxu0 0
    %2451 = vmatpush1.bf16.msra.mxu0 %v750
    %2452 = vmatprep.subr.bf16.mxu0 0
    %2453 = vmatpush1.bf16.msra.mxu0 %v751
    %2454 = vmatprep.subr.bf16.mxu0 0
    %2455 = vmatpush1.bf16.msra.mxu0 %v752
    %2456 = vmatprep.subr.bf16.mxu0 0
    %2457 = vmatpush1.bf16.msra.mxu0 0
    %2458 = vmatprep.subr.bf16.mxu0 0
    %2459 = vmatpush1.bf16.msra.mxu0 0
    %2460 = vmatprep.subr.bf16.mxu0 0
    %2461 = vmatpush1.bf16.msra.mxu0 0
    %2462 = vmatprep.subr.bf16.mxu0 0
    %2463 = vmatpush1.bf16.msra.mxu0 0
    %2464 = vmatprep.subr.bf16.mxu0 0
    %2465 = vmatpush1.bf16.msra.mxu0 0
    %2466 = vmatprep.subr.bf16.mxu0 0
    %2467 = vmatpush1.bf16.msra.mxu0 0
    %2468 = vmatprep.subr.bf16.mxu0 0
    %2469 = vmatpush1.bf16.msra.mxu0 0
    %2470 = vmatprep.subr.bf16.mxu0 0
    %2471 = vmatpush1.bf16.msra.mxu0 0
    %2472 = vmatprep.subr.bf16.mxu0 0
    %2473 = vmatpush1.bf16.msra.mxu0 0
    %2474 = vmatprep.subr.bf16.mxu0 0
    %2475 = vmatpush1.bf16.msra.mxu0 0
    %2476 = vmatprep.mubr.bf16.mxu0 0
    %2477 = vmatmul.mubr.bf16.gmra.mrb[0].mxu0 %v2421
    %v2478 = vpop.f32.mrb[0].mxu0
    %v2479 = vadd.f32 0.0, %v2478
    %v2480 = vpop.f32.mrb[0].mxu0
    %v2481 = vpop.f32.mrb[0].mxu0
    %v2482 = vadd.f32 0.0, %v2481
    %v2483 = vpop.f32.mrb[0].mxu0
    %2484 = vmatprep.mubr.bf16.mxu0 0
    %2485 = vmatmul.mubr.bf16.gmra.mrb[0].mxu0 %v2424
    %v2486 = vpop.f32.mrb[0].mxu0
    %v2487 = vadd.f32 0.0, %v2486
    %v2488 = vpop.f32.mrb[0].mxu0
    %v2489 = vpop.f32.mrb[0].mxu0
    %v2490 = vadd.f32 0.0, %v2489
    %v2491 = vpop.f32.mrb[0].mxu0
    %2492 = vmatprep.mubr.bf16.mxu0 0
    %2493 = vmatmul.mubr.bf16.gmra.mrb[0].mxu0 %v2427
    %v2494 = vpop.f32.mrb[0].mxu0
    %v2495 = vadd.f32 0.0, %v2494
    %v2496 = vpop.f32.mrb[0].mxu0
    %v2497 = vpop.f32.mrb[0].mxu0
    %v2498 = vadd.f32 0.0, %v2497
    %v2499 = vpop.f32.mrb[0].mxu0
    %2500 = vmatprep.mubr.bf16.mxu0 0
    %2501 = vmatmul.mubr.bf16.gmra.mrb[0].mxu0 %v2430
    %v2502 = vpop.f32.mrb[0].mxu0
    %v2503 = vadd.f32 0.0, %v2502
    %v2504 = vpop.f32.mrb[0].mxu0
    %v2505 = vpop.f32.mrb[0].mxu0
    %v2506 = vadd.f32 0.0, %v2505
    %v2507 = vpop.f32.mrb[0].mxu0
    %2508 = vmatprep.mubr.bf16.mxu0 0
    %2509 = vmatmul.mubr.bf16.gmra.mrb[0].mxu0 %v2433
    %v2510 = vpop.f32.mrb[0].mxu0
    %v2511 = vadd.f32 0.0, %v2510
    %v2512 = vpop.f32.mrb[0].mxu0
    %v2513 = vpop.f32.mrb[0].mxu0
    %v2514 = vadd.f32 0.0, %v2513
    %v2515 = vpop.f32.mrb[0].mxu0
    %2516 = vmatprep.mubr.bf16.mxu0 0
    %2517 = vmatmul.mubr.bf16.gmra.mrb[0].mxu0 %v2436
    %v2518 = vpop.f32.mrb[0].mxu0
    %v2519 = vadd.f32 0.0, %v2518
    %v2520 = vpop.f32.mrb[0].mxu0
    %v2521 = vpop.f32.mrb[0].mxu0
    %v2522 = vadd.f32 0.0, %v2521
    %v2523 = vpop.f32.mrb[0].mxu0
    %2524 = vmatprep.mubr.bf16.mxu0 0
    %2525 = vmatmul.mubr.bf16.gmra.mrb[0].mxu0 %v2439
    %v2526 = vpop.f32.mrb[0].mxu0
    %v2527 = vadd.f32 0.0, %v2526
    %v2528 = vpop.f32.mrb[0].mxu0
    %v2529 = vpop.f32.mrb[0].mxu0
    %v2530 = vadd.f32 0.0, %v2529
    %v2531 = vpop.f32.mrb[0].mxu0
    %2532 = vmatprep.mubr.bf16.mxu0 0
    %2533 = vmatmul.mubr.bf16.gmra.mrb[0].mxu0 %v2442
    %v2534 = vpop.f32.mrb[0].mxu0
    %v2535 = vadd.f32 0.0, %v2534
    %v2536 = vpop.f32.mrb[0].mxu0
    %v2537 = vpop.f32.mrb[0].mxu0
    %v2538 = vadd.f32 0.0, %v2537
    %v2539 = vpop.f32.mrb[0].mxu0
    %2540 = vdwg.mxu0
    %v2541 = vld [vmem:[#allocation10 + $0x200] sm:$0xff]
    %v2542 = vld [vmem:[#allocation10 + $0x208] sm:$0xff]
    %v2543 = vld [vmem:[#allocation10 + $0x210] sm:$0xff]
    %v2544 = vld [vmem:[#allocation10 + $0x218] sm:$0xff]
    %v2545 = vld [vmem:[#allocation10 + $0x220] sm:$0xff]
    %v2546 = vld [vmem:[#allocation10 + $0x228] sm:$0xff]
    %v2547 = vld [vmem:[#allocation10 + $0x230] sm:$0xff]
    %v2548 = vld [vmem:[#allocation10 + $0x238] sm:$0xff]
    %v2549 = vld [vmem:[#allocation10 + $0x240] sm:$0xff]
    %v2550 = vld [vmem:[#allocation10 + $0x248] sm:$0xff]
    %v2551 = vld [vmem:[#allocation10 + $0x250] sm:$0xff]
    %v2552 = vld [vmem:[#allocation10 + $0x258] sm:$0xff]
    %v2553 = vld [vmem:[#allocation10 + $0x260] sm:$0xff]
    %v2554 = vld [vmem:[#allocation10 + $0x268] sm:$0xff]
    %v2555 = vld [vmem:[#allocation10 + $0x270] sm:$0xff]
    %v2556 = vld [vmem:[#allocation10 + $0x278] sm:$0xff]
    %2558 = vset.pattern.permute.xlu0 0
    %2559 = vperm.xlu0 %2558, %v2541
    %v2560 = vpop.permute.xlu0 %2559
    %2563 = vset.pattern.permute.xlu0 0
    %2564 = vperm.xlu0 %2563, %v2542
    %v2565 = vpop.permute.xlu0 %2564
    %2568 = vset.pattern.permute.xlu0 0
    %2569 = vperm.xlu0 %2568, %v2543
    %v2570 = vpop.permute.xlu0 %2569
    %2573 = vset.pattern.permute.xlu0 0
    %2574 = vperm.xlu0 %2573, %v2544
    %v2575 = vpop.permute.xlu0 %2574
    %2578 = vset.pattern.permute.xlu0 0
    %2579 = vperm.xlu0 %2578, %v2545
    %v2580 = vpop.permute.xlu0 %2579
    %2583 = vset.pattern.permute.xlu0 0
    %2584 = vperm.xlu0 %2583, %v2546
    %v2585 = vpop.permute.xlu0 %2584
    %2588 = vset.pattern.permute.xlu0 0
    %2589 = vperm.xlu0 %2588, %v2547
    %v2590 = vpop.permute.xlu0 %2589
    %2593 = vset.pattern.permute.xlu0 0
    %2594 = vperm.xlu0 %2593, %v2548
    %v2595 = vpop.permute.xlu0 %2594
    %2598 = vset.pattern.permute.xlu0 0
    %2599 = vperm.xlu0 %2598, %v2549
    %v2600 = vpop.permute.xlu0 %2599
    %2603 = vset.pattern.permute.xlu0 0
    %2604 = vperm.xlu0 %2603, %v2550
    %v2605 = vpop.permute.xlu0 %2604
    %2608 = vset.pattern.permute.xlu0 0
    %2609 = vperm.xlu0 %2608, %v2551
    %v2610 = vpop.permute.xlu0 %2609
    %2613 = vset.pattern.permute.xlu0 0
    %2614 = vperm.xlu0 %2613, %v2552
    %v2615 = vpop.permute.xlu0 %2614
    %2618 = vset.pattern.permute.xlu0 0
    %2619 = vperm.xlu0 %2618, %v2553
    %v2620 = vpop.permute.xlu0 %2619
    %2623 = vset.pattern.permute.xlu0 0
    %2624 = vperm.xlu0 %2623, %v2554
    %v2625 = vpop.permute.xlu0 %2624
    %2628 = vset.pattern.permute.xlu0 0
    %2629 = vperm.xlu0 %2628, %v2555
    %v2630 = vpop.permute.xlu0 %2629
    %2633 = vset.pattern.permute.xlu0 0
    %2634 = vperm.xlu0 %2633, %v2556
    %v2635 = vpop.permute.xlu0 %2634
    %v2637 = vsub.f32 %v2479, %v2560
    %v2638 = vsub.f32 %v2482, %v2565
    %v2639 = vsub.f32 %v2487, %v2570
    %v2640 = vsub.f32 %v2490, %v2575
    %v2641 = vsub.f32 %v2495, %v2580
    %v2642 = vsub.f32 %v2498, %v2585
    %v2643 = vsub.f32 %v2503, %v2590
    %v2644 = vsub.f32 %v2506, %v2595
    %v2645 = vsub.f32 %v2511, %v2600
    %v2646 = vsub.f32 %v2514, %v2605
    %v2647 = vsub.f32 %v2519, %v2610
    %v2648 = vsub.f32 %v2522, %v2615
    %v2649 = vsub.f32 %v2527, %v2620
    %v2650 = vsub.f32 %v2530, %v2625
    %v2651 = vsub.f32 %v2535, %v2630
    %v2652 = vsub.f32 %v2538, %v2635
    %v2653 = vmax.f32 %v2637, %v2641
    %v2654 = vmax.f32 %v2638, %v2642
    %v2655 = vmax.f32 %v2639, %v2643
    %v2656 = vmax.f32 %v2640, %v2644
    %v2657 = vmax.f32 %v2653, %v2645
    %v2658 = vmax.f32 %v2654, %v2646
    %v2659 = vmax.f32 %v2655, %v2647
    %v2660 = vmax.f32 %v2656, %v2648
    %v2661 = vmax.f32 %v2657, %v2649
    %v2662 = vmax.f32 %v2658, %v2650
    %v2663 = vmax.f32 %v2659, %v2651
    %v2664 = vmax.f32 %v2660, %v2652
    %v2665 = vmax.f32 %v2661, %v2662
    %v2666 = vmax.f32 %v2663, %v2664
    %v2667 = vmax.f32 %v2665, %v2666
    %v2668 = vrot.slane %v2667, 4
    %v2669 = vmax.f32 %v2667, %v2668
    %v2670 = vrot.slane %v2669, 2
    %v2671 = vmax.f32 %v2669, %v2670
    %v2672 = vrot.slane %v2671, 1
    %v2673 = vmax.f32 %v2671, %v2672
    %vm2674 = vcmp.ge.f32.partialorder %v2637, %v2673
    %vm2675 = vcmp.ge.f32.partialorder %v2638, %v2673
    %vm2676 = vcmp.ge.f32.partialorder %v2639, %v2673
    %vm2677 = vcmp.ge.f32.partialorder %v2640, %v2673
    %vm2678 = vcmp.ge.f32.partialorder %v2641, %v2673
    %vm2679 = vcmp.ge.f32.partialorder %v2642, %v2673
    %vm2680 = vcmp.ge.f32.partialorder %v2643, %v2673
    %vm2681 = vcmp.ge.f32.partialorder %v2644, %v2673
    %vm2682 = vcmp.ge.f32.partialorder %v2645, %v2673
    %vm2683 = vcmp.ge.f32.partialorder %v2646, %v2673
    %vm2684 = vcmp.ge.f32.partialorder %v2647, %v2673
    %vm2685 = vcmp.ge.f32.partialorder %v2648, %v2673
    %vm2686 = vcmp.ge.f32.partialorder %v2649, %v2673
    %vm2687 = vcmp.ge.f32.partialorder %v2650, %v2673
    %vm2688 = vcmp.ge.f32.partialorder %v2651, %v2673
    %vm2689 = vcmp.ge.f32.partialorder %v2652, %v2673
    %v2690 = vsel %vm2674, %v808, 128
    %v2691 = vsel %vm2675, %v809, 128
    %v2692 = vsel %vm2676, %v810, 128
    %v2693 = vsel %vm2677, %v811, 128
    %v2694 = vsel %vm2678, %v812, 128
    %v2695 = vsel %vm2679, %v813, 128
    %v2696 = vsel %vm2680, %v814, 128
    %v2697 = vsel %vm2681, %v815, 128
    %v2698 = vsel %vm2682, %v816, 128
    %v2699 = vsel %vm2683, %v817, 128
    %v2700 = vsel %vm2684, %v818, 128
    %v2701 = vsel %vm2685, %v819, 128
    %v2702 = vsel %vm2686, %v820, 128
    %v2703 = vsel %vm2687, %v821, 128
    %v2704 = vsel %vm2688, %v822, 128
    %v2705 = vsel %vm2689, %v823, 128
    %vm2706 = vcmp.lt.s32.totalorder %v2690, %v2694
    %v2707 = vsel %vm2706, %v2690, %v2694
    %vm2708 = vcmp.lt.s32.totalorder %v2691, %v2695
    %v2709 = vsel %vm2708, %v2691, %v2695
    %vm2710 = vcmp.lt.s32.totalorder %v2692, %v2696
    %v2711 = vsel %vm2710, %v2692, %v2696
    %vm2712 = vcmp.lt.s32.totalorder %v2693, %v2697
    %v2713 = vsel %vm2712, %v2693, %v2697
    %vm2714 = vcmp.lt.s32.totalorder %v2707, %v2698
    %v2715 = vsel %vm2714, %v2707, %v2698
    %vm2716 = vcmp.lt.s32.totalorder %v2709, %v2699
    %v2717 = vsel %vm2716, %v2709, %v2699
    %vm2718 = vcmp.lt.s32.totalorder %v2711, %v2700
    %v2719 = vsel %vm2718, %v2711, %v2700
    %vm2720 = vcmp.lt.s32.totalorder %v2713, %v2701
    %v2721 = vsel %vm2720, %v2713, %v2701
    %vm2722 = vcmp.lt.s32.totalorder %v2715, %v2702
    %v2723 = vsel %vm2722, %v2715, %v2702
    %vm2724 = vcmp.lt.s32.totalorder %v2717, %v2703
    %v2725 = vsel %vm2724, %v2717, %v2703
    %vm2726 = vcmp.lt.s32.totalorder %v2719, %v2704
    %v2727 = vsel %vm2726, %v2719, %v2704
    %vm2728 = vcmp.lt.s32.totalorder %v2721, %v2705
    %v2729 = vsel %vm2728, %v2721, %v2705
    %vm2730 = vcmp.lt.s32.totalorder %v2723, %v2725
    %v2731 = vsel %vm2730, %v2723, %v2725
    %vm2732 = vcmp.lt.s32.totalorder %v2727, %v2729
    %v2733 = vsel %vm2732, %v2727, %v2729
    %vm2734 = vcmp.lt.s32.totalorder %v2731, %v2733
    %v2735 = vsel %vm2734, %v2731, %v2733
    %v2736 = vrot.slane %v2735, 4
    %vm2737 = vcmp.lt.s32.totalorder %v2735, %v2736
    %v2738 = vsel %vm2737, %v2735, %v2736
    %v2739 = vrot.slane %v2738, 2
    %vm2740 = vcmp.lt.s32.totalorder %v2738, %v2739
    %v2741 = vsel %vm2740, %v2738, %v2739
    %v2742 = vrot.slane %v2741, 1
    %vm2743 = vcmp.lt.s32.totalorder %v2741, %v2742
    %v2744 = vsel %vm2743, %v2741, %v2742
    %v2745 = vadd.s32 %v2744, 512
    %vm2746 = vcmp.gt.f32.partialorder %v2673, %v2363
    %v2747 = vsel %vm2746, %v2745, %v2362
    %v2748 = vsel %vm2746, %v2673, %v2363
    %v2749 = vld [vmem:[#allocation8 + $0x140] sm:$0xf]
    %v2750 = vld [vmem:[#allocation8 + $0x144] sm:$0xf]
    %v2751 = vld [vmem:[#allocation8 + $0x148] sm:$0xf]
    %v2752 = vld [vmem:[#allocation8 + $0x14c] sm:$0xf]
    %v2753 = vld [vmem:[#allocation8 + $0x150] sm:$0xf]
    %v2754 = vld [vmem:[#allocation8 + $0x154] sm:$0xf]
    %v2755 = vld [vmem:[#allocation8 + $0x158] sm:$0xf]
    %v2756 = vld [vmem:[#allocation8 + $0x15c] sm:$0xf]
    %v2757 = vld [vmem:[#allocation8 + $0x160] sm:$0xf]
    %v2758 = vld [vmem:[#allocation8 + $0x164] sm:$0xf]
    %v2759 = vld [vmem:[#allocation8 + $0x168] sm:$0xf]
    %v2760 = vld [vmem:[#allocation8 + $0x16c] sm:$0xf]
    %v2761 = vld [vmem:[#allocation8 + $0x170] sm:$0xf]
    %v2762 = vld [vmem:[#allocation8 + $0x174] sm:$0xf]
    %v2763 = vld [vmem:[#allocation8 + $0x178] sm:$0xf]
    %v2764 = vld [vmem:[#allocation8 + $0x17c] sm:$0xf]
    %v2781 = vunpack.c.l.b16 %v2749
    %v2782 = vunpack.c.l.b16 %v2750
    %v2783 = vunpack.c.l.b16 %v2751
    %v2784 = vunpack.c.l.b16 %v2752
    %v2785 = vunpack.c.l.b16 %v2753
    %v2786 = vunpack.c.l.b16 %v2754
    %v2787 = vunpack.c.l.b16 %v2755
    %v2788 = vunpack.c.l.b16 %v2756
    %v2789 = vunpack.c.l.b16 %v2757
    %v2790 = vunpack.c.l.b16 %v2758
    %v2791 = vunpack.c.l.b16 %v2759
    %v2792 = vunpack.c.l.b16 %v2760
    %v2793 = vunpack.c.l.b16 %v2761
    %v2794 = vunpack.c.l.b16 %v2762
    %v2795 = vunpack.c.l.b16 %v2763
    %v2796 = vunpack.c.l.b16 %v2764
    %v2797 = vpack.c.b16 %v2782, %v2781
    %v2798 = vpack.c.b16 %v2784, %v2783
    %v2799 = vpack.c.b16 %v2786, %v2785
    %v2800 = vpack.c.b16 %v2788, %v2787
    %v2801 = vpack.c.b16 %v2790, %v2789
    %v2802 = vpack.c.b16 %v2792, %v2791
    %v2803 = vpack.c.b16 %v2794, %v2793
    %v2804 = vpack.c.b16 %v2796, %v2795
    %v2806 = vsel %vm880, %v2797, 0
    %v2809 = vsel %vm880, %v2798, 0
    %v2812 = vsel %vm880, %v2799, 0
    %v2815 = vsel %vm880, %v2800, 0
    %v2818 = vsel %vm880, %v2801, 0
    %v2821 = vsel %vm880, %v2802, 0
    %v2824 = vsel %vm880, %v2803, 0
    %v2827 = vsel %vm880, %v2804, 0
    %2829 = vmatprep.subr.bf16.mxu0 0
    %2830 = vmatpush1.bf16.msra.mxu0 %v747
    %2831 = vmatprep.subr.bf16.mxu0 0
    %2832 = vmatpush1.bf16.msra.mxu0 %v748
    %2833 = vmatprep.subr.bf16.mxu0 0
    %2834 = vmatpush1.bf16.msra.mxu0 %v749
    %2835 = vmatprep.subr.bf16.mxu0 0
    %2836 = vmatpush1.bf16.msra.mxu0 %v750
    %2837 = vmatprep.subr.bf16.mxu0 0
    %2838 = vmatpush1.bf16.msra.mxu0 %v751
    %2839 = vmatprep.subr.bf16.mxu0 0
    %2840 = vmatpush1.bf16.msra.mxu0 %v752
    %2841 = vmatprep.subr.bf16.mxu0 0
    %2842 = vmatpush1.bf16.msra.mxu0 0
    %2843 = vmatprep.subr.bf16.mxu0 0
    %2844 = vmatpush1.bf16.msra.mxu0 0
    %2845 = vmatprep.subr.bf16.mxu0 0
    %2846 = vmatpush1.bf16.msra.mxu0 0
    %2847 = vmatprep.subr.bf16.mxu0 0
    %2848 = vmatpush1.bf16.msra.mxu0 0
    %2849 = vmatprep.subr.bf16.mxu0 0
    %2850 = vmatpush1.bf16.msra.mxu0 0
    %2851 = vmatprep.subr.bf16.mxu0 0
    %2852 = vmatpush1.bf16.msra.mxu0 0
    %2853 = vmatprep.subr.bf16.mxu0 0
    %2854 = vmatpush1.bf16.msra.mxu0 0
    %2855 = vmatprep.subr.bf16.mxu0 0
    %2856 = vmatpush1.bf16.msra.mxu0 0
    %2857 = vmatprep.subr.bf16.mxu0 0
    %2858 = vmatpush1.bf16.msra.mxu0 0
    %2859 = vmatprep.subr.bf16.mxu0 0
    %2860 = vmatpush1.bf16.msra.mxu0 0
    %2861 = vmatprep.mubr.bf16.mxu0 0
    %2862 = vmatmul.mubr.bf16.gmra.mrb[0].mxu0 %v2806
    %v2863 = vpop.f32.mrb[0].mxu0
    %v2864 = vadd.f32 0.0, %v2863
    %v2865 = vpop.f32.mrb[0].mxu0
    %v2866 = vpop.f32.mrb[0].mxu0
    %v2867 = vadd.f32 0.0, %v2866
    %v2868 = vpop.f32.mrb[0].mxu0
    %2869 = vmatprep.mubr.bf16.mxu0 0
    %2870 = vmatmul.mubr.bf16.gmra.mrb[0].mxu0 %v2809
    %v2871 = vpop.f32.mrb[0].mxu0
    %v2872 = vadd.f32 0.0, %v2871
    %v2873 = vpop.f32.mrb[0].mxu0
    %v2874 = vpop.f32.mrb[0].mxu0
    %v2875 = vadd.f32 0.0, %v2874
    %v2876 = vpop.f32.mrb[0].mxu0
    %2877 = vmatprep.mubr.bf16.mxu0 0
    %2878 = vmatmul.mubr.bf16.gmra.mrb[0].mxu0 %v2812
    %v2879 = vpop.f32.mrb[0].mxu0
    %v2880 = vadd.f32 0.0, %v2879
    %v2881 = vpop.f32.mrb[0].mxu0
    %v2882 = vpop.f32.mrb[0].mxu0
    %v2883 = vadd.f32 0.0, %v2882
    %v2884 = vpop.f32.mrb[0].mxu0
    %2885 = vmatprep.mubr.bf16.mxu0 0
    %2886 = vmatmul.mubr.bf16.gmra.mrb[0].mxu0 %v2815
    %v2887 = vpop.f32.mrb[0].mxu0
    %v2888 = vadd.f32 0.0, %v2887
    %v2889 = vpop.f32.mrb[0].mxu0
    %v2890 = vpop.f32.mrb[0].mxu0
    %v2891 = vadd.f32 0.0, %v2890
    %v2892 = vpop.f32.mrb[0].mxu0
    %2893 = vmatprep.mubr.bf16.mxu0 0
    %2894 = vmatmul.mubr.bf16.gmra.mrb[0].mxu0 %v2818
    %v2895 = vpop.f32.mrb[0].mxu0
    %v2896 = vadd.f32 0.0, %v2895
    %v2897 = vpop.f32.mrb[0].mxu0
    %v2898 = vpop.f32.mrb[0].mxu0
    %v2899 = vadd.f32 0.0, %v2898
    %v2900 = vpop.f32.mrb[0].mxu0
    %2901 = vmatprep.mubr.bf16.mxu0 0
    %2902 = vmatmul.mubr.bf16.gmra.mrb[0].mxu0 %v2821
    %v2903 = vpop.f32.mrb[0].mxu0
    %v2904 = vadd.f32 0.0, %v2903
    %v2905 = vpop.f32.mrb[0].mxu0
    %v2906 = vpop.f32.mrb[0].mxu0
    %v2907 = vadd.f32 0.0, %v2906
    %v2908 = vpop.f32.mrb[0].mxu0
    %2909 = vmatprep.mubr.bf16.mxu0 0
    %2910 = vmatmul.mubr.bf16.gmra.mrb[0].mxu0 %v2824
    %v2911 = vpop.f32.mrb[0].mxu0
    %v2912 = vadd.f32 0.0, %v2911
    %v2913 = vpop.f32.mrb[0].mxu0
    %v2914 = vpop.f32.mrb[0].mxu0
    %v2915 = vadd.f32 0.0, %v2914
    %v2916 = vpop.f32.mrb[0].mxu0
    %2917 = vmatprep.mubr.bf16.mxu0 0
    %2918 = vmatmul.mubr.bf16.gmra.mrb[0].mxu0 %v2827
    %v2919 = vpop.f32.mrb[0].mxu0
    %v2920 = vadd.f32 0.0, %v2919
    %v2921 = vpop.f32.mrb[0].mxu0
    %v2922 = vpop.f32.mrb[0].mxu0
    %v2923 = vadd.f32 0.0, %v2922
    %v2924 = vpop.f32.mrb[0].mxu0
    %2925 = vdwg.mxu0
    %v2926 = vld [vmem:[#allocation10 + $0x280] sm:$0xff]
    %v2927 = vld [vmem:[#allocation10 + $0x288] sm:$0xff]
    %v2928 = vld [vmem:[#allocation10 + $0x290] sm:$0xff]
    %v2929 = vld [vmem:[#allocation10 + $0x298] sm:$0xff]
    %v2930 = vld [vmem:[#allocation10 + $0x2a0] sm:$0xff]
    %v2931 = vld [vmem:[#allocation10 + $0x2a8] sm:$0xff]
    %v2932 = vld [vmem:[#allocation10 + $0x2b0] sm:$0xff]
    %v2933 = vld [vmem:[#allocation10 + $0x2b8] sm:$0xff]
    %v2934 = vld [vmem:[#allocation10 + $0x2c0] sm:$0xff]
    %v2935 = vld [vmem:[#allocation10 + $0x2c8] sm:$0xff]
    %v2936 = vld [vmem:[#allocation10 + $0x2d0] sm:$0xff]
    %v2937 = vld [vmem:[#allocation10 + $0x2d8] sm:$0xff]
    %v2938 = vld [vmem:[#allocation10 + $0x2e0] sm:$0xff]
    %v2939 = vld [vmem:[#allocation10 + $0x2e8] sm:$0xff]
    %v2940 = vld [vmem:[#allocation10 + $0x2f0] sm:$0xff]
    %v2941 = vld [vmem:[#allocation10 + $0x2f8] sm:$0xff]
    %2943 = vset.pattern.permute.xlu0 0
    %2944 = vperm.xlu0 %2943, %v2926
    %v2945 = vpop.permute.xlu0 %2944
    %2948 = vset.pattern.permute.xlu0 0
    %2949 = vperm.xlu0 %2948, %v2927
    %v2950 = vpop.permute.xlu0 %2949
    %2953 = vset.pattern.permute.xlu0 0
    %2954 = vperm.xlu0 %2953, %v2928
    %v2955 = vpop.permute.xlu0 %2954
    %2958 = vset.pattern.permute.xlu0 0
    %2959 = vperm.xlu0 %2958, %v2929
    %v2960 = vpop.permute.xlu0 %2959
    %2963 = vset.pattern.permute.xlu0 0
    %2964 = vperm.xlu0 %2963, %v2930
    %v2965 = vpop.permute.xlu0 %2964
    %2968 = vset.pattern.permute.xlu0 0
    %2969 = vperm.xlu0 %2968, %v2931
    %v2970 = vpop.permute.xlu0 %2969
    %2973 = vset.pattern.permute.xlu0 0
    %2974 = vperm.xlu0 %2973, %v2932
    %v2975 = vpop.permute.xlu0 %2974
    %2978 = vset.pattern.permute.xlu0 0
    %2979 = vperm.xlu0 %2978, %v2933
    %v2980 = vpop.permute.xlu0 %2979
    %2983 = vset.pattern.permute.xlu0 0
    %2984 = vperm.xlu0 %2983, %v2934
    %v2985 = vpop.permute.xlu0 %2984
    %2988 = vset.pattern.permute.xlu0 0
    %2989 = vperm.xlu0 %2988, %v2935
    %v2990 = vpop.permute.xlu0 %2989
    %2993 = vset.pattern.permute.xlu0 0
    %2994 = vperm.xlu0 %2993, %v2936
    %v2995 = vpop.permute.xlu0 %2994
    %2998 = vset.pattern.permute.xlu0 0
    %2999 = vperm.xlu0 %2998, %v2937
    %v3000 = vpop.permute.xlu0 %2999
    %3003 = vset.pattern.permute.xlu0 0
    %3004 = vperm.xlu0 %3003, %v2938
    %v3005 = vpop.permute.xlu0 %3004
    %3008 = vset.pattern.permute.xlu0 0
    %3009 = vperm.xlu0 %3008, %v2939
    %v3010 = vpop.permute.xlu0 %3009
    %3013 = vset.pattern.permute.xlu0 0
    %3014 = vperm.xlu0 %3013, %v2940
    %v3015 = vpop.permute.xlu0 %3014
    %3018 = vset.pattern.permute.xlu0 0
    %3019 = vperm.xlu0 %3018, %v2941
    %v3020 = vpop.permute.xlu0 %3019
    %v3022 = vsub.f32 %v2864, %v2945
    %v3023 = vsub.f32 %v2867, %v2950
    %v3024 = vsub.f32 %v2872, %v2955
    %v3025 = vsub.f32 %v2875, %v2960
    %v3026 = vsub.f32 %v2880, %v2965
    %v3027 = vsub.f32 %v2883, %v2970
    %v3028 = vsub.f32 %v2888, %v2975
    %v3029 = vsub.f32 %v2891, %v2980
    %v3030 = vsub.f32 %v2896, %v2985
    %v3031 = vsub.f32 %v2899, %v2990
    %v3032 = vsub.f32 %v2904, %v2995
    %v3033 = vsub.f32 %v2907, %v3000
    %v3034 = vsub.f32 %v2912, %v3005
    %v3035 = vsub.f32 %v2915, %v3010
    %v3036 = vsub.f32 %v2920, %v3015
    %v3037 = vsub.f32 %v2923, %v3020
    %v3038 = vmax.f32 %v3022, %v3026
    %v3039 = vmax.f32 %v3023, %v3027
    %v3040 = vmax.f32 %v3024, %v3028
    %v3041 = vmax.f32 %v3025, %v3029
    %v3042 = vmax.f32 %v3038, %v3030
    %v3043 = vmax.f32 %v3039, %v3031
    %v3044 = vmax.f32 %v3040, %v3032
    %v3045 = vmax.f32 %v3041, %v3033
    %v3046 = vmax.f32 %v3042, %v3034
    %v3047 = vmax.f32 %v3043, %v3035
    %v3048 = vmax.f32 %v3044, %v3036
    %v3049 = vmax.f32 %v3045, %v3037
    %v3050 = vmax.f32 %v3046, %v3047
    %v3051 = vmax.f32 %v3048, %v3049
    %v3052 = vmax.f32 %v3050, %v3051
    %v3053 = vrot.slane %v3052, 4
    %v3054 = vmax.f32 %v3052, %v3053
    %v3055 = vrot.slane %v3054, 2
    %v3056 = vmax.f32 %v3054, %v3055
    %v3057 = vrot.slane %v3056, 1
    %v3058 = vmax.f32 %v3056, %v3057
    %vm3059 = vcmp.ge.f32.partialorder %v3022, %v3058
    %vm3060 = vcmp.ge.f32.partialorder %v3023, %v3058
    %vm3061 = vcmp.ge.f32.partialorder %v3024, %v3058
    %vm3062 = vcmp.ge.f32.partialorder %v3025, %v3058
    %vm3063 = vcmp.ge.f32.partialorder %v3026, %v3058
    %vm3064 = vcmp.ge.f32.partialorder %v3027, %v3058
    %vm3065 = vcmp.ge.f32.partialorder %v3028, %v3058
    %vm3066 = vcmp.ge.f32.partialorder %v3029, %v3058
    %vm3067 = vcmp.ge.f32.partialorder %v3030, %v3058
    %vm3068 = vcmp.ge.f32.partialorder %v3031, %v3058
    %vm3069 = vcmp.ge.f32.partialorder %v3032, %v3058
    %vm3070 = vcmp.ge.f32.partialorder %v3033, %v3058
    %vm3071 = vcmp.ge.f32.partialorder %v3034, %v3058
    %vm3072 = vcmp.ge.f32.partialorder %v3035, %v3058
    %vm3073 = vcmp.ge.f32.partialorder %v3036, %v3058
    %vm3074 = vcmp.ge.f32.partialorder %v3037, %v3058
    %v3075 = vsel %vm3059, %v808, 128
    %v3076 = vsel %vm3060, %v809, 128
    %v3077 = vsel %vm3061, %v810, 128
    %v3078 = vsel %vm3062, %v811, 128
    %v3079 = vsel %vm3063, %v812, 128
    %v3080 = vsel %vm3064, %v813, 128
    %v3081 = vsel %vm3065, %v814, 128
    %v3082 = vsel %vm3066, %v815, 128
    %v3083 = vsel %vm3067, %v816, 128
    %v3084 = vsel %vm3068, %v817, 128
    %v3085 = vsel %vm3069, %v818, 128
    %v3086 = vsel %vm3070, %v819, 128
    %v3087 = vsel %vm3071, %v820, 128
    %v3088 = vsel %vm3072, %v821, 128
    %v3089 = vsel %vm3073, %v822, 128
    %v3090 = vsel %vm3074, %v823, 128
    %vm3091 = vcmp.lt.s32.totalorder %v3075, %v3079
    %v3092 = vsel %vm3091, %v3075, %v3079
    %vm3093 = vcmp.lt.s32.totalorder %v3076, %v3080
    %v3094 = vsel %vm3093, %v3076, %v3080
    %vm3095 = vcmp.lt.s32.totalorder %v3077, %v3081
    %v3096 = vsel %vm3095, %v3077, %v3081
    %vm3097 = vcmp.lt.s32.totalorder %v3078, %v3082
    %v3098 = vsel %vm3097, %v3078, %v3082
    %vm3099 = vcmp.lt.s32.totalorder %v3092, %v3083
    %v3100 = vsel %vm3099, %v3092, %v3083
    %vm3101 = vcmp.lt.s32.totalorder %v3094, %v3084
    %v3102 = vsel %vm3101, %v3094, %v3084
    %vm3103 = vcmp.lt.s32.totalorder %v3096, %v3085
    %v3104 = vsel %vm3103, %v3096, %v3085
    %vm3105 = vcmp.lt.s32.totalorder %v3098, %v3086
    %v3106 = vsel %vm3105, %v3098, %v3086
    %vm3107 = vcmp.lt.s32.totalorder %v3100, %v3087
    %v3108 = vsel %vm3107, %v3100, %v3087
    %vm3109 = vcmp.lt.s32.totalorder %v3102, %v3088
    %v3110 = vsel %vm3109, %v3102, %v3088
    %vm3111 = vcmp.lt.s32.totalorder %v3104, %v3089
    %v3112 = vsel %vm3111, %v3104, %v3089
    %vm3113 = vcmp.lt.s32.totalorder %v3106, %v3090
    %v3114 = vsel %vm3113, %v3106, %v3090
    %vm3115 = vcmp.lt.s32.totalorder %v3108, %v3110
    %v3116 = vsel %vm3115, %v3108, %v3110
    %vm3117 = vcmp.lt.s32.totalorder %v3112, %v3114
    %v3118 = vsel %vm3117, %v3112, %v3114
    %vm3119 = vcmp.lt.s32.totalorder %v3116, %v3118
    %v3120 = vsel %vm3119, %v3116, %v3118
    %v3121 = vrot.slane %v3120, 4
    %vm3122 = vcmp.lt.s32.totalorder %v3120, %v3121
    %v3123 = vsel %vm3122, %v3120, %v3121
    %v3124 = vrot.slane %v3123, 2
    %vm3125 = vcmp.lt.s32.totalorder %v3123, %v3124
    %v3126 = vsel %vm3125, %v3123, %v3124
    %v3127 = vrot.slane %v3126, 1
    %vm3128 = vcmp.lt.s32.totalorder %v3126, %v3127
    %v3129 = vsel %vm3128, %v3126, %v3127
    %v3130 = vadd.s32 %v3129, 640
    %vm3131 = vcmp.gt.f32.partialorder %v3058, %v2748
    %v3132 = vsel %vm3131, %v3130, %v2747
    %v3133 = vsel %vm3131, %v3058, %v2748
    %v3134 = vld [vmem:[#allocation8 + $0x180] sm:$0xf]
    %v3135 = vld [vmem:[#allocation8 + $0x184] sm:$0xf]
    %v3136 = vld [vmem:[#allocation8 + $0x188] sm:$0xf]
    %v3137 = vld [vmem:[#allocation8 + $0x18c] sm:$0xf]
    %v3138 = vld [vmem:[#allocation8 + $0x190] sm:$0xf]
    %v3139 = vld [vmem:[#allocation8 + $0x194] sm:$0xf]
    %v3140 = vld [vmem:[#allocation8 + $0x198] sm:$0xf]
    %v3141 = vld [vmem:[#allocation8 + $0x19c] sm:$0xf]
    %v3142 = vld [vmem:[#allocation8 + $0x1a0] sm:$0xf]
    %v3143 = vld [vmem:[#allocation8 + $0x1a4] sm:$0xf]
    %v3144 = vld [vmem:[#allocation8 + $0x1a8] sm:$0xf]
    %v3145 = vld [vmem:[#allocation8 + $0x1ac] sm:$0xf]
    %v3146 = vld [vmem:[#allocation8 + $0x1b0] sm:$0xf]
    %v3147 = vld [vmem:[#allocation8 + $0x1b4] sm:$0xf]
    %v3148 = vld [vmem:[#allocation8 + $0x1b8] sm:$0xf]
    %v3149 = vld [vmem:[#allocation8 + $0x1bc] sm:$0xf]
    %v3166 = vunpack.c.l.b16 %v3134
    %v3167 = vunpack.c.l.b16 %v3135
    %v3168 = vunpack.c.l.b16 %v3136
    %v3169 = vunpack.c.l.b16 %v3137
    %v3170 = vunpack.c.l.b16 %v3138
    %v3171 = vunpack.c.l.b16 %v3139
    %v3172 = vunpack.c.l.b16 %v3140
    %v3173 = vunpack.c.l.b16 %v3141
    %v3174 = vunpack.c.l.b16 %v3142
    %v3175 = vunpack.c.l.b16 %v3143
    %v3176 = vunpack.c.l.b16 %v3144
    %v3177 = vunpack.c.l.b16 %v3145
    %v3178 = vunpack.c.l.b16 %v3146
    %v3179 = vunpack.c.l.b16 %v3147
    %v3180 = vunpack.c.l.b16 %v3148
    %v3181 = vunpack.c.l.b16 %v3149
    %v3182 = vpack.c.b16 %v3167, %v3166
    %v3183 = vpack.c.b16 %v3169, %v3168
    %v3184 = vpack.c.b16 %v3171, %v3170
    %v3185 = vpack.c.b16 %v3173, %v3172
    %v3186 = vpack.c.b16 %v3175, %v3174
    %v3187 = vpack.c.b16 %v3177, %v3176
    %v3188 = vpack.c.b16 %v3179, %v3178
    %v3189 = vpack.c.b16 %v3181, %v3180
    %v3191 = vsel %vm880, %v3182, 0
    %v3194 = vsel %vm880, %v3183, 0
    %v3197 = vsel %vm880, %v3184, 0
    %v3200 = vsel %vm880, %v3185, 0
    %v3203 = vsel %vm880, %v3186, 0
    %v3206 = vsel %vm880, %v3187, 0
    %v3209 = vsel %vm880, %v3188, 0
    %v3212 = vsel %vm880, %v3189, 0
    %3214 = vmatprep.subr.bf16.mxu0 0
    %3215 = vmatpush1.bf16.msra.mxu0 %v747
    %3216 = vmatprep.subr.bf16.mxu0 0
    %3217 = vmatpush1.bf16.msra.mxu0 %v748
    %3218 = vmatprep.subr.bf16.mxu0 0
    %3219 = vmatpush1.bf16.msra.mxu0 %v749
    %3220 = vmatprep.subr.bf16.mxu0 0
    %3221 = vmatpush1.bf16.msra.mxu0 %v750
    %3222 = vmatprep.subr.bf16.mxu0 0
    %3223 = vmatpush1.bf16.msra.mxu0 %v751
    %3224 = vmatprep.subr.bf16.mxu0 0
    %3225 = vmatpush1.bf16.msra.mxu0 %v752
    %3226 = vmatprep.subr.bf16.mxu0 0
    %3227 = vmatpush1.bf16.msra.mxu0 0
    %3228 = vmatprep.subr.bf16.mxu0 0
    %3229 = vmatpush1.bf16.msra.mxu0 0
    %3230 = vmatprep.subr.bf16.mxu0 0
    %3231 = vmatpush1.bf16.msra.mxu0 0
    %3232 = vmatprep.subr.bf16.mxu0 0
    %3233 = vmatpush1.bf16.msra.mxu0 0
    %3234 = vmatprep.subr.bf16.mxu0 0
    %3235 = vmatpush1.bf16.msra.mxu0 0
    %3236 = vmatprep.subr.bf16.mxu0 0
    %3237 = vmatpush1.bf16.msra.mxu0 0
    %3238 = vmatprep.subr.bf16.mxu0 0
    %3239 = vmatpush1.bf16.msra.mxu0 0
    %3240 = vmatprep.subr.bf16.mxu0 0
    %3241 = vmatpush1.bf16.msra.mxu0 0
    %3242 = vmatprep.subr.bf16.mxu0 0
    %3243 = vmatpush1.bf16.msra.mxu0 0
    %3244 = vmatprep.subr.bf16.mxu0 0
    %3245 = vmatpush1.bf16.msra.mxu0 0
    %3246 = vmatprep.mubr.bf16.mxu0 0
    %3247 = vmatmul.mubr.bf16.gmra.mrb[0].mxu0 %v3191
    %v3248 = vpop.f32.mrb[0].mxu0
    %v3249 = vadd.f32 0.0, %v3248
    %v3250 = vpop.f32.mrb[0].mxu0
    %v3251 = vpop.f32.mrb[0].mxu0
    %v3252 = vadd.f32 0.0, %v3251
    %v3253 = vpop.f32.mrb[0].mxu0
    %3254 = vmatprep.mubr.bf16.mxu0 0
    %3255 = vmatmul.mubr.bf16.gmra.mrb[0].mxu0 %v3194
    %v3256 = vpop.f32.mrb[0].mxu0
    %v3257 = vadd.f32 0.0, %v3256
    %v3258 = vpop.f32.mrb[0].mxu0
    %v3259 = vpop.f32.mrb[0].mxu0
    %v3260 = vadd.f32 0.0, %v3259
    %v3261 = vpop.f32.mrb[0].mxu0
    %3262 = vmatprep.mubr.bf16.mxu0 0
    %3263 = vmatmul.mubr.bf16.gmra.mrb[0].mxu0 %v3197
    %v3264 = vpop.f32.mrb[0].mxu0
    %v3265 = vadd.f32 0.0, %v3264
    %v3266 = vpop.f32.mrb[0].mxu0
    %v3267 = vpop.f32.mrb[0].mxu0
    %v3268 = vadd.f32 0.0, %v3267
    %v3269 = vpop.f32.mrb[0].mxu0
    %3270 = vmatprep.mubr.bf16.mxu0 0
    %3271 = vmatmul.mubr.bf16.gmra.mrb[0].mxu0 %v3200
    %v3272 = vpop.f32.mrb[0].mxu0
    %v3273 = vadd.f32 0.0, %v3272
    %v3274 = vpop.f32.mrb[0].mxu0
    %v3275 = vpop.f32.mrb[0].mxu0
    %v3276 = vadd.f32 0.0, %v3275
    %v3277 = vpop.f32.mrb[0].mxu0
    %3278 = vmatprep.mubr.bf16.mxu0 0
    %3279 = vmatmul.mubr.bf16.gmra.mrb[0].mxu0 %v3203
    %v3280 = vpop.f32.mrb[0].mxu0
    %v3281 = vadd.f32 0.0, %v3280
    %v3282 = vpop.f32.mrb[0].mxu0
    %v3283 = vpop.f32.mrb[0].mxu0
    %v3284 = vadd.f32 0.0, %v3283
    %v3285 = vpop.f32.mrb[0].mxu0
    %3286 = vmatprep.mubr.bf16.mxu0 0
    %3287 = vmatmul.mubr.bf16.gmra.mrb[0].mxu0 %v3206
    %v3288 = vpop.f32.mrb[0].mxu0
    %v3289 = vadd.f32 0.0, %v3288
    %v3290 = vpop.f32.mrb[0].mxu0
    %v3291 = vpop.f32.mrb[0].mxu0
    %v3292 = vadd.f32 0.0, %v3291
    %v3293 = vpop.f32.mrb[0].mxu0
    %3294 = vmatprep.mubr.bf16.mxu0 0
    %3295 = vmatmul.mubr.bf16.gmra.mrb[0].mxu0 %v3209
    %v3296 = vpop.f32.mrb[0].mxu0
    %v3297 = vadd.f32 0.0, %v3296
    %v3298 = vpop.f32.mrb[0].mxu0
    %v3299 = vpop.f32.mrb[0].mxu0
    %v3300 = vadd.f32 0.0, %v3299
    %v3301 = vpop.f32.mrb[0].mxu0
    %3302 = vmatprep.mubr.bf16.mxu0 0
    %3303 = vmatmul.mubr.bf16.gmra.mrb[0].mxu0 %v3212
    %v3304 = vpop.f32.mrb[0].mxu0
    %v3305 = vadd.f32 0.0, %v3304
    %v3306 = vpop.f32.mrb[0].mxu0
    %v3307 = vpop.f32.mrb[0].mxu0
    %v3308 = vadd.f32 0.0, %v3307
    %v3309 = vpop.f32.mrb[0].mxu0
    %3310 = vdwg.mxu0
    %v3311 = vld [vmem:[#allocation10 + $0x300] sm:$0xff]
    %v3312 = vld [vmem:[#allocation10 + $0x308] sm:$0xff]
    %v3313 = vld [vmem:[#allocation10 + $0x310] sm:$0xff]
    %v3314 = vld [vmem:[#allocation10 + $0x318] sm:$0xff]
    %v3315 = vld [vmem:[#allocation10 + $0x320] sm:$0xff]
    %v3316 = vld [vmem:[#allocation10 + $0x328] sm:$0xff]
    %v3317 = vld [vmem:[#allocation10 + $0x330] sm:$0xff]
    %v3318 = vld [vmem:[#allocation10 + $0x338] sm:$0xff]
    %v3319 = vld [vmem:[#allocation10 + $0x340] sm:$0xff]
    %v3320 = vld [vmem:[#allocation10 + $0x348] sm:$0xff]
    %v3321 = vld [vmem:[#allocation10 + $0x350] sm:$0xff]
    %v3322 = vld [vmem:[#allocation10 + $0x358] sm:$0xff]
    %v3323 = vld [vmem:[#allocation10 + $0x360] sm:$0xff]
    %v3324 = vld [vmem:[#allocation10 + $0x368] sm:$0xff]
    %v3325 = vld [vmem:[#allocation10 + $0x370] sm:$0xff]
    %v3326 = vld [vmem:[#allocation10 + $0x378] sm:$0xff]
    %3328 = vset.pattern.permute.xlu0 0
    %3329 = vperm.xlu0 %3328, %v3311
    %v3330 = vpop.permute.xlu0 %3329
    %3333 = vset.pattern.permute.xlu0 0
    %3334 = vperm.xlu0 %3333, %v3312
    %v3335 = vpop.permute.xlu0 %3334
    %3338 = vset.pattern.permute.xlu0 0
    %3339 = vperm.xlu0 %3338, %v3313
    %v3340 = vpop.permute.xlu0 %3339
    %3343 = vset.pattern.permute.xlu0 0
    %3344 = vperm.xlu0 %3343, %v3314
    %v3345 = vpop.permute.xlu0 %3344
    %3348 = vset.pattern.permute.xlu0 0
    %3349 = vperm.xlu0 %3348, %v3315
    %v3350 = vpop.permute.xlu0 %3349
    %3353 = vset.pattern.permute.xlu0 0
    %3354 = vperm.xlu0 %3353, %v3316
    %v3355 = vpop.permute.xlu0 %3354
    %3358 = vset.pattern.permute.xlu0 0
    %3359 = vperm.xlu0 %3358, %v3317
    %v3360 = vpop.permute.xlu0 %3359
    %3363 = vset.pattern.permute.xlu0 0
    %3364 = vperm.xlu0 %3363, %v3318
    %v3365 = vpop.permute.xlu0 %3364
    %3368 = vset.pattern.permute.xlu0 0
    %3369 = vperm.xlu0 %3368, %v3319
    %v3370 = vpop.permute.xlu0 %3369
    %3373 = vset.pattern.permute.xlu0 0
    %3374 = vperm.xlu0 %3373, %v3320
    %v3375 = vpop.permute.xlu0 %3374
    %3378 = vset.pattern.permute.xlu0 0
    %3379 = vperm.xlu0 %3378, %v3321
    %v3380 = vpop.permute.xlu0 %3379
    %3383 = vset.pattern.permute.xlu0 0
    %3384 = vperm.xlu0 %3383, %v3322
    %v3385 = vpop.permute.xlu0 %3384
    %3388 = vset.pattern.permute.xlu0 0
    %3389 = vperm.xlu0 %3388, %v3323
    %v3390 = vpop.permute.xlu0 %3389
    %3393 = vset.pattern.permute.xlu0 0
    %3394 = vperm.xlu0 %3393, %v3324
    %v3395 = vpop.permute.xlu0 %3394
    %3398 = vset.pattern.permute.xlu0 0
    %3399 = vperm.xlu0 %3398, %v3325
    %v3400 = vpop.permute.xlu0 %3399
    %3403 = vset.pattern.permute.xlu0 0
    %3404 = vperm.xlu0 %3403, %v3326
    %v3405 = vpop.permute.xlu0 %3404
    %v3407 = vsub.f32 %v3249, %v3330
    %v3408 = vsub.f32 %v3252, %v3335
    %v3409 = vsub.f32 %v3257, %v3340
    %v3410 = vsub.f32 %v3260, %v3345
    %v3411 = vsub.f32 %v3265, %v3350
    %v3412 = vsub.f32 %v3268, %v3355
    %v3413 = vsub.f32 %v3273, %v3360
    %v3414 = vsub.f32 %v3276, %v3365
    %v3415 = vsub.f32 %v3281, %v3370
    %v3416 = vsub.f32 %v3284, %v3375
    %v3417 = vsub.f32 %v3289, %v3380
    %v3418 = vsub.f32 %v3292, %v3385
    %v3419 = vsub.f32 %v3297, %v3390
    %v3420 = vsub.f32 %v3300, %v3395
    %v3421 = vsub.f32 %v3305, %v3400
    %v3422 = vsub.f32 %v3308, %v3405
    %v3423 = vmax.f32 %v3407, %v3411
    %v3424 = vmax.f32 %v3408, %v3412
    %v3425 = vmax.f32 %v3409, %v3413
    %v3426 = vmax.f32 %v3410, %v3414
    %v3427 = vmax.f32 %v3423, %v3415
    %v3428 = vmax.f32 %v3424, %v3416
    %v3429 = vmax.f32 %v3425, %v3417
    %v3430 = vmax.f32 %v3426, %v3418
    %v3431 = vmax.f32 %v3427, %v3419
    %v3432 = vmax.f32 %v3428, %v3420
    %v3433 = vmax.f32 %v3429, %v3421
    %v3434 = vmax.f32 %v3430, %v3422
    %v3435 = vmax.f32 %v3431, %v3432
    %v3436 = vmax.f32 %v3433, %v3434
    %v3437 = vmax.f32 %v3435, %v3436
    %v3438 = vrot.slane %v3437, 4
    %v3439 = vmax.f32 %v3437, %v3438
    %v3440 = vrot.slane %v3439, 2
    %v3441 = vmax.f32 %v3439, %v3440
    %v3442 = vrot.slane %v3441, 1
    %v3443 = vmax.f32 %v3441, %v3442
    %vm3444 = vcmp.ge.f32.partialorder %v3407, %v3443
    %vm3445 = vcmp.ge.f32.partialorder %v3408, %v3443
    %vm3446 = vcmp.ge.f32.partialorder %v3409, %v3443
    %vm3447 = vcmp.ge.f32.partialorder %v3410, %v3443
    %vm3448 = vcmp.ge.f32.partialorder %v3411, %v3443
    %vm3449 = vcmp.ge.f32.partialorder %v3412, %v3443
    %vm3450 = vcmp.ge.f32.partialorder %v3413, %v3443
    %vm3451 = vcmp.ge.f32.partialorder %v3414, %v3443
    %vm3452 = vcmp.ge.f32.partialorder %v3415, %v3443
    %vm3453 = vcmp.ge.f32.partialorder %v3416, %v3443
    %vm3454 = vcmp.ge.f32.partialorder %v3417, %v3443
    %vm3455 = vcmp.ge.f32.partialorder %v3418, %v3443
    %vm3456 = vcmp.ge.f32.partialorder %v3419, %v3443
    %vm3457 = vcmp.ge.f32.partialorder %v3420, %v3443
    %vm3458 = vcmp.ge.f32.partialorder %v3421, %v3443
    %vm3459 = vcmp.ge.f32.partialorder %v3422, %v3443
    %v3460 = vsel %vm3444, %v808, 128
    %v3461 = vsel %vm3445, %v809, 128
    %v3462 = vsel %vm3446, %v810, 128
    %v3463 = vsel %vm3447, %v811, 128
    %v3464 = vsel %vm3448, %v812, 128
    %v3465 = vsel %vm3449, %v813, 128
    %v3466 = vsel %vm3450, %v814, 128
    %v3467 = vsel %vm3451, %v815, 128
    %v3468 = vsel %vm3452, %v816, 128
    %v3469 = vsel %vm3453, %v817, 128
    %v3470 = vsel %vm3454, %v818, 128
    %v3471 = vsel %vm3455, %v819, 128
    %v3472 = vsel %vm3456, %v820, 128
    %v3473 = vsel %vm3457, %v821, 128
    %v3474 = vsel %vm3458, %v822, 128
    %v3475 = vsel %vm3459, %v823, 128
    %vm3476 = vcmp.lt.s32.totalorder %v3460, %v3464
    %v3477 = vsel %vm3476, %v3460, %v3464
    %vm3478 = vcmp.lt.s32.totalorder %v3461, %v3465
    %v3479 = vsel %vm3478, %v3461, %v3465
    %vm3480 = vcmp.lt.s32.totalorder %v3462, %v3466
    %v3481 = vsel %vm3480, %v3462, %v3466
    %vm3482 = vcmp.lt.s32.totalorder %v3463, %v3467
    %v3483 = vsel %vm3482, %v3463, %v3467
    %vm3484 = vcmp.lt.s32.totalorder %v3477, %v3468
    %v3485 = vsel %vm3484, %v3477, %v3468
    %vm3486 = vcmp.lt.s32.totalorder %v3479, %v3469
    %v3487 = vsel %vm3486, %v3479, %v3469
    %vm3488 = vcmp.lt.s32.totalorder %v3481, %v3470
    %v3489 = vsel %vm3488, %v3481, %v3470
    %vm3490 = vcmp.lt.s32.totalorder %v3483, %v3471
    %v3491 = vsel %vm3490, %v3483, %v3471
    %vm3492 = vcmp.lt.s32.totalorder %v3485, %v3472
    %v3493 = vsel %vm3492, %v3485, %v3472
    %vm3494 = vcmp.lt.s32.totalorder %v3487, %v3473
    %v3495 = vsel %vm3494, %v3487, %v3473
    %vm3496 = vcmp.lt.s32.totalorder %v3489, %v3474
    %v3497 = vsel %vm3496, %v3489, %v3474
    %vm3498 = vcmp.lt.s32.totalorder %v3491, %v3475
    %v3499 = vsel %vm3498, %v3491, %v3475
    %vm3500 = vcmp.lt.s32.totalorder %v3493, %v3495
    %v3501 = vsel %vm3500, %v3493, %v3495
    %vm3502 = vcmp.lt.s32.totalorder %v3497, %v3499
    %v3503 = vsel %vm3502, %v3497, %v3499
    %vm3504 = vcmp.lt.s32.totalorder %v3501, %v3503
    %v3505 = vsel %vm3504, %v3501, %v3503
    %v3506 = vrot.slane %v3505, 4
    %vm3507 = vcmp.lt.s32.totalorder %v3505, %v3506
    %v3508 = vsel %vm3507, %v3505, %v3506
    %v3509 = vrot.slane %v3508, 2
    %vm3510 = vcmp.lt.s32.totalorder %v3508, %v3509
    %v3511 = vsel %vm3510, %v3508, %v3509
    %v3512 = vrot.slane %v3511, 1
    %vm3513 = vcmp.lt.s32.totalorder %v3511, %v3512
    %v3514 = vsel %vm3513, %v3511, %v3512
    %v3515 = vadd.s32 %v3514, 768
    %vm3516 = vcmp.gt.f32.partialorder %v3443, %v3133
    %v3517 = vsel %vm3516, %v3515, %v3132
    %v3518 = vsel %vm3516, %v3443, %v3133
    %v3519 = vld [vmem:[#allocation8 + $0x1c0] sm:$0xf]
    %v3520 = vld [vmem:[#allocation8 + $0x1c4] sm:$0xf]
    %v3521 = vld [vmem:[#allocation8 + $0x1c8] sm:$0xf]
    %v3522 = vld [vmem:[#allocation8 + $0x1cc] sm:$0xf]
    %v3523 = vld [vmem:[#allocation8 + $0x1d0] sm:$0xf]
    %v3524 = vld [vmem:[#allocation8 + $0x1d4] sm:$0xf]
    %v3525 = vld [vmem:[#allocation8 + $0x1d8] sm:$0xf]
    %v3526 = vld [vmem:[#allocation8 + $0x1dc] sm:$0xf]
    %v3527 = vld [vmem:[#allocation8 + $0x1e0] sm:$0xf]
    %v3528 = vld [vmem:[#allocation8 + $0x1e4] sm:$0xf]
    %v3529 = vld [vmem:[#allocation8 + $0x1e8] sm:$0xf]
    %v3530 = vld [vmem:[#allocation8 + $0x1ec] sm:$0xf]
    %v3531 = vld [vmem:[#allocation8 + $0x1f0] sm:$0xf]
    %v3532 = vld [vmem:[#allocation8 + $0x1f4] sm:$0xf]
    %v3533 = vld [vmem:[#allocation8 + $0x1f8] sm:$0xf]
    %v3534 = vld [vmem:[#allocation8 + $0x1fc] sm:$0xf]
    %v3551 = vunpack.c.l.b16 %v3519
    %v3552 = vunpack.c.l.b16 %v3520
    %v3553 = vunpack.c.l.b16 %v3521
    %v3554 = vunpack.c.l.b16 %v3522
    %v3555 = vunpack.c.l.b16 %v3523
    %v3556 = vunpack.c.l.b16 %v3524
    %v3557 = vunpack.c.l.b16 %v3525
    %v3558 = vunpack.c.l.b16 %v3526
    %v3559 = vunpack.c.l.b16 %v3527
    %v3560 = vunpack.c.l.b16 %v3528
    %v3561 = vunpack.c.l.b16 %v3529
    %v3562 = vunpack.c.l.b16 %v3530
    %v3563 = vunpack.c.l.b16 %v3531
    %v3564 = vunpack.c.l.b16 %v3532
    %v3565 = vunpack.c.l.b16 %v3533
    %v3566 = vunpack.c.l.b16 %v3534
    %v3567 = vpack.c.b16 %v3552, %v3551
    %v3568 = vpack.c.b16 %v3554, %v3553
    %v3569 = vpack.c.b16 %v3556, %v3555
    %v3570 = vpack.c.b16 %v3558, %v3557
    %v3571 = vpack.c.b16 %v3560, %v3559
    %v3572 = vpack.c.b16 %v3562, %v3561
    %v3573 = vpack.c.b16 %v3564, %v3563
    %v3574 = vpack.c.b16 %v3566, %v3565
    %v3576 = vsel %vm880, %v3567, 0
    %v3579 = vsel %vm880, %v3568, 0
    %v3582 = vsel %vm880, %v3569, 0
    %v3585 = vsel %vm880, %v3570, 0
    %v3588 = vsel %vm880, %v3571, 0
    %v3591 = vsel %vm880, %v3572, 0
    %v3594 = vsel %vm880, %v3573, 0
    %v3597 = vsel %vm880, %v3574, 0
    %3599 = vmatprep.subr.bf16.mxu0 0
    %3600 = vmatpush1.bf16.msra.mxu0 %v747
    %3601 = vmatprep.subr.bf16.mxu0 0
    %3602 = vmatpush1.bf16.msra.mxu0 %v748
    %3603 = vmatprep.subr.bf16.mxu0 0
    %3604 = vmatpush1.bf16.msra.mxu0 %v749
    %3605 = vmatprep.subr.bf16.mxu0 0
    %3606 = vmatpush1.bf16.msra.mxu0 %v750
    %3607 = vmatprep.subr.bf16.mxu0 0
    %3608 = vmatpush1.bf16.msra.mxu0 %v751
    %3609 = vmatprep.subr.bf16.mxu0 0
    %3610 = vmatpush1.bf16.msra.mxu0 %v752
    %3611 = vmatprep.subr.bf16.mxu0 0
    %3612 = vmatpush1.bf16.msra.mxu0 0
    %3613 = vmatprep.subr.bf16.mxu0 0
    %3614 = vmatpush1.bf16.msra.mxu0 0
    %3615 = vmatprep.subr.bf16.mxu0 0
    %3616 = vmatpush1.bf16.msra.mxu0 0
    %3617 = vmatprep.subr.bf16.mxu0 0
    %3618 = vmatpush1.bf16.msra.mxu0 0
    %3619 = vmatprep.subr.bf16.mxu0 0
    %3620 = vmatpush1.bf16.msra.mxu0 0
    %3621 = vmatprep.subr.bf16.mxu0 0
    %3622 = vmatpush1.bf16.msra.mxu0 0
    %3623 = vmatprep.subr.bf16.mxu0 0
    %3624 = vmatpush1.bf16.msra.mxu0 0
    %3625 = vmatprep.subr.bf16.mxu0 0
    %3626 = vmatpush1.bf16.msra.mxu0 0
    %3627 = vmatprep.subr.bf16.mxu0 0
    %3628 = vmatpush1.bf16.msra.mxu0 0
    %3629 = vmatprep.subr.bf16.mxu0 0
    %3630 = vmatpush1.bf16.msra.mxu0 0
    %3631 = vmatprep.mubr.bf16.mxu0 0
    %3632 = vmatmul.mubr.bf16.gmra.mrb[0].mxu0 %v3576
    %v3633 = vpop.f32.mrb[0].mxu0
    %v3634 = vadd.f32 0.0, %v3633
    %v3635 = vpop.f32.mrb[0].mxu0
    %v3636 = vpop.f32.mrb[0].mxu0
    %v3637 = vadd.f32 0.0, %v3636
    %v3638 = vpop.f32.mrb[0].mxu0
    %3639 = vmatprep.mubr.bf16.mxu0 0
    %3640 = vmatmul.mubr.bf16.gmra.mrb[0].mxu0 %v3579
    %v3641 = vpop.f32.mrb[0].mxu0
    %v3642 = vadd.f32 0.0, %v3641
    %v3643 = vpop.f32.mrb[0].mxu0
    %v3644 = vpop.f32.mrb[0].mxu0
    %v3645 = vadd.f32 0.0, %v3644
    %v3646 = vpop.f32.mrb[0].mxu0
    %3647 = vmatprep.mubr.bf16.mxu0 0
    %3648 = vmatmul.mubr.bf16.gmra.mrb[0].mxu0 %v3582
    %v3649 = vpop.f32.mrb[0].mxu0
    %v3650 = vadd.f32 0.0, %v3649
    %v3651 = vpop.f32.mrb[0].mxu0
    %v3652 = vpop.f32.mrb[0].mxu0
    %v3653 = vadd.f32 0.0, %v3652
    %v3654 = vpop.f32.mrb[0].mxu0
    %3655 = vmatprep.mubr.bf16.mxu0 0
    %3656 = vmatmul.mubr.bf16.gmra.mrb[0].mxu0 %v3585
    %v3657 = vpop.f32.mrb[0].mxu0
    %v3658 = vadd.f32 0.0, %v3657
    %v3659 = vpop.f32.mrb[0].mxu0
    %v3660 = vpop.f32.mrb[0].mxu0
    %v3661 = vadd.f32 0.0, %v3660
    %v3662 = vpop.f32.mrb[0].mxu0
    %3663 = vmatprep.mubr.bf16.mxu0 0
    %3664 = vmatmul.mubr.bf16.gmra.mrb[0].mxu0 %v3588
    %v3665 = vpop.f32.mrb[0].mxu0
    %v3666 = vadd.f32 0.0, %v3665
    %v3667 = vpop.f32.mrb[0].mxu0
    %v3668 = vpop.f32.mrb[0].mxu0
    %v3669 = vadd.f32 0.0, %v3668
    %v3670 = vpop.f32.mrb[0].mxu0
    %3671 = vmatprep.mubr.bf16.mxu0 0
    %3672 = vmatmul.mubr.bf16.gmra.mrb[0].mxu0 %v3591
    %v3673 = vpop.f32.mrb[0].mxu0
    %v3674 = vadd.f32 0.0, %v3673
    %v3675 = vpop.f32.mrb[0].mxu0
    %v3676 = vpop.f32.mrb[0].mxu0
    %v3677 = vadd.f32 0.0, %v3676
    %v3678 = vpop.f32.mrb[0].mxu0
    %3679 = vmatprep.mubr.bf16.mxu0 0
    %3680 = vmatmul.mubr.bf16.gmra.mrb[0].mxu0 %v3594
    %v3681 = vpop.f32.mrb[0].mxu0
    %v3682 = vadd.f32 0.0, %v3681
    %v3683 = vpop.f32.mrb[0].mxu0
    %v3684 = vpop.f32.mrb[0].mxu0
    %v3685 = vadd.f32 0.0, %v3684
    %v3686 = vpop.f32.mrb[0].mxu0
    %3687 = vmatprep.mubr.bf16.mxu0 0
    %3688 = vmatmul.mubr.bf16.gmra.mrb[0].mxu0 %v3597
    %v3689 = vpop.f32.mrb[0].mxu0
    %v3690 = vadd.f32 0.0, %v3689
    %v3691 = vpop.f32.mrb[0].mxu0
    %v3692 = vpop.f32.mrb[0].mxu0
    %v3693 = vadd.f32 0.0, %v3692
    %v3694 = vpop.f32.mrb[0].mxu0
    %3695 = vdwg.mxu0
    %v3696 = vld [vmem:[#allocation10 + $0x380] sm:$0xff]
    %v3697 = vld [vmem:[#allocation10 + $0x388] sm:$0xff]
    %v3698 = vld [vmem:[#allocation10 + $0x390] sm:$0xff]
    %v3699 = vld [vmem:[#allocation10 + $0x398] sm:$0xff]
    %v3700 = vld [vmem:[#allocation10 + $0x3a0] sm:$0xff]
    %v3701 = vld [vmem:[#allocation10 + $0x3a8] sm:$0xff]
    %v3702 = vld [vmem:[#allocation10 + $0x3b0] sm:$0xff]
    %v3703 = vld [vmem:[#allocation10 + $0x3b8] sm:$0xff]
    %v3704 = vld [vmem:[#allocation10 + $0x3c0] sm:$0xff]
    %v3705 = vld [vmem:[#allocation10 + $0x3c8] sm:$0xff]
    %v3706 = vld [vmem:[#allocation10 + $0x3d0] sm:$0xff]
    %v3707 = vld [vmem:[#allocation10 + $0x3d8] sm:$0xff]
    %v3708 = vld [vmem:[#allocation10 + $0x3e0] sm:$0xff]
    %v3709 = vld [vmem:[#allocation10 + $0x3e8] sm:$0xff]
    %v3710 = vld [vmem:[#allocation10 + $0x3f0] sm:$0xff]
    %v3711 = vld [vmem:[#allocation10 + $0x3f8] sm:$0xff]
    %3713 = vset.pattern.permute.xlu0 0
    %3714 = vperm.xlu0 %3713, %v3696
    %v3715 = vpop.permute.xlu0 %3714
    %3718 = vset.pattern.permute.xlu0 0
    %3719 = vperm.xlu0 %3718, %v3697
    %v3720 = vpop.permute.xlu0 %3719
    %3723 = vset.pattern.permute.xlu0 0
    %3724 = vperm.xlu0 %3723, %v3698
    %v3725 = vpop.permute.xlu0 %3724
    %3728 = vset.pattern.permute.xlu0 0
    %3729 = vperm.xlu0 %3728, %v3699
    %v3730 = vpop.permute.xlu0 %3729
    %3733 = vset.pattern.permute.xlu0 0
    %3734 = vperm.xlu0 %3733, %v3700
    %v3735 = vpop.permute.xlu0 %3734
    %3738 = vset.pattern.permute.xlu0 0
    %3739 = vperm.xlu0 %3738, %v3701
    %v3740 = vpop.permute.xlu0 %3739
    %3743 = vset.pattern.permute.xlu0 0
    %3744 = vperm.xlu0 %3743, %v3702
    %v3745 = vpop.permute.xlu0 %3744
    %3748 = vset.pattern.permute.xlu0 0
    %3749 = vperm.xlu0 %3748, %v3703
    %v3750 = vpop.permute.xlu0 %3749
    %3753 = vset.pattern.permute.xlu0 0
    %3754 = vperm.xlu0 %3753, %v3704
    %v3755 = vpop.permute.xlu0 %3754
    %3758 = vset.pattern.permute.xlu0 0
    %3759 = vperm.xlu0 %3758, %v3705
    %v3760 = vpop.permute.xlu0 %3759
    %3763 = vset.pattern.permute.xlu0 0
    %3764 = vperm.xlu0 %3763, %v3706
    %v3765 = vpop.permute.xlu0 %3764
    %3768 = vset.pattern.permute.xlu0 0
    %3769 = vperm.xlu0 %3768, %v3707
    %v3770 = vpop.permute.xlu0 %3769
    %3773 = vset.pattern.permute.xlu0 0
    %3774 = vperm.xlu0 %3773, %v3708
    %v3775 = vpop.permute.xlu0 %3774
    %3778 = vset.pattern.permute.xlu0 0
    %3779 = vperm.xlu0 %3778, %v3709
    %v3780 = vpop.permute.xlu0 %3779
    %3783 = vset.pattern.permute.xlu0 0
    %3784 = vperm.xlu0 %3783, %v3710
    %v3785 = vpop.permute.xlu0 %3784
    %3788 = vset.pattern.permute.xlu0 0
    %3789 = vperm.xlu0 %3788, %v3711
    %v3790 = vpop.permute.xlu0 %3789
    %v3792 = vsub.f32 %v3634, %v3715
    %v3793 = vsub.f32 %v3637, %v3720
    %v3794 = vsub.f32 %v3642, %v3725
    %v3795 = vsub.f32 %v3645, %v3730
    %v3796 = vsub.f32 %v3650, %v3735
    %v3797 = vsub.f32 %v3653, %v3740
    %v3798 = vsub.f32 %v3658, %v3745
    %v3799 = vsub.f32 %v3661, %v3750
    %v3800 = vsub.f32 %v3666, %v3755
    %v3801 = vsub.f32 %v3669, %v3760
    %v3802 = vsub.f32 %v3674, %v3765
    %v3803 = vsub.f32 %v3677, %v3770
    %v3804 = vsub.f32 %v3682, %v3775
    %v3805 = vsub.f32 %v3685, %v3780
    %v3806 = vsub.f32 %v3690, %v3785
    %v3807 = vsub.f32 %v3693, %v3790
    %v3808 = vmax.f32 %v3792, %v3796
    %v3809 = vmax.f32 %v3793, %v3797
    %v3810 = vmax.f32 %v3794, %v3798
    %v3811 = vmax.f32 %v3795, %v3799
    %v3812 = vmax.f32 %v3808, %v3800
    %v3813 = vmax.f32 %v3809, %v3801
    %v3814 = vmax.f32 %v3810, %v3802
    %v3815 = vmax.f32 %v3811, %v3803
    %v3816 = vmax.f32 %v3812, %v3804
    %v3817 = vmax.f32 %v3813, %v3805
    %v3818 = vmax.f32 %v3814, %v3806
    %v3819 = vmax.f32 %v3815, %v3807
    %v3820 = vmax.f32 %v3816, %v3817
    %v3821 = vmax.f32 %v3818, %v3819
    %v3822 = vmax.f32 %v3820, %v3821
    %v3823 = vrot.slane %v3822, 4
    %v3824 = vmax.f32 %v3822, %v3823
    %v3825 = vrot.slane %v3824, 2
    %v3826 = vmax.f32 %v3824, %v3825
    %v3827 = vrot.slane %v3826, 1
    %v3828 = vmax.f32 %v3826, %v3827
    %vm3829 = vcmp.ge.f32.partialorder %v3792, %v3828
    %vm3830 = vcmp.ge.f32.partialorder %v3793, %v3828
    %vm3831 = vcmp.ge.f32.partialorder %v3794, %v3828
    %vm3832 = vcmp.ge.f32.partialorder %v3795, %v3828
    %vm3833 = vcmp.ge.f32.partialorder %v3796, %v3828
    %vm3834 = vcmp.ge.f32.partialorder %v3797, %v3828
    %vm3835 = vcmp.ge.f32.partialorder %v3798, %v3828
    %vm3836 = vcmp.ge.f32.partialorder %v3799, %v3828
    %vm3837 = vcmp.ge.f32.partialorder %v3800, %v3828
    %vm3838 = vcmp.ge.f32.partialorder %v3801, %v3828
    %vm3839 = vcmp.ge.f32.partialorder %v3802, %v3828
    %vm3840 = vcmp.ge.f32.partialorder %v3803, %v3828
    %vm3841 = vcmp.ge.f32.partialorder %v3804, %v3828
    %vm3842 = vcmp.ge.f32.partialorder %v3805, %v3828
    %vm3843 = vcmp.ge.f32.partialorder %v3806, %v3828
    %vm3844 = vcmp.ge.f32.partialorder %v3807, %v3828
    %v3845 = vsel %vm3829, %v808, 128
    %v3846 = vsel %vm3830, %v809, 128
    %v3847 = vsel %vm3831, %v810, 128
    %v3848 = vsel %vm3832, %v811, 128
    %v3849 = vsel %vm3833, %v812, 128
    %v3850 = vsel %vm3834, %v813, 128
    %v3851 = vsel %vm3835, %v814, 128
    %v3852 = vsel %vm3836, %v815, 128
    %v3853 = vsel %vm3837, %v816, 128
    %v3854 = vsel %vm3838, %v817, 128
    %v3855 = vsel %vm3839, %v818, 128
    %v3856 = vsel %vm3840, %v819, 128
    %v3857 = vsel %vm3841, %v820, 128
    %v3858 = vsel %vm3842, %v821, 128
    %v3859 = vsel %vm3843, %v822, 128
    %v3860 = vsel %vm3844, %v823, 128
    %vm3861 = vcmp.lt.s32.totalorder %v3845, %v3849
    %v3862 = vsel %vm3861, %v3845, %v3849
    %vm3863 = vcmp.lt.s32.totalorder %v3846, %v3850
    %v3864 = vsel %vm3863, %v3846, %v3850
    %vm3865 = vcmp.lt.s32.totalorder %v3847, %v3851
    %v3866 = vsel %vm3865, %v3847, %v3851
    %vm3867 = vcmp.lt.s32.totalorder %v3848, %v3852
    %v3868 = vsel %vm3867, %v3848, %v3852
    %vm3869 = vcmp.lt.s32.totalorder %v3862, %v3853
    %v3870 = vsel %vm3869, %v3862, %v3853
    %vm3871 = vcmp.lt.s32.totalorder %v3864, %v3854
    %v3872 = vsel %vm3871, %v3864, %v3854
    %vm3873 = vcmp.lt.s32.totalorder %v3866, %v3855
    %v3874 = vsel %vm3873, %v3866, %v3855
    %vm3875 = vcmp.lt.s32.totalorder %v3868, %v3856
    %v3876 = vsel %vm3875, %v3868, %v3856
    %vm3877 = vcmp.lt.s32.totalorder %v3870, %v3857
    %v3878 = vsel %vm3877, %v3870, %v3857
    %vm3879 = vcmp.lt.s32.totalorder %v3872, %v3858
    %v3880 = vsel %vm3879, %v3872, %v3858
    %vm3881 = vcmp.lt.s32.totalorder %v3874, %v3859
    %v3882 = vsel %vm3881, %v3874, %v3859
    %vm3883 = vcmp.lt.s32.totalorder %v3876, %v3860
    %v3884 = vsel %vm3883, %v3876, %v3860
    %vm3885 = vcmp.lt.s32.totalorder %v3878, %v3880
    %v3886 = vsel %vm3885, %v3878, %v3880
    %vm3887 = vcmp.lt.s32.totalorder %v3882, %v3884
    %v3888 = vsel %vm3887, %v3882, %v3884
    %vm3889 = vcmp.lt.s32.totalorder %v3886, %v3888
    %v3890 = vsel %vm3889, %v3886, %v3888
    %v3891 = vrot.slane %v3890, 4
    %vm3892 = vcmp.lt.s32.totalorder %v3890, %v3891
    %v3893 = vsel %vm3892, %v3890, %v3891
    %v3894 = vrot.slane %v3893, 2
    %vm3895 = vcmp.lt.s32.totalorder %v3893, %v3894
    %v3896 = vsel %vm3895, %v3893, %v3894
    %v3897 = vrot.slane %v3896, 1
    %vm3898 = vcmp.lt.s32.totalorder %v3896, %v3897
    %v3899 = vsel %vm3898, %v3896, %v3897
    %v3900 = vadd.s32 %v3899, 896
    %vm3901 = vcmp.gt.f32.partialorder %v3828, %v3518
    %v3902 = vsel %vm3901, %v3900, %v3517
    %3903 = vst [vmem:[#allocation12] sm:$0x1] %v3902
    // Predicated region
    $region42: #{content_encoder_forward.3} parent=1 // pred_check
      _
    $region43: #{content_encoder_forward.3} parent=1 // pred_check_branch
      %3905 = sbr.rel (0) target = $region45
    $region44: #{content_encoder_forward.3} parent=1 // pred_region
      %s3907 = ssub.s32 768, 768
      %3908 = vsyncadd [#allocation4], %s3907
      %s3909 = sshll.u32 [#allocation11], 4
      %s3910 = int_to_ptr.vmem [resolvable:$true] %s3909
      %3915 = dma.vmem_to_hbm [thread:$0]  %s3910, 768, %s5, [#allocation4], 64, 64, 4
    $region45: #{content_encoder_forward.3} parent=1 // pred_fallthru
      _
    // Predicated region
    $region46: #{content_encoder_forward.3} parent=1 // pred_check
      _
    $region47: #{content_encoder_forward.3} parent=1 // pred_check_branch
      %3917 = sbr.rel (0) target = $region49
    $region48: #{content_encoder_forward.3} parent=1 // pred_region
      %s3919 = ssub.s32 16, 16
      %3920 = vsyncadd [#allocation13], %s3919
      %s3922 = sshll.u32 [#allocation12], 4
      %s3923 = int_to_ptr.vmem [resolvable:$true] %s3922
      %3925 = dma.vmem_to_hbm [thread:$0]  %s3923, 16, %s6, [#allocation13]
    $region49: #{content_encoder_forward.3} parent=1 // pred_fallthru
      _
    // Predicated region
    $region50: #{content_encoder_forward.3} parent=1 // pred_check
      _
    $region51: #{content_encoder_forward.3} parent=1 // pred_check_branch
      %3927 = sbr.rel (0) target = $region53
    $region52: #{content_encoder_forward.3} parent=1 // pred_region
      %3928 = dma.done [#allocation4], 768
    $region53: #{content_encoder_forward.3} parent=1 // pred_fallthru
      _
    // Predicated region
    $region54: #{content_encoder_forward.3} parent=1 // pred_check
      _
    $region55: #{content_encoder_forward.3} parent=1 // pred_check_branch
      %3930 = sbr.rel (0) target = $region57
    $region56: #{content_encoder_forward.3} parent=1 // pred_region
      %3931 = dma.done [#allocation13], 16
    $region57: #{content_encoder_forward.3} parent=1 // pred_fallthru
      _
    %3932 = vsyncpa [#allocation3], 1
    %3933 = vsyncpa [#allocation6], 1
    %3934 = vsyncpa [#allocation9], 1
    %3935 = vsyncpa [#allocation4], 1
    %3936 = vsyncpa [#allocation13], 1

</llo_original>
